<compile_context>
chip_gen: v7x
topology: tpu7x:2x2x1
jax: 0.10.0
libtpu: 0.0.40
codegen_flags: <defaults>
</compile_context>

<pallas_src>
import jax
import jax.numpy as jnp
from jax.experimental import pallas as pl
from jax.experimental.pallas import tpu as pltpu

# Exact f32 matmuls for both the kernel trace and the pure-JAX reference.
jax.config.update("jax_default_matmul_precision", "highest")

HIDDEN = 32    # hidden_dims
VOCAB = 32     # output_dims
MAXLEN = 20    # max_length

# ---- packed-weight slab layout ([SLAB_ROWS, 128] f32, lane-dense) ----------
# rows   0: 32   emb [V,H] @ lanes 0:32   |  W_ih fused [H,3H] @ lanes 32:128
# rows  32: 64   [wa1 | whh] fused [H, L+3H] @ lanes 0:116
# rows  64: 96   [wa0 | wc1] fused [H, L+H] @ lanes 0:52 | wc0 @ 64:96 | wo @ 96:128
# row   96..100  biases: ba, bc, bo, b_ih, b_hh (one row each, lane 0 aligned)
R_EMB = 0
C_WIH = HIDDEN                 # 32
R_WHF = 32                     # fused h_prev-driven weights [wa1 | whh]
R_WEF = 64                     # fused embedded-driven weights [wa0 | wc1]
C_WC0 = 64                     # wc0 (combine, focused half)
C_WO = 96                      # output projection
R_BA, R_BC, R_BO, R_BI, R_BH = 96, 97, 98, 99, 100
SLAB_ROWS = 104                # padded to a multiple of 8
SLAB_LANES = 128


def decoder_kernel(tok_ref,            # SMEM [T] int32 (scalar prefetch)
                   h0_ref,             # [1, H]   initial hidden
                   enc_ref,            # [L, H]   encoder_outputs
                   w_ref,              # [SLAB_ROWS, 128] packed weights/biases/emb
                   out_ref,            # [1, 1, V+H] merged per-step output
                   h_scr):             # VMEM [1, H] hidden carried across steps
    H, V, L = HIDDEN, VOCAB, MAXLEN
    step = pl.program_id(0)

    @pl.when(step == 0)
    def _():
        h_scr[...] = h0_ref[...]

    tok = tok_ref[step]
    embedded = w_ref[pl.ds(R_EMB + tok, 1), 0:H]          # [1, H]
    h_prev = h_scr[...]                                    # [1, H]

    # Fused dots: embedded -> (attention | combine), h_prev -> (attention | GRU hh)
    evec = jnp.dot(embedded, w_ref[R_WEF:R_WEF + H, 0:L + H],
                   preferred_element_type=jnp.float32)               # [1, L+H]
    hvec = jnp.dot(h_prev, w_ref[R_WHF:R_WHF + H, 0:L + 3 * H],
                   preferred_element_type=jnp.float32)               # [1, L+3H]

    # attention = softmax(Linear_{2H->L}(cat(embedded, h_prev)))
    attn_logits = evec[:, 0:L] + hvec[:, 0:L] + w_ref[R_BA:R_BA + 1, 0:L]
    m = jnp.max(attn_logits, axis=-1, keepdims=True)
    e = jnp.exp(attn_logits - m)
    attn_w = e / jnp.sum(e, axis=-1, keepdims=True)                  # exact denom

    # focused = attn_w @ encoder_outputs
    focused = jnp.dot(attn_w, enc_ref[...], preferred_element_type=jnp.float32)  # [1, H]

    # gru_input = relu(Linear_{2H->H}(cat(focused, embedded)))
    gru_x = jnp.maximum(
        jnp.dot(focused, w_ref[R_WEF:R_WEF + H, C_WC0:C_WC0 + H],
                preferred_element_type=jnp.float32)
        + evec[:, L:L + H]
        + w_ref[R_BC:R_BC + 1, 0:H], 0.0)                            # [1, H]

    # single GRU step (PyTorch gate order r, z, n); gh comes from the fused hvec
    gi = (jnp.dot(gru_x, w_ref[R_EMB:R_EMB + H, C_WIH:C_WIH + 3 * H],
                  preferred_element_type=jnp.float32)
          + w_ref[R_BI:R_BI + 1, 0:3 * H])                           # [1, 3H]
    gh = hvec[:, L:L + 3 * H] + w_ref[R_BH:R_BH + 1, 0:3 * H]        # [1, 3H]

    r = jax.nn.sigmoid(gi[:, 0:H] + gh[:, 0:H])
    z = jax.nn.sigmoid(gi[:, H:2 * H] + gh[:, H:2 * H])
    n = jnp.tanh(gi[:, 2 * H:3 * H] + r * gh[:, 2 * H:3 * H])
    h_new = (1.0 - z) * n + z * h_prev                               # [1, H]
    h_scr[...] = h_new

    # log_softmax(Linear_{H->V}(h_new))
    logits = (jnp.dot(h_new, w_ref[R_WEF:R_WEF + H, C_WO:C_WO + V],
                      preferred_element_type=jnp.float32)
              + w_ref[R_BO:R_BO + 1, 0:V])
    mx = jnp.max(logits, axis=-1, keepdims=True)
    s = logits - mx
    logp = s - jnp.log(jnp.sum(jnp.exp(s), axis=-1, keepdims=True))

    # merged writeback: [logp | h_new] in one output block
    out_ref[:, :, 0:V] = logp[None]
    out_ref[:, :, V:V + H] = h_new[None]


def pack_params(p):
    """Pack embedding + all weights/biases into one lane-dense f32 slab."""
    H, V, L = HIDDEN, VOCAB, MAXLEN
    slab = jnp.zeros((SLAB_ROWS, SLAB_LANES), jnp.float32)
    # embedding + fused W_ih ([3,H,H] -> [H,3H], preserving r,z,n gate order)
    slab = slab.at[R_EMB:R_EMB + V, 0:H].set(p["emb"])
    wih = jnp.transpose(p["wi"], (1, 0, 2)).reshape(H, 3 * H)
    slab = slab.at[R_EMB:R_EMB + H, C_WIH:C_WIH + 3 * H].set(wih)
    # fused h_prev-driven weights [wa1 | whh]
    whh = jnp.transpose(p["wh"], (1, 0, 2)).reshape(H, 3 * H)
    slab = slab.at[R_WHF:R_WHF + H, 0:L].set(p["wa"][1])
    slab = slab.at[R_WHF:R_WHF + H, L:L + 3 * H].set(whh)
    # fused embedded-driven weights [wa0 | wc1], plus wc0 and wo beside them
    slab = slab.at[R_WEF:R_WEF + H, 0:L].set(p["wa"][0])
    slab = slab.at[R_WEF:R_WEF + H, L:L + H].set(p["wc"][1])
    slab = slab.at[R_WEF:R_WEF + H, C_WC0:C_WC0 + H].set(p["wc"][0])
    slab = slab.at[R_WEF:R_WEF + H, C_WO:C_WO + V].set(p["wo"])
    # biases
    slab = slab.at[R_BA, 0:L].set(p["ba"][0])
    slab = slab.at[R_BC, 0:H].set(p["bc"][0])
    slab = slab.at[R_BO, 0:V].set(p["bo"][0])
    slab = slab.at[R_BI, 0:3 * H].set(p["bi"].reshape(3 * H))
    slab = slab.at[R_BH, 0:3 * H].set(p["bh"].reshape(3 * H))
    return {"slab": slab}


def decoder_decode(tokens, prev_hidden, encoder_outputs, packed):
    """Teacher-forced T-step decode in ONE pallas_call.
    tokens: int32 [T]; prev_hidden: f32 [1,1,H]; encoder_outputs: f32 [L,H]."""
    T = tokens.shape[0]
    h0 = prev_hidden.reshape(1, HIDDEN)

    out = pl.pallas_call(
        decoder_kernel,
        out_shape=jax.ShapeDtypeStruct((T, 1, VOCAB + HIDDEN), jnp.float32),
        grid_spec=pltpu.PrefetchScalarGridSpec(
            num_scalar_prefetch=1,
            grid=(T,),
            in_specs=[
                pl.BlockSpec((1, HIDDEN), lambda t, toks: (0, 0)),            # h0
                pl.BlockSpec((MAXLEN, HIDDEN), lambda t, toks: (0, 0)),       # enc
                pl.BlockSpec((SLAB_ROWS, SLAB_LANES), lambda t, toks: (0, 0)),  # slab
            ],
            out_specs=pl.BlockSpec((1, 1, VOCAB + HIDDEN), lambda t, toks: (t, 0, 0)),
            scratch_shapes=[pltpu.VMEM((1, HIDDEN), jnp.float32)],
        ),
        compiler_params=pltpu.CompilerParams(dimension_semantics=("arbitrary",)),
    )(tokens.astype(jnp.int32), h0, encoder_outputs, packed["slab"])

    out2 = out[:, 0, :]                                   # [T, V+H]
    logp = out2[:, :VOCAB]                                # [T, V]
    hidden_final = out2[-1, VOCAB:].reshape(1, 1, HIDDEN)
    return logp, hidden_final


def decoder_forward(prev_word, prev_hidden, encoder_outputs, packed):
    """The module's forward: a single decoder step (T=1)."""
    return decoder_decode(prev_word, prev_hidden, encoder_outputs, packed)


# ------------------------- pure-JAX references ------------------------------
def decoder_reference(prev_word, prev_hidden, encoder_outputs, p):
    embedded = p["emb"][prev_word[0]][None, :]
    h = prev_hidden[0]
    attn_in = jnp.concatenate([embedded, h], axis=1)
    wa_full = jnp.concatenate([p["wa"][0], p["wa"][1]], axis=0)
    attn_w = jax.nn.softmax(attn_in @ wa_full + p["ba"], axis=-1)
    focused = attn_w @ encoder_outputs
    wc_full = jnp.concatenate([p["wc"][0], p["wc"][1]], axis=0)
    x = jnp.maximum(jnp.concatenate([focused, embedded], axis=1) @ wc_full + p["bc"], 0.0)
    gi = [x @ p["wi"][g] + p["bi"][g] for g in range(3)]
    gh = [h @ p["wh"][g] + p["bh"][g] for g in range(3)]
    r = jax.nn.sigmoid(gi[0] + gh[0])
    z = jax.nn.sigmoid(gi[1] + gh[1])
    n = jnp.tanh(gi[2] + r * gh[2])
    h_new = (1.0 - z) * n + z * h
    logits = h_new @ p["wo"] + p["bo"]
    return jax.nn.log_softmax(logits, axis=-1), h_new.reshape(1, 1, HIDDEN)


def decode_reference(tokens, prev_hidden, encoder_outputs, p):
    h = prev_hidden
    logps = []
    for t in range(tokens.shape[0]):
        lp, h = decoder_reference(tokens[t:t + 1], h, encoder_outputs, p)
        logps.append(lp)
    return jnp.concatenate(logps, axis=0), h


def init_params(key):
    ks = jax.random.split(key, 10)
    s = 0.1
    return {
        "emb": jax.random.normal(ks[0], (VOCAB, HIDDEN), jnp.float32) * s,
        "wa":  jax.random.normal(ks[1], (2, HIDDEN, MAXLEN), jnp.float32) * s,
        "ba":  jax.random.normal(ks[2], (1, MAXLEN), jnp.float32) * s,
        "wc":  jax.random.normal(ks[3], (2, HIDDEN, HIDDEN), jnp.float32) * s,
        "bc":  jax.random.normal(ks[4], (1, HIDDEN), jnp.float32) * s,
        "wi":  jax.random.normal(ks[5], (3, HIDDEN, HIDDEN), jnp.float32) * s,
        "bi":  jax.random.normal(ks[6], (3, 1, HIDDEN), jnp.float32) * s,
        "wh":  jax.random.normal(ks[7], (3, HIDDEN, HIDDEN), jnp.float32) * s,
        "bh":  jax.random.normal(ks[8], (3, 1, HIDDEN), jnp.float32) * s,
        "wo":  jax.random.normal(ks[9], (HIDDEN, VOCAB), jnp.float32) * s,
        "bo":  jnp.zeros((1, VOCAB), jnp.float32),
    }


if __name__ == "__main__":
    key = jax.random.PRNGKey(0)
    pkey, hkey, ekey = jax.random.split(key, 3)
    params = init_params(pkey)
    packed = pack_params(params)

    prev_word = jnp.array([3], dtype=jnp.int32)
    prev_hidden = jax.random.normal(hkey, (1, 1, HIDDEN), jnp.float32)
    encoder_outputs = jax.random.normal(ekey, (MAXLEN, HIDDEN), jnp.float32)

    # --- single step (the module's forward) ---
    logp, hidden = decoder_forward(prev_word, prev_hidden, encoder_outputs, packed)
    jax.block_until_ready((logp, hidden))
    ref_logp, ref_hidden = decoder_reference(prev_word, prev_hidden, encoder_outputs, params)
    assert logp.shape == (1, VOCAB) and hidden.shape == (1, 1, HIDDEN)
    assert jnp.allclose(logp, ref_logp, atol=1e-3), "log-prob mismatch (single step)"
    assert jnp.allclose(hidden, ref_hidden, atol=1e-3), "hidden mismatch (single step)"

    # --- multi-step teacher-forced decode in one pallas_call ---
    tokens = jnp.array([3, 7, 1, 0, 12, 5, 30, 9], dtype=jnp.int32)
    logp_seq, hidden_seq = decoder_decode(tokens, prev_hidden, encoder_outputs, packed)
    jax.block_until_ready((logp_seq, hidden_seq))
    ref_lseq, ref_hseq = decode_reference(tokens, prev_hidden, encoder_outputs, params)
    assert logp_seq.shape == (tokens.shape[0], VOCAB) and hidden_seq.shape == (1, 1, HIDDEN)
    assert jnp.allclose(logp_seq, ref_lseq, atol=1e-3), "log-prob mismatch (sequence)"
    assert jnp.allclose(hidden_seq, ref_hseq, atol=1e-3), "hidden mismatch (sequence)"

    print("KERNEL_OK")
</pallas_src>

<mosaic_0001>
module attributes {stable_mosaic.version = 11 : i64} {
  func.func @decoder_kernel(%arg0: i32, %arg1: memref<1xi32, #tpu.memory_space<smem>>, %arg2: memref<1x32xf32, #tpu.memory_space<vmem>>, %arg3: memref<20x32xf32, #tpu.memory_space<vmem>>, %arg4: memref<104x128xf32, #tpu.memory_space<vmem>>, %arg5: memref<1x1x64xf32, #tpu.memory_space<vmem>>, %arg6: memref<1x32xf32, #tpu.memory_space<vmem>>) attributes {dimension_semantics = [#tpu.dimension_semantics<arbitrary>], iteration_bounds = array<i64: 1>, scalar_prefetch = 1 : i64, scratch_operands = 1 : i64, tpu.core_type = #tpu.core_type<tc>, window_params = [{pipeline_mode = #tpu.pipeline_mode<synchronous>, transform_indices = @transform_0, window_bounds = array<i64: 1, 32>}, {pipeline_mode = #tpu.pipeline_mode<synchronous>, transform_indices = @transform_1, window_bounds = array<i64: 20, 32>}, {pipeline_mode = #tpu.pipeline_mode<synchronous>, transform_indices = @transform_2, window_bounds = array<i64: 104, 128>}, {transform_indices = @transform_3, window_bounds = array<i64: 1, 1, 64>}]} {
    %c0_i32 = arith.constant 0 : i32
    %0 = arith.cmpi eq, %arg0, %c0_i32 : i32
    %1 = arith.extui %0 : i1 to i32
    %c0_i32_0 = arith.constant 0 : i32
    %2 = arith.cmpi ne, %1, %c0_i32_0 : i32
    scf.if %2 {
      %c0_40 = arith.constant 0 : index
      %c0_41 = arith.constant 0 : index
      %89 = vector.load %arg2[%c0_40, %c0_41] : memref<1x32xf32, #tpu.memory_space<vmem>>, vector<1x32xf32>
      %c0_42 = arith.constant 0 : index
      %c0_43 = arith.constant 0 : index
      %90 = vector.load %arg6[%c0_42, %c0_43] : memref<1x32xf32, #tpu.memory_space<vmem>>, vector<1x32xf32>
      tpu.vector_store %arg6[%c0_42, %c0_43], %89 {strides = array<i32>} : memref<1x32xf32, #tpu.memory_space<vmem>>, vector<1x32xf32>,
    } else {
    }
    %3 = arith.index_cast %arg0 : i32 to index
    %4 = memref.load %arg1[%3] : memref<1xi32, #tpu.memory_space<smem>>
    %c0_i32_1 = arith.constant 0 : i32
    %5 = arith.addi %c0_i32_1, %4 : i32
    %6 = arith.index_cast %5 : i32 to index
    %c0 = arith.constant 0 : index
    %7 = vector.load %arg4[%6, %c0] : memref<104x128xf32, #tpu.memory_space<vmem>>, vector<1x32xf32>
    %c0_2 = arith.constant 0 : index
    %c0_3 = arith.constant 0 : index
    %8 = vector.load %arg6[%c0_2, %c0_3] : memref<1x32xf32, #tpu.memory_space<vmem>>, vector<1x32xf32>
    %c64 = arith.constant 64 : index
    %c0_4 = arith.constant 0 : index
    %9 = vector.load %arg4[%c64, %c0_4] : memref<104x128xf32, #tpu.memory_space<vmem>>, vector<32x52xf32>
    %cst = arith.constant dense<0.000000e+00> : vector<1x52xf32>
    %10 = tpu.matmul %7, %9, %cst {dimension_numbers = #tpu.dot_dimension_numbers<[1], [0], [0], [1], [0, 0, 1, 1], [], []>, precision = #tpu.contract_precision<fp32>} : vector<1x32xf32>, vector<32x52xf32>, vector<1x52xf32> -> vector<1x52xf32>
    %c32 = arith.constant 32 : index
    %c0_5 = arith.constant 0 : index
    %11 = vector.load %arg4[%c32, %c0_5] : memref<104x128xf32, #tpu.memory_space<vmem>>, vector<32x116xf32>
    %cst_6 = arith.constant dense<0.000000e+00> : vector<1x116xf32>
    %12 = tpu.matmul %8, %11, %cst_6 {dimension_numbers = #tpu.dot_dimension_numbers<[1], [0], [0], [1], [0, 0, 1, 1], [], []>, precision = #tpu.contract_precision<fp32>} : vector<1x32xf32>, vector<32x116xf32>, vector<1x116xf32> -> vector<1x116xf32>
    %13 = vector.extract_strided_slice %10 {offsets = [0, 0], sizes = [1, 20], strides = [1, 1]} : vector<1x52xf32> to vector<1x20xf32>
    %14 = vector.extract_strided_slice %12 {offsets = [0, 0], sizes = [1, 20], strides = [1, 1]} : vector<1x116xf32> to vector<1x20xf32>
    %15 = arith.addf %13, %14 : vector<1x20xf32>
    %c96 = arith.constant 96 : index
    %c0_7 = arith.constant 0 : index
    %16 = vector.load %arg4[%c96, %c0_7] : memref<104x128xf32, #tpu.memory_space<vmem>>, vector<1x20xf32>
    %17 = arith.addf %15, %16 : vector<1x20xf32>
    %cst_8 = arith.constant dense<0xFF800000> : vector<1xf32>
    %18 = vector.multi_reduction <maximumf>, %17, %cst_8 [1] : vector<1x20xf32> to vector<1xf32>
    %19 = vector.shape_cast %18 : vector<1xf32> to vector<1x1xf32>
    %20 = vector.broadcast %19 : vector<1x1xf32> to vector<1x20xf32>
    %21 = arith.subf %17, %20 : vector<1x20xf32>
    %22 = math.exp %21 : vector<1x20xf32>
    %cst_9 = arith.constant dense<0.000000e+00> : vector<1xf32>
    %23 = vector.multi_reduction <add>, %22, %cst_9 [1] : vector<1x20xf32> to vector<1xf32>
    %24 = vector.shape_cast %23 : vector<1xf32> to vector<1x1xf32>
    %25 = vector.broadcast %24 : vector<1x1xf32> to vector<1x20xf32>
    %26 = arith.divf %22, %25 : vector<1x20xf32>
    %c0_10 = arith.constant 0 : index
    %c0_11 = arith.constant 0 : index
    %27 = vector.load %arg3[%c0_10, %c0_11] : memref<20x32xf32, #tpu.memory_space<vmem>>, vector<20x32xf32>
    %cst_12 = arith.constant dense<0.000000e+00> : vector<1x32xf32>
    %28 = tpu.matmul %26, %27, %cst_12 {dimension_numbers = #tpu.dot_dimension_numbers<[1], [0], [0], [1], [0, 0, 1, 1], [], []>, precision = #tpu.contract_precision<fp32>} : vector<1x20xf32>, vector<20x32xf32>, vector<1x32xf32> -> vector<1x32xf32>
    %c64_13 = arith.constant 64 : index
    %c64_14 = arith.constant 64 : index
    %29 = vector.load %arg4[%c64_13, %c64_14] : memref<104x128xf32, #tpu.memory_space<vmem>>, vector<32x32xf32>
    %cst_15 = arith.constant dense<0.000000e+00> : vector<1x32xf32>
    %30 = tpu.matmul %28, %29, %cst_15 {dimension_numbers = #tpu.dot_dimension_numbers<[1], [0], [0], [1], [0, 0, 1, 1], [], []>, precision = #tpu.contract_precision<fp32>} : vector<1x32xf32>, vector<32x32xf32>, vector<1x32xf32> -> vector<1x32xf32>
    %31 = vector.extract_strided_slice %10 {offsets = [0, 20], sizes = [1, 32], strides = [1, 1]} : vector<1x52xf32> to vector<1x32xf32>
    %32 = arith.addf %30, %31 : vector<1x32xf32>
    %c97 = arith.constant 97 : index
    %c0_16 = arith.constant 0 : index
    %33 = vector.load %arg4[%c97, %c0_16] : memref<104x128xf32, #tpu.memory_space<vmem>>, vector<1x32xf32>
    %34 = arith.addf %32, %33 : vector<1x32xf32>
    %cst_17 = arith.constant 0.000000e+00 : f32
    %35 = vector.broadcast %cst_17 : f32 to vector<1x32xf32>
    %36 = arith.maximumf %34, %35 : vector<1x32xf32>
    %c0_18 = arith.constant 0 : index
    %c32_19 = arith.constant 32 : index
    %37 = vector.load %arg4[%c0_18, %c32_19] : memref<104x128xf32, #tpu.memory_space<vmem>>, vector<32x96xf32>
    %cst_20 = arith.constant dense<0.000000e+00> : vector<1x96xf32>
    %38 = tpu.matmul %36, %37, %cst_20 {dimension_numbers = #tpu.dot_dimension_numbers<[1], [0], [0], [1], [0, 0, 1, 1], [], []>, precision = #tpu.contract_precision<fp32>} : vector<1x32xf32>, vector<32x96xf32>, vector<1x96xf32> -> vector<1x96xf32>
    %c99 = arith.constant 99 : index
    %c0_21 = arith.constant 0 : index
    %39 = vector.load %arg4[%c99, %c0_21] : memref<104x128xf32, #tpu.memory_space<vmem>>, vector<1x96xf32>
    %40 = arith.addf %38, %39 : vector<1x96xf32>
    %41 = vector.extract_strided_slice %12 {offsets = [0, 20], sizes = [1, 96], strides = [1, 1]} : vector<1x116xf32> to vector<1x96xf32>
    %c100 = arith.constant 100 : index
    %c0_22 = arith.constant 0 : index
    %42 = vector.load %arg4[%c100, %c0_22] : memref<104x128xf32, #tpu.memory_space<vmem>>, vector<1x96xf32>
    %43 = arith.addf %41, %42 : vector<1x96xf32>
    %44 = vector.extract_strided_slice %40 {offsets = [0, 0], sizes = [1, 32], strides = [1, 1]} : vector<1x96xf32> to vector<1x32xf32>
    %45 = vector.extract_strided_slice %43 {offsets = [0, 0], sizes = [1, 32], strides = [1, 1]} : vector<1x96xf32> to vector<1x32xf32>
    %46 = arith.addf %44, %45 : vector<1x32xf32>
    %47 = arith.negf %46 : vector<1x32xf32>
    %48 = math.exp %47 : vector<1x32xf32>
    %cst_23 = arith.constant 1.000000e+00 : f32
    %49 = vector.broadcast %cst_23 : f32 to vector<1x32xf32>
    %50 = arith.addf %49, %48 : vector<1x32xf32>
    %51 = arith.divf %49, %50 : vector<1x32xf32>
    %52 = vector.extract_strided_slice %40 {offsets = [0, 32], sizes = [1, 32], strides = [1, 1]} : vector<1x96xf32> to vector<1x32xf32>
    %53 = vector.extract_strided_slice %43 {offsets = [0, 32], sizes = [1, 32], strides = [1, 1]} : vector<1x96xf32> to vector<1x32xf32>
    %54 = arith.addf %52, %53 : vector<1x32xf32>
    %55 = arith.negf %54 : vector<1x32xf32>
    %56 = math.exp %55 : vector<1x32xf32>
    %cst_24 = arith.constant 1.000000e+00 : f32
    %57 = vector.broadcast %cst_24 : f32 to vector<1x32xf32>
    %58 = arith.addf %57, %56 : vector<1x32xf32>
    %59 = arith.divf %57, %58 : vector<1x32xf32>
    %60 = vector.extract_strided_slice %40 {offsets = [0, 64], sizes = [1, 32], strides = [1, 1]} : vector<1x96xf32> to vector<1x32xf32>
    %61 = vector.extract_strided_slice %43 {offsets = [0, 64], sizes = [1, 32], strides = [1, 1]} : vector<1x96xf32> to vector<1x32xf32>
    %62 = arith.mulf %51, %61 : vector<1x32xf32>
    %63 = arith.addf %60, %62 : vector<1x32xf32>
    %64 = math.tanh %63 : vector<1x32xf32>
    %cst_25 = arith.constant 1.000000e+00 : f32
    %65 = vector.broadcast %cst_25 : f32 to vector<1x32xf32>
    %66 = arith.subf %65, %59 : vector<1x32xf32>
    %67 = arith.mulf %66, %64 : vector<1x32xf32>
    %68 = arith.mulf %59, %8 : vector<1x32xf32>
    %69 = arith.addf %67, %68 : vector<1x32xf32>
    %c0_26 = arith.constant 0 : index
    %c0_27 = arith.constant 0 : index
    %70 = vector.load %arg6[%c0_26, %c0_27] : memref<1x32xf32, #tpu.memory_space<vmem>>, vector<1x32xf32>
    tpu.vector_store %arg6[%c0_26, %c0_27], %69 {strides = array<i32>} : memref<1x32xf32, #tpu.memory_space<vmem>>, vector<1x32xf32>,
    %c64_28 = arith.constant 64 : index
    %c96_29 = arith.constant 96 : index
    %71 = vector.load %arg4[%c64_28, %c96_29] : memref<104x128xf32, #tpu.memory_space<vmem>>, vector<32x32xf32>
    %cst_30 = arith.constant dense<0.000000e+00> : vector<1x32xf32>
    %72 = tpu.matmul %69, %71, %cst_30 {dimension_numbers = #tpu.dot_dimension_numbers<[1], [0], [0], [1], [0, 0, 1, 1], [], []>, precision = #tpu.contract_precision<fp32>} : vector<1x32xf32>, vector<32x32xf32>, vector<1x32xf32> -> vector<1x32xf32>
    %c98 = arith.constant 98 : index
    %c0_31 = arith.constant 0 : index
    %73 = vector.load %arg4[%c98, %c0_31] : memref<104x128xf32, #tpu.memory_space<vmem>>, vector<1x32xf32>
    %74 = arith.addf %72, %73 : vector<1x32xf32>
    %cst_32 = arith.constant dense<0xFF800000> : vector<1xf32>
    %75 = vector.multi_reduction <maximumf>, %74, %cst_32 [1] : vector<1x32xf32> to vector<1xf32>
    %76 = vector.shape_cast %75 : vector<1xf32> to vector<1x1xf32>
    %77 = vector.broadcast %76 : vector<1x1xf32> to vector<1x32xf32>
    %78 = arith.subf %74, %77 : vector<1x32xf32>
    %79 = math.exp %78 : vector<1x32xf32>
    %cst_33 = arith.constant dense<0.000000e+00> : vector<1xf32>
    %80 = vector.multi_reduction <add>, %79, %cst_33 [1] : vector<1x32xf32> to vector<1xf32>
    %81 = vector.shape_cast %80 : vector<1xf32> to vector<1x1xf32>
    %82 = math.log %81 : vector<1x1xf32>
    %83 = vector.broadcast %82 : vector<1x1xf32> to vector<1x32xf32>
    %84 = arith.subf %78, %83 : vector<1x32xf32>
    %85 = vector.shape_cast %84 : vector<1x32xf32> to vector<1x1x32xf32>
    %c0_34 = arith.constant 0 : index
    %c0_35 = arith.constant 0 : index
    %c0_36 = arith.constant 0 : index
    %86 = vector.load %arg5[%c0_34, %c0_35, %c0_36] : memref<1x1x64xf32, #tpu.memory_space<vmem>>, vector<1x1x32xf32>
    tpu.vector_store %arg5[%c0_34, %c0_35, %c0_36], %85 {strides = array<i32>} : memref<1x1x64xf32, #tpu.memory_space<vmem>>, vector<1x1x32xf32>,
    %87 = vector.shape_cast %69 : vector<1x32xf32> to vector<1x1x32xf32>
    %c0_37 = arith.constant 0 : index
    %c0_38 = arith.constant 0 : index
    %c32_39 = arith.constant 32 : index
    %88 = vector.load %arg5[%c0_37, %c0_38, %c32_39] : memref<1x1x64xf32, #tpu.memory_space<vmem>>, vector<1x1x32xf32>
    tpu.vector_store %arg5[%c0_37, %c0_38, %c32_39], %87 {strides = array<i32>} : memref<1x1x64xf32, #tpu.memory_space<vmem>>, vector<1x1x32xf32>,
    return
  }
  func.func @transform_0(%arg0: i32, %arg1: memref<1xi32, #tpu.memory_space<smem>>) -> (i32, i32) {
    %c0_i32 = arith.constant 0 : i32
    %c0_i32_0 = arith.constant 0 : i32
    %c0_i32_1 = arith.constant 0 : i32
    return %c0_i32, %c0_i32_0 : i32, i32
  }
  func.func @transform_1(%arg0: i32, %arg1: memref<1xi32, #tpu.memory_space<smem>>) -> (i32, i32) {
    %c0_i32 = arith.constant 0 : i32
    %c0_i32_0 = arith.constant 0 : i32
    %c0_i32_1 = arith.constant 0 : i32
    return %c0_i32, %c0_i32_0 : i32, i32
  }
  func.func @transform_2(%arg0: i32, %arg1: memref<1xi32, #tpu.memory_space<smem>>) -> (i32, i32) {
    %c0_i32 = arith.constant 0 : i32
    %c0_i32_0 = arith.constant 0 : i32
    %c0_i32_1 = arith.constant 0 : i32
    return %c0_i32, %c0_i32_0 : i32, i32
  }
  func.func @transform_3(%arg0: i32, %arg1: memref<1xi32, #tpu.memory_space<smem>>) -> (i32, i32, i32) {
    %c0_i32 = arith.constant 0 : i32
    %c0_i32_0 = arith.constant 0 : i32
    %c0_i32_1 = arith.constant 0 : i32
    return %arg0, %c0_i32, %c0_i32_0 : i32, i32, i32
  }
}

</mosaic_0001>

<llo_original>
// kernel: tpu_custom_call.1
$region0: #{tpu_custom_call.1}
  #allocation0 [shape = 'u32[]', space=smem, size = 0x4, offset = 0x4, fixed_abs, tag = 'smem constant byte address 0x4 - core index']
  #allocation1 [shape = 'u32[144,128]{1,0:T(1,128)}', space=vmem, size = 0x12000, scoped, tag = 'internal scratch']
  #allocation2 [shape = 'f32[1,32]{1,0:T(1,128)}', space=vmem, size = 0x200, scoped, tag = 'scratch operand']
  #allocation3 [shape = 's32[1]{0}', space=sflag, size = 0x4, scoped, tag = 'scoped memory for tpu_custom_call.1']
  #allocation4 [shape = 's32[1]{0:T(128)S(6)}', space=smem, size = 0x200, scoped, tag = 'prefetched SMEM operand 0']
  %s0 = inlined_call_operand.<no memory space> [shape: s32[1], index: 0, kind: input, shape index: {}]
  %s1 = inlined_call_operand.vmem [shape: f32[1,32], index: 1, kind: input, shape index: {}]
  %s2 = inlined_call_operand.hbm [shape: f32[20,32], index: 2, kind: input, shape index: {}]
  %s3 = inlined_call_operand.hbm [shape: f32[104,128], index: 3, kind: input, shape index: {}]
  %s4 = inlined_call_operand.hbm [shape: f32[1,1,64], index: 4, kind: output, shape index: {}]
  %s5 = sld [smem:[#allocation0]]
  $region34: #{tpu_custom_call.1} parent=0
    _
  %s7 = ssub.s32 1, %s5
  %s8 = scalar_select 0, %s7, %s5
  %9 = sst [smem:[#allocation4]] %s0
  $region1: #{tpu_custom_call.1} parent=0
    #allocation5 [shape = 'u8[12288]{0}', space=vmem, size = 0x3000, scoped, tag = 'input window, operand 2, single buffered']
    #allocation6 [shape = 's32[1]{0}', space=sflag, size = 0x4, scoped, tag = 'scoped memory for tpu_custom_call.1']
    #allocation7 [shape = 's32[1]{0}', space=sflag, size = 0x4, scoped, tag = 'scoped memory for tpu_custom_call.1']
    #allocation8 [shape = 'u8[53248]{0}', space=vmem, size = 0xd000, scoped, tag = 'input window, operand 3, single buffered']
    #allocation9 [shape = 's32[1]{0}', space=sflag, size = 0x4, scoped, tag = 'scoped memory for tpu_custom_call.1']
    #allocation10 [shape = 'u8[512]{0}', space=vmem, size = 0x400, scoped, tag = 'output window, operand 0, single buffered']
    %10 = vsyncpa [#allocation6], 0
    %11 = vsyncpa [#allocation9], 0
    %12 = vsyncpa [#allocation7], 0
    // Predicated region
    $region2: #{tpu_custom_call.1} parent=1 // pred_check
      _
    $region3: #{tpu_custom_call.1} parent=1 // pred_check_branch
      %14 = sbr.rel (0) target = $region5
    $region4: #{tpu_custom_call.1} parent=1 // pred_region
      _
    $region5: #{tpu_custom_call.1} parent=1 // pred_fallthru
      _
    // Predicated region
    $region6: #{tpu_custom_call.1} parent=1 // pred_check
      _
    $region7: #{tpu_custom_call.1} parent=1 // pred_check_branch
      %16 = sbr.rel (0) target = $region9
    $region8: #{tpu_custom_call.1} parent=1 // pred_region
      %s18 = ssub.s32 384, 384
      %19 = vsyncadd [#allocation6], %s18
      %s20 = sshll.u32 [#allocation5], 4
      %s21 = int_to_ptr.vmem [resolvable:$true] %s20
      %26 = dma.hbm_to_vmem [thread:$0]  %s2, 384, %s21, [#allocation6], 128, 128, 8
    $region9: #{tpu_custom_call.1} parent=1 // pred_fallthru
      _
    // Predicated region
    $region10: #{tpu_custom_call.1} parent=1 // pred_check
      _
    $region11: #{tpu_custom_call.1} parent=1 // pred_check_branch
      %28 = sbr.rel (0) target = $region13
    $region12: #{tpu_custom_call.1} parent=1 // pred_region
      %s30 = ssub.s32 1664, 1664
      %31 = vsyncadd [#allocation9], %s30
      %s32 = sshll.u32 [#allocation8], 4
      %s33 = int_to_ptr.vmem [resolvable:$true] %s32
      %38 = dma.hbm_to_vmem [thread:$0]  %s3, 1664, %s33, [#allocation9], 128, 128, 8
    $region13: #{tpu_custom_call.1} parent=1 // pred_fallthru
      _
    // Predicated region
    $region14: #{tpu_custom_call.1} parent=1 // pred_check
      _
    $region15: #{tpu_custom_call.1} parent=1 // pred_check_branch
      %40 = sbr.rel (0) target = $region17
    $region16: #{tpu_custom_call.1} parent=1 // pred_region
      %41 = dma.done [#allocation6], 384
    $region17: #{tpu_custom_call.1} parent=1 // pred_fallthru
      _
    // Predicated region
    $region18: #{tpu_custom_call.1} parent=1 // pred_check
      _
    $region19: #{tpu_custom_call.1} parent=1 // pred_check_branch
      %43 = sbr.rel (0) target = $region21
    $region20: #{tpu_custom_call.1} parent=1 // pred_region
      %44 = dma.done [#allocation9], 1664
    $region21: #{tpu_custom_call.1} parent=1 // pred_fallthru
      _
    %p45 = scmp.eq.s32.totalorder 0, 0
    // Predicated region
    $region22: #{tpu_custom_call.1} parent=1 // pred_check
      %p46 = pneg %p45
    $region23: #{tpu_custom_call.1} parent=1 // pred_check_branch
      %48 = sbr.rel (%p46) target = $region25
    $region24: #{tpu_custom_call.1} parent=1 // pred_region
      %v49 = vld [vmem:[%s1] sm:$0x1]
      %vm50 = vcmask 253952
      %51 = vst.msk [vmem:[#allocation2] sm:$0x1] %vm50, %v49
    $region25: #{tpu_custom_call.1} parent=1 // pred_fallthru
      _
    %s52 = sld [smem:[#allocation4]]
    %s53 = scalar_lea.vmem [#allocation8], %s52
    %v54 = vld [vmem:[%s53] sm:$0x1]
    %v55 = vld [vmem:[#allocation2] sm:$0x1]
    %v56 = vld [vmem:[#allocation8 + $0x40] sm:$0xff]
    %v57 = vld [vmem:[#allocation8 + $0x48] sm:$0xff]
    %v58 = vld [vmem:[#allocation8 + $0x50] sm:$0xff]
    %v59 = vld [vmem:[#allocation8 + $0x58] sm:$0xff]
    %vm60 = vcmask 261120
    %v62 = vsel %vm60, %v54, 0
    %64 = vmatprep.subr.mxu0 0.0
    %v65 = vand.u32 %v56, 4294901760
    %66 = vmatpush1.msra.mxu0 %v65
    %67 = vmatprep.subr.mxu0 0.0
    %v68 = vand.u32 %v57, 4294901760
    %69 = vmatpush1.msra.mxu0 %v68
    %70 = vmatprep.subr.mxu0 0.0
    %v71 = vand.u32 %v58, 4294901760
    %72 = vmatpush1.msra.mxu0 %v71
    %73 = vmatprep.subr.mxu0 0.0
    %v74 = vand.u32 %v59, 4294901760
    %75 = vmatpush1.msra.mxu0 %v74
    %76 = vmatprep.subr.mxu0 0.0
    %77 = vmatpush1.msra.mxu0 0.0
    %78 = vmatprep.subr.mxu0 0.0
    %79 = vmatpush1.msra.mxu0 0.0
    %80 = vmatprep.subr.mxu0 0.0
    %81 = vmatpush1.msra.mxu0 0.0
    %82 = vmatprep.subr.mxu0 0.0
    %83 = vmatpush1.msra.mxu0 0.0
    %84 = vmatprep.subr.mxu0 0.0
    %85 = vmatpush1.msra.mxu0 0.0
    %86 = vmatprep.subr.mxu0 0.0
    %87 = vmatpush1.msra.mxu0 0.0
    %88 = vmatprep.subr.mxu0 0.0
    %89 = vmatpush1.msra.mxu0 0.0
    %90 = vmatprep.subr.mxu0 0.0
    %91 = vmatpush1.msra.mxu0 0.0
    %92 = vmatprep.subr.mxu0 0.0
    %93 = vmatpush1.msra.mxu0 0.0
    %94 = vmatprep.subr.mxu0 0.0
    %95 = vmatpush1.msra.mxu0 0.0
    %96 = vmatprep.subr.mxu0 0.0
    %97 = vmatpush1.msra.mxu0 0.0
    %98 = vmatprep.subr.mxu0 0.0
    %99 = vmatpush1.msra.mxu0 0.0
    %100 = vmatprep.subr.mxu0 0.0
    %101 = vmatpush1.msra.mxu0 0.0
    %102 = vmatprep.subr.mxu0 0.0
    %103 = vmatpush1.msra.mxu0 0.0
    %104 = vmatprep.subr.mxu0 0.0
    %105 = vmatpush1.msra.mxu0 0.0
    %106 = vmatprep.subr.mxu0 0.0
    %107 = vmatpush1.msra.mxu0 0.0
    %108 = vmatprep.subr.mxu0 0.0
    %109 = vmatpush1.msra.mxu0 0.0
    %110 = vmatprep.subr.mxu0 0.0
    %111 = vmatpush1.msra.mxu0 0.0
    %112 = vmatprep.subr.mxu0 0.0
    %113 = vmatpush1.msra.mxu0 0.0
    %114 = vmatprep.subr.mxu0 0.0
    %115 = vmatpush1.msra.mxu0 0.0
    %116 = vmatprep.subr.mxu0 0.0
    %117 = vmatpush1.msra.mxu0 0.0
    %118 = vmatprep.subr.mxu0 0.0
    %119 = vmatpush1.msra.mxu0 0.0
    %120 = vmatprep.subr.mxu0 0.0
    %121 = vmatpush1.msra.mxu0 0.0
    %122 = vmatprep.subr.mxu0 0.0
    %123 = vmatpush1.msra.mxu0 0.0
    %124 = vmatprep.subr.mxu0 0.0
    %125 = vmatpush1.msra.mxu0 0.0
    %126 = vmatprep.subr.mxu0 0.0
    %127 = vmatpush1.msra.mxu0 0.0
    %128 = vmatprep.subr.mxu0 0.0
    %129 = vmatpush1.msra.mxu0 0.0
    %130 = vmatprep.subr.mxu0 0.0
    %131 = vmatpush1.msra.mxu0 0.0
    %132 = vmatprep.mubr.f32.mxu0 0.0
    %v133 = vand.u32 %v62, 4294901760
    %v134 = vsub.f32 %v62, %v133
    %v135 = vand.u32 %v134, 4294901760
    %v136 = vsub.f32 %v134, %v135
    %v137 = vand.u32 %v136, 4294901760
    %138 = vmatmul.mubr.f32.gmra.mrb[0].mxu0 %v137
    %v139 = vpop.f32.mrb[0].mxu0
    %v140 = vadd.f32 0.0, %v139
    %v141 = vpop.f32.mrb[0].mxu0
    %142 = vdwg.mxu0
    %143 = vmatprep.subr.mxu0 0.0
    %v144 = vand.u32 %v56, 4294901760
    %v145 = vsub.f32 %v56, %v144
    %v146 = vand.u32 %v145, 4294901760
    %v147 = vsub.f32 %v145, %v146
    %v148 = vand.u32 %v147, 4294901760
    %149 = vmatpush1.msra.mxu0 %v148
    %150 = vmatprep.subr.mxu0 0.0
    %v151 = vand.u32 %v57, 4294901760
    %v152 = vsub.f32 %v57, %v151
    %v153 = vand.u32 %v152, 4294901760
    %v154 = vsub.f32 %v152, %v153
    %v155 = vand.u32 %v154, 4294901760
    %156 = vmatpush1.msra.mxu0 %v155
    %157 = vmatprep.subr.mxu0 0.0
    %v158 = vand.u32 %v58, 4294901760
    %v159 = vsub.f32 %v58, %v158
    %v160 = vand.u32 %v159, 4294901760
    %v161 = vsub.f32 %v159, %v160
    %v162 = vand.u32 %v161, 4294901760
    %163 = vmatpush1.msra.mxu0 %v162
    %164 = vmatprep.subr.mxu0 0.0
    %v165 = vand.u32 %v59, 4294901760
    %v166 = vsub.f32 %v59, %v165
    %v167 = vand.u32 %v166, 4294901760
    %v168 = vsub.f32 %v166, %v167
    %v169 = vand.u32 %v168, 4294901760
    %170 = vmatpush1.msra.mxu0 %v169
    %171 = vmatprep.subr.mxu0 0.0
    %172 = vmatpush1.msra.mxu0 0.0
    %173 = vmatprep.subr.mxu0 0.0
    %174 = vmatpush1.msra.mxu0 0.0
    %175 = vmatprep.subr.mxu0 0.0
    %176 = vmatpush1.msra.mxu0 0.0
    %177 = vmatprep.subr.mxu0 0.0
    %178 = vmatpush1.msra.mxu0 0.0
    %179 = vmatprep.subr.mxu0 0.0
    %180 = vmatpush1.msra.mxu0 0.0
    %181 = vmatprep.subr.mxu0 0.0
    %182 = vmatpush1.msra.mxu0 0.0
    %183 = vmatprep.subr.mxu0 0.0
    %184 = vmatpush1.msra.mxu0 0.0
    %185 = vmatprep.subr.mxu0 0.0
    %186 = vmatpush1.msra.mxu0 0.0
    %187 = vmatprep.subr.mxu0 0.0
    %188 = vmatpush1.msra.mxu0 0.0
    %189 = vmatprep.subr.mxu0 0.0
    %190 = vmatpush1.msra.mxu0 0.0
    %191 = vmatprep.subr.mxu0 0.0
    %192 = vmatpush1.msra.mxu0 0.0
    %193 = vmatprep.subr.mxu0 0.0
    %194 = vmatpush1.msra.mxu0 0.0
    %195 = vmatprep.subr.mxu0 0.0
    %196 = vmatpush1.msra.mxu0 0.0
    %197 = vmatprep.subr.mxu0 0.0
    %198 = vmatpush1.msra.mxu0 0.0
    %199 = vmatprep.subr.mxu0 0.0
    %200 = vmatpush1.msra.mxu0 0.0
    %201 = vmatprep.subr.mxu0 0.0
    %202 = vmatpush1.msra.mxu0 0.0
    %203 = vmatprep.subr.mxu0 0.0
    %204 = vmatpush1.msra.mxu0 0.0
    %205 = vmatprep.subr.mxu0 0.0
    %206 = vmatpush1.msra.mxu0 0.0
    %207 = vmatprep.subr.mxu0 0.0
    %208 = vmatpush1.msra.mxu0 0.0
    %209 = vmatprep.subr.mxu0 0.0
    %210 = vmatpush1.msra.mxu0 0.0
    %211 = vmatprep.subr.mxu0 0.0
    %212 = vmatpush1.msra.mxu0 0.0
    %213 = vmatprep.subr.mxu0 0.0
    %214 = vmatpush1.msra.mxu0 0.0
    %215 = vmatprep.subr.mxu0 0.0
    %216 = vmatpush1.msra.mxu0 0.0
    %217 = vmatprep.subr.mxu0 0.0
    %218 = vmatpush1.msra.mxu0 0.0
    %219 = vmatprep.subr.mxu0 0.0
    %220 = vmatpush1.msra.mxu0 0.0
    %221 = vmatprep.subr.mxu0 0.0
    %222 = vmatpush1.msra.mxu0 0.0
    %223 = vmatprep.subr.mxu0 0.0
    %224 = vmatpush1.msra.mxu0 0.0
    %225 = vmatprep.subr.mxu0 0.0
    %226 = vmatpush1.msra.mxu0 0.0
    %227 = vmatprep.mubr.f32.mxu0 0.0
    %v228 = vand.u32 %v62, 4294901760
    %229 = vmatmul.mubr.f32.gmra.mrb[0].mxu0 %v228
    %v230 = vpop.f32.mrb[0].mxu0
    %v231 = vadd.f32 %v140, %v230
    %v232 = vpop.f32.mrb[0].mxu0
    %233 = vdwg.mxu0
    %234 = vmatprep.subr.mxu0 0.0
    %v235 = vand.u32 %v56, 4294901760
    %v236 = vsub.f32 %v56, %v235
    %237 = vmatpush1.msra.mxu0 %v236
    %238 = vmatprep.subr.mxu0 0.0
    %v239 = vand.u32 %v57, 4294901760
    %v240 = vsub.f32 %v57, %v239
    %241 = vmatpush1.msra.mxu0 %v240
    %242 = vmatprep.subr.mxu0 0.0
    %v243 = vand.u32 %v58, 4294901760
    %v244 = vsub.f32 %v58, %v243
    %245 = vmatpush1.msra.mxu0 %v244
    %246 = vmatprep.subr.mxu0 0.0
    %v247 = vand.u32 %v59, 4294901760
    %v248 = vsub.f32 %v59, %v247
    %249 = vmatpush1.msra.mxu0 %v248
    %250 = vmatprep.subr.mxu0 0.0
    %251 = vmatpush1.msra.mxu0 0.0
    %252 = vmatprep.subr.mxu0 0.0
    %253 = vmatpush1.msra.mxu0 0.0
    %254 = vmatprep.subr.mxu0 0.0
    %255 = vmatpush1.msra.mxu0 0.0
    %256 = vmatprep.subr.mxu0 0.0
    %257 = vmatpush1.msra.mxu0 0.0
    %258 = vmatprep.subr.mxu0 0.0
    %259 = vmatpush1.msra.mxu0 0.0
    %260 = vmatprep.subr.mxu0 0.0
    %261 = vmatpush1.msra.mxu0 0.0
    %262 = vmatprep.subr.mxu0 0.0
    %263 = vmatpush1.msra.mxu0 0.0
    %264 = vmatprep.subr.mxu0 0.0
    %265 = vmatpush1.msra.mxu0 0.0
    %266 = vmatprep.subr.mxu0 0.0
    %267 = vmatpush1.msra.mxu0 0.0
    %268 = vmatprep.subr.mxu0 0.0
    %269 = vmatpush1.msra.mxu0 0.0
    %270 = vmatprep.subr.mxu0 0.0
    %271 = vmatpush1.msra.mxu0 0.0
    %272 = vmatprep.subr.mxu0 0.0
    %273 = vmatpush1.msra.mxu0 0.0
    %274 = vmatprep.subr.mxu0 0.0
    %275 = vmatpush1.msra.mxu0 0.0
    %276 = vmatprep.subr.mxu0 0.0
    %277 = vmatpush1.msra.mxu0 0.0
    %278 = vmatprep.subr.mxu0 0.0
    %279 = vmatpush1.msra.mxu0 0.0
    %280 = vmatprep.subr.mxu0 0.0
    %281 = vmatpush1.msra.mxu0 0.0
    %282 = vmatprep.subr.mxu0 0.0
    %283 = vmatpush1.msra.mxu0 0.0
    %284 = vmatprep.subr.mxu0 0.0
    %285 = vmatpush1.msra.mxu0 0.0
    %286 = vmatprep.subr.mxu0 0.0
    %287 = vmatpush1.msra.mxu0 0.0
    %288 = vmatprep.subr.mxu0 0.0
    %289 = vmatpush1.msra.mxu0 0.0
    %290 = vmatprep.subr.mxu0 0.0
    %291 = vmatpush1.msra.mxu0 0.0
    %292 = vmatprep.subr.mxu0 0.0
    %293 = vmatpush1.msra.mxu0 0.0
    %294 = vmatprep.subr.mxu0 0.0
    %295 = vmatpush1.msra.mxu0 0.0
    %296 = vmatprep.subr.mxu0 0.0
    %297 = vmatpush1.msra.mxu0 0.0
    %298 = vmatprep.subr.mxu0 0.0
    %299 = vmatpush1.msra.mxu0 0.0
    %300 = vmatprep.subr.mxu0 0.0
    %301 = vmatpush1.msra.mxu0 0.0
    %302 = vmatprep.subr.mxu0 0.0
    %303 = vmatpush1.msra.mxu0 0.0
    %304 = vmatprep.subr.mxu0 0.0
    %305 = vmatpush1.msra.mxu0 0.0
    %306 = vmatprep.mubr.f32.mxu0 0.0
    %v307 = vand.u32 %v62, 4294901760
    %v308 = vsub.f32 %v62, %v307
    %309 = vmatmul.mubr.f32.gmra.mrb[0].mxu0 %v308
    %v310 = vpop.f32.mrb[0].mxu0
    %v311 = vadd.f32 %v231, %v310
    %v312 = vpop.f32.mrb[0].mxu0
    %313 = vdwg.mxu0
    %314 = vmatprep.subr.mxu0 0.0
    %v315 = vand.u32 %v56, 4294901760
    %316 = vmatpush1.msra.mxu0 %v315
    %317 = vmatprep.subr.mxu0 0.0
    %v318 = vand.u32 %v57, 4294901760
    %319 = vmatpush1.msra.mxu0 %v318
    %320 = vmatprep.subr.mxu0 0.0
    %v321 = vand.u32 %v58, 4294901760
    %322 = vmatpush1.msra.mxu0 %v321
    %323 = vmatprep.subr.mxu0 0.0
    %v324 = vand.u32 %v59, 4294901760
    %325 = vmatpush1.msra.mxu0 %v324
    %326 = vmatprep.subr.mxu0 0.0
    %327 = vmatpush1.msra.mxu0 0.0
    %328 = vmatprep.subr.mxu0 0.0
    %329 = vmatpush1.msra.mxu0 0.0
    %330 = vmatprep.subr.mxu0 0.0
    %331 = vmatpush1.msra.mxu0 0.0
    %332 = vmatprep.subr.mxu0 0.0
    %333 = vmatpush1.msra.mxu0 0.0
    %334 = vmatprep.subr.mxu0 0.0
    %335 = vmatpush1.msra.mxu0 0.0
    %336 = vmatprep.subr.mxu0 0.0
    %337 = vmatpush1.msra.mxu0 0.0
    %338 = vmatprep.subr.mxu0 0.0
    %339 = vmatpush1.msra.mxu0 0.0
    %340 = vmatprep.subr.mxu0 0.0
    %341 = vmatpush1.msra.mxu0 0.0
    %342 = vmatprep.subr.mxu0 0.0
    %343 = vmatpush1.msra.mxu0 0.0
    %344 = vmatprep.subr.mxu0 0.0
    %345 = vmatpush1.msra.mxu0 0.0
    %346 = vmatprep.subr.mxu0 0.0
    %347 = vmatpush1.msra.mxu0 0.0
    %348 = vmatprep.subr.mxu0 0.0
    %349 = vmatpush1.msra.mxu0 0.0
    %350 = vmatprep.subr.mxu0 0.0
    %351 = vmatpush1.msra.mxu0 0.0
    %352 = vmatprep.subr.mxu0 0.0
    %353 = vmatpush1.msra.mxu0 0.0
    %354 = vmatprep.subr.mxu0 0.0
    %355 = vmatpush1.msra.mxu0 0.0
    %356 = vmatprep.subr.mxu0 0.0
    %357 = vmatpush1.msra.mxu0 0.0
    %358 = vmatprep.subr.mxu0 0.0
    %359 = vmatpush1.msra.mxu0 0.0
    %360 = vmatprep.subr.mxu0 0.0
    %361 = vmatpush1.msra.mxu0 0.0
    %362 = vmatprep.subr.mxu0 0.0
    %363 = vmatpush1.msra.mxu0 0.0
    %364 = vmatprep.subr.mxu0 0.0
    %365 = vmatpush1.msra.mxu0 0.0
    %366 = vmatprep.subr.mxu0 0.0
    %367 = vmatpush1.msra.mxu0 0.0
    %368 = vmatprep.subr.mxu0 0.0
    %369 = vmatpush1.msra.mxu0 0.0
    %370 = vmatprep.subr.mxu0 0.0
    %371 = vmatpush1.msra.mxu0 0.0
    %372 = vmatprep.subr.mxu0 0.0
    %373 = vmatpush1.msra.mxu0 0.0
    %374 = vmatprep.subr.mxu0 0.0
    %375 = vmatpush1.msra.mxu0 0.0
    %376 = vmatprep.subr.mxu0 0.0
    %377 = vmatpush1.msra.mxu0 0.0
    %378 = vmatprep.subr.mxu0 0.0
    %379 = vmatpush1.msra.mxu0 0.0
    %380 = vmatprep.subr.mxu0 0.0
    %381 = vmatpush1.msra.mxu0 0.0
    %382 = vmatprep.mubr.f32.mxu0 0.0
    %v383 = vand.u32 %v62, 4294901760
    %v384 = vsub.f32 %v62, %v383
    %v385 = vand.u32 %v384, 4294901760
    %386 = vmatmul.mubr.f32.gmra.mrb[0].mxu0 %v385
    %v387 = vpop.f32.mrb[0].mxu0
    %v388 = vadd.f32 %v311, %v387
    %v389 = vpop.f32.mrb[0].mxu0
    %390 = vdwg.mxu0
    %391 = vmatprep.subr.mxu0 0.0
    %v392 = vand.u32 %v56, 4294901760
    %v393 = vsub.f32 %v56, %v392
    %v394 = vand.u32 %v393, 4294901760
    %395 = vmatpush1.msra.mxu0 %v394
    %396 = vmatprep.subr.mxu0 0.0
    %v397 = vand.u32 %v57, 4294901760
    %v398 = vsub.f32 %v57, %v397
    %v399 = vand.u32 %v398, 4294901760
    %400 = vmatpush1.msra.mxu0 %v399
    %401 = vmatprep.subr.mxu0 0.0
    %v402 = vand.u32 %v58, 4294901760
    %v403 = vsub.f32 %v58, %v402
    %v404 = vand.u32 %v403, 4294901760
    %405 = vmatpush1.msra.mxu0 %v404
    %406 = vmatprep.subr.mxu0 0.0
    %v407 = vand.u32 %v59, 4294901760
    %v408 = vsub.f32 %v59, %v407
    %v409 = vand.u32 %v408, 4294901760
    %410 = vmatpush1.msra.mxu0 %v409
    %411 = vmatprep.subr.mxu0 0.0
    %412 = vmatpush1.msra.mxu0 0.0
    %413 = vmatprep.subr.mxu0 0.0
    %414 = vmatpush1.msra.mxu0 0.0
    %415 = vmatprep.subr.mxu0 0.0
    %416 = vmatpush1.msra.mxu0 0.0
    %417 = vmatprep.subr.mxu0 0.0
    %418 = vmatpush1.msra.mxu0 0.0
    %419 = vmatprep.subr.mxu0 0.0
    %420 = vmatpush1.msra.mxu0 0.0
    %421 = vmatprep.subr.mxu0 0.0
    %422 = vmatpush1.msra.mxu0 0.0
    %423 = vmatprep.subr.mxu0 0.0
    %424 = vmatpush1.msra.mxu0 0.0
    %425 = vmatprep.subr.mxu0 0.0
    %426 = vmatpush1.msra.mxu0 0.0
    %427 = vmatprep.subr.mxu0 0.0
    %428 = vmatpush1.msra.mxu0 0.0
    %429 = vmatprep.subr.mxu0 0.0
    %430 = vmatpush1.msra.mxu0 0.0
    %431 = vmatprep.subr.mxu0 0.0
    %432 = vmatpush1.msra.mxu0 0.0
    %433 = vmatprep.subr.mxu0 0.0
    %434 = vmatpush1.msra.mxu0 0.0
    %435 = vmatprep.subr.mxu0 0.0
    %436 = vmatpush1.msra.mxu0 0.0
    %437 = vmatprep.subr.mxu0 0.0
    %438 = vmatpush1.msra.mxu0 0.0
    %439 = vmatprep.subr.mxu0 0.0
    %440 = vmatpush1.msra.mxu0 0.0
    %441 = vmatprep.subr.mxu0 0.0
    %442 = vmatpush1.msra.mxu0 0.0
    %443 = vmatprep.subr.mxu0 0.0
    %444 = vmatpush1.msra.mxu0 0.0
    %445 = vmatprep.subr.mxu0 0.0
    %446 = vmatpush1.msra.mxu0 0.0
    %447 = vmatprep.subr.mxu0 0.0
    %448 = vmatpush1.msra.mxu0 0.0
    %449 = vmatprep.subr.mxu0 0.0
    %450 = vmatpush1.msra.mxu0 0.0
    %451 = vmatprep.subr.mxu0 0.0
    %452 = vmatpush1.msra.mxu0 0.0
    %453 = vmatprep.subr.mxu0 0.0
    %454 = vmatpush1.msra.mxu0 0.0
    %455 = vmatprep.subr.mxu0 0.0
    %456 = vmatpush1.msra.mxu0 0.0
    %457 = vmatprep.subr.mxu0 0.0
    %458 = vmatpush1.msra.mxu0 0.0
    %459 = vmatprep.subr.mxu0 0.0
    %460 = vmatpush1.msra.mxu0 0.0
    %461 = vmatprep.subr.mxu0 0.0
    %462 = vmatpush1.msra.mxu0 0.0
    %463 = vmatprep.subr.mxu0 0.0
    %464 = vmatpush1.msra.mxu0 0.0
    %465 = vmatprep.subr.mxu0 0.0
    %466 = vmatpush1.msra.mxu0 0.0
    %467 = vmatprep.mubr.f32.mxu0 0.0
    %v468 = vand.u32 %v62, 4294901760
    %469 = vmatmul.mubr.f32.gmra.mrb[0].mxu0 %v468
    %v470 = vpop.f32.mrb[0].mxu0
    %v471 = vadd.f32 %v388, %v470
    %v472 = vpop.f32.mrb[0].mxu0
    %473 = vdwg.mxu0
    %474 = vmatprep.subr.mxu0 0.0
    %v475 = vand.u32 %v56, 4294901760
    %476 = vmatpush1.msra.mxu0 %v475
    %477 = vmatprep.subr.mxu0 0.0
    %v478 = vand.u32 %v57, 4294901760
    %479 = vmatpush1.msra.mxu0 %v478
    %480 = vmatprep.subr.mxu0 0.0
    %v481 = vand.u32 %v58, 4294901760
    %482 = vmatpush1.msra.mxu0 %v481
    %483 = vmatprep.subr.mxu0 0.0
    %v484 = vand.u32 %v59, 4294901760
    %485 = vmatpush1.msra.mxu0 %v484
    %486 = vmatprep.subr.mxu0 0.0
    %487 = vmatpush1.msra.mxu0 0.0
    %488 = vmatprep.subr.mxu0 0.0
    %489 = vmatpush1.msra.mxu0 0.0
    %490 = vmatprep.subr.mxu0 0.0
    %491 = vmatpush1.msra.mxu0 0.0
    %492 = vmatprep.subr.mxu0 0.0
    %493 = vmatpush1.msra.mxu0 0.0
    %494 = vmatprep.subr.mxu0 0.0
    %495 = vmatpush1.msra.mxu0 0.0
    %496 = vmatprep.subr.mxu0 0.0
    %497 = vmatpush1.msra.mxu0 0.0
    %498 = vmatprep.subr.mxu0 0.0
    %499 = vmatpush1.msra.mxu0 0.0
    %500 = vmatprep.subr.mxu0 0.0
    %501 = vmatpush1.msra.mxu0 0.0
    %502 = vmatprep.subr.mxu0 0.0
    %503 = vmatpush1.msra.mxu0 0.0
    %504 = vmatprep.subr.mxu0 0.0
    %505 = vmatpush1.msra.mxu0 0.0
    %506 = vmatprep.subr.mxu0 0.0
    %507 = vmatpush1.msra.mxu0 0.0
    %508 = vmatprep.subr.mxu0 0.0
    %509 = vmatpush1.msra.mxu0 0.0
    %510 = vmatprep.subr.mxu0 0.0
    %511 = vmatpush1.msra.mxu0 0.0
    %512 = vmatprep.subr.mxu0 0.0
    %513 = vmatpush1.msra.mxu0 0.0
    %514 = vmatprep.subr.mxu0 0.0
    %515 = vmatpush1.msra.mxu0 0.0
    %516 = vmatprep.subr.mxu0 0.0
    %517 = vmatpush1.msra.mxu0 0.0
    %518 = vmatprep.subr.mxu0 0.0
    %519 = vmatpush1.msra.mxu0 0.0
    %520 = vmatprep.subr.mxu0 0.0
    %521 = vmatpush1.msra.mxu0 0.0
    %522 = vmatprep.subr.mxu0 0.0
    %523 = vmatpush1.msra.mxu0 0.0
    %524 = vmatprep.subr.mxu0 0.0
    %525 = vmatpush1.msra.mxu0 0.0
    %526 = vmatprep.subr.mxu0 0.0
    %527 = vmatpush1.msra.mxu0 0.0
    %528 = vmatprep.subr.mxu0 0.0
    %529 = vmatpush1.msra.mxu0 0.0
    %530 = vmatprep.subr.mxu0 0.0
    %531 = vmatpush1.msra.mxu0 0.0
    %532 = vmatprep.subr.mxu0 0.0
    %533 = vmatpush1.msra.mxu0 0.0
    %534 = vmatprep.subr.mxu0 0.0
    %535 = vmatpush1.msra.mxu0 0.0
    %536 = vmatprep.subr.mxu0 0.0
    %537 = vmatpush1.msra.mxu0 0.0
    %538 = vmatprep.subr.mxu0 0.0
    %539 = vmatpush1.msra.mxu0 0.0
    %540 = vmatprep.subr.mxu0 0.0
    %541 = vmatpush1.msra.mxu0 0.0
    %542 = vmatprep.mubr.f32.mxu0 0.0
    %v543 = vand.u32 %v62, 4294901760
    %544 = vmatmul.mubr.f32.gmra.mrb[0].mxu0 %v543
    %v545 = vpop.f32.mrb[0].mxu0
    %v546 = vadd.f32 %v471, %v545
    %v547 = vpop.f32.mrb[0].mxu0
    %548 = vdwg.mxu0
    %v549 = vld [vmem:[#allocation8 + $0x20] sm:$0xff]
    %v550 = vld [vmem:[#allocation8 + $0x28] sm:$0xff]
    %v551 = vld [vmem:[#allocation8 + $0x30] sm:$0xff]
    %v552 = vld [vmem:[#allocation8 + $0x38] sm:$0xff]
    %v554 = vsel %vm60, %v55, 0
    %556 = vmatprep.subr.mxu0 0.0
    %v557 = vand.u32 %v549, 4294901760
    %558 = vmatpush1.msra.mxu0 %v557
    %559 = vmatprep.subr.mxu0 0.0
    %v560 = vand.u32 %v550, 4294901760
    %561 = vmatpush1.msra.mxu0 %v560
    %562 = vmatprep.subr.mxu0 0.0
    %v563 = vand.u32 %v551, 4294901760
    %564 = vmatpush1.msra.mxu0 %v563
    %565 = vmatprep.subr.mxu0 0.0
    %v566 = vand.u32 %v552, 4294901760
    %567 = vmatpush1.msra.mxu0 %v566
    %568 = vmatprep.subr.mxu0 0.0
    %569 = vmatpush1.msra.mxu0 0.0
    %570 = vmatprep.subr.mxu0 0.0
    %571 = vmatpush1.msra.mxu0 0.0
    %572 = vmatprep.subr.mxu0 0.0
    %573 = vmatpush1.msra.mxu0 0.0
    %574 = vmatprep.subr.mxu0 0.0
    %575 = vmatpush1.msra.mxu0 0.0
    %576 = vmatprep.subr.mxu0 0.0
    %577 = vmatpush1.msra.mxu0 0.0
    %578 = vmatprep.subr.mxu0 0.0
    %579 = vmatpush1.msra.mxu0 0.0
    %580 = vmatprep.subr.mxu0 0.0
    %581 = vmatpush1.msra.mxu0 0.0
    %582 = vmatprep.subr.mxu0 0.0
    %583 = vmatpush1.msra.mxu0 0.0
    %584 = vmatprep.subr.mxu0 0.0
    %585 = vmatpush1.msra.mxu0 0.0
    %586 = vmatprep.subr.mxu0 0.0
    %587 = vmatpush1.msra.mxu0 0.0
    %588 = vmatprep.subr.mxu0 0.0
    %589 = vmatpush1.msra.mxu0 0.0
    %590 = vmatprep.subr.mxu0 0.0
    %591 = vmatpush1.msra.mxu0 0.0
    %592 = vmatprep.subr.mxu0 0.0
    %593 = vmatpush1.msra.mxu0 0.0
    %594 = vmatprep.subr.mxu0 0.0
    %595 = vmatpush1.msra.mxu0 0.0
    %596 = vmatprep.subr.mxu0 0.0
    %597 = vmatpush1.msra.mxu0 0.0
    %598 = vmatprep.subr.mxu0 0.0
    %599 = vmatpush1.msra.mxu0 0.0
    %600 = vmatprep.subr.mxu0 0.0
    %601 = vmatpush1.msra.mxu0 0.0
    %602 = vmatprep.subr.mxu0 0.0
    %603 = vmatpush1.msra.mxu0 0.0
    %604 = vmatprep.subr.mxu0 0.0
    %605 = vmatpush1.msra.mxu0 0.0
    %606 = vmatprep.subr.mxu0 0.0
    %607 = vmatpush1.msra.mxu0 0.0
    %608 = vmatprep.subr.mxu0 0.0
    %609 = vmatpush1.msra.mxu0 0.0
    %610 = vmatprep.subr.mxu0 0.0
    %611 = vmatpush1.msra.mxu0 0.0
    %612 = vmatprep.subr.mxu0 0.0
    %613 = vmatpush1.msra.mxu0 0.0
    %614 = vmatprep.subr.mxu0 0.0
    %615 = vmatpush1.msra.mxu0 0.0
    %616 = vmatprep.subr.mxu0 0.0
    %617 = vmatpush1.msra.mxu0 0.0
    %618 = vmatprep.subr.mxu0 0.0
    %619 = vmatpush1.msra.mxu0 0.0
    %620 = vmatprep.subr.mxu0 0.0
    %621 = vmatpush1.msra.mxu0 0.0
    %622 = vmatprep.subr.mxu0 0.0
    %623 = vmatpush1.msra.mxu0 0.0
    %624 = vmatprep.mubr.f32.mxu0 0.0
    %v625 = vand.u32 %v554, 4294901760
    %v626 = vsub.f32 %v554, %v625
    %v627 = vand.u32 %v626, 4294901760
    %v628 = vsub.f32 %v626, %v627
    %v629 = vand.u32 %v628, 4294901760
    %630 = vmatmul.mubr.f32.gmra.mrb[0].mxu0 %v629
    %v631 = vpop.f32.mrb[0].mxu0
    %v632 = vadd.f32 0.0, %v631
    %v633 = vpop.f32.mrb[0].mxu0
    %634 = vdwg.mxu0
    %635 = vmatprep.subr.mxu0 0.0
    %v636 = vand.u32 %v549, 4294901760
    %v637 = vsub.f32 %v549, %v636
    %v638 = vand.u32 %v637, 4294901760
    %v639 = vsub.f32 %v637, %v638
    %v640 = vand.u32 %v639, 4294901760
    %641 = vmatpush1.msra.mxu0 %v640
    %642 = vmatprep.subr.mxu0 0.0
    %v643 = vand.u32 %v550, 4294901760
    %v644 = vsub.f32 %v550, %v643
    %v645 = vand.u32 %v644, 4294901760
    %v646 = vsub.f32 %v644, %v645
    %v647 = vand.u32 %v646, 4294901760
    %648 = vmatpush1.msra.mxu0 %v647
    %649 = vmatprep.subr.mxu0 0.0
    %v650 = vand.u32 %v551, 4294901760
    %v651 = vsub.f32 %v551, %v650
    %v652 = vand.u32 %v651, 4294901760
    %v653 = vsub.f32 %v651, %v652
    %v654 = vand.u32 %v653, 4294901760
    %655 = vmatpush1.msra.mxu0 %v654
    %656 = vmatprep.subr.mxu0 0.0
    %v657 = vand.u32 %v552, 4294901760
    %v658 = vsub.f32 %v552, %v657
    %v659 = vand.u32 %v658, 4294901760
    %v660 = vsub.f32 %v658, %v659
    %v661 = vand.u32 %v660, 4294901760
    %662 = vmatpush1.msra.mxu0 %v661
    %663 = vmatprep.subr.mxu0 0.0
    %664 = vmatpush1.msra.mxu0 0.0
    %665 = vmatprep.subr.mxu0 0.0
    %666 = vmatpush1.msra.mxu0 0.0
    %667 = vmatprep.subr.mxu0 0.0
    %668 = vmatpush1.msra.mxu0 0.0
    %669 = vmatprep.subr.mxu0 0.0
    %670 = vmatpush1.msra.mxu0 0.0
    %671 = vmatprep.subr.mxu0 0.0
    %672 = vmatpush1.msra.mxu0 0.0
    %673 = vmatprep.subr.mxu0 0.0
    %674 = vmatpush1.msra.mxu0 0.0
    %675 = vmatprep.subr.mxu0 0.0
    %676 = vmatpush1.msra.mxu0 0.0
    %677 = vmatprep.subr.mxu0 0.0
    %678 = vmatpush1.msra.mxu0 0.0
    %679 = vmatprep.subr.mxu0 0.0
    %680 = vmatpush1.msra.mxu0 0.0
    %681 = vmatprep.subr.mxu0 0.0
    %682 = vmatpush1.msra.mxu0 0.0
    %683 = vmatprep.subr.mxu0 0.0
    %684 = vmatpush1.msra.mxu0 0.0
    %685 = vmatprep.subr.mxu0 0.0
    %686 = vmatpush1.msra.mxu0 0.0
    %687 = vmatprep.subr.mxu0 0.0
    %688 = vmatpush1.msra.mxu0 0.0
    %689 = vmatprep.subr.mxu0 0.0
    %690 = vmatpush1.msra.mxu0 0.0
    %691 = vmatprep.subr.mxu0 0.0
    %692 = vmatpush1.msra.mxu0 0.0
    %693 = vmatprep.subr.mxu0 0.0
    %694 = vmatpush1.msra.mxu0 0.0
    %695 = vmatprep.subr.mxu0 0.0
    %696 = vmatpush1.msra.mxu0 0.0
    %697 = vmatprep.subr.mxu0 0.0
    %698 = vmatpush1.msra.mxu0 0.0
    %699 = vmatprep.subr.mxu0 0.0
    %700 = vmatpush1.msra.mxu0 0.0
    %701 = vmatprep.subr.mxu0 0.0
    %702 = vmatpush1.msra.mxu0 0.0
    %703 = vmatprep.subr.mxu0 0.0
    %704 = vmatpush1.msra.mxu0 0.0
    %705 = vmatprep.subr.mxu0 0.0
    %706 = vmatpush1.msra.mxu0 0.0
    %707 = vmatprep.subr.mxu0 0.0
    %708 = vmatpush1.msra.mxu0 0.0
    %709 = vmatprep.subr.mxu0 0.0
    %710 = vmatpush1.msra.mxu0 0.0
    %711 = vmatprep.subr.mxu0 0.0
    %712 = vmatpush1.msra.mxu0 0.0
    %713 = vmatprep.subr.mxu0 0.0
    %714 = vmatpush1.msra.mxu0 0.0
    %715 = vmatprep.subr.mxu0 0.0
    %716 = vmatpush1.msra.mxu0 0.0
    %717 = vmatprep.subr.mxu0 0.0
    %718 = vmatpush1.msra.mxu0 0.0
    %719 = vmatprep.mubr.f32.mxu0 0.0
    %v720 = vand.u32 %v554, 4294901760
    %721 = vmatmul.mubr.f32.gmra.mrb[0].mxu0 %v720
    %v722 = vpop.f32.mrb[0].mxu0
    %v723 = vadd.f32 %v632, %v722
    %v724 = vpop.f32.mrb[0].mxu0
    %725 = vdwg.mxu0
    %726 = vmatprep.subr.mxu0 0.0
    %v727 = vand.u32 %v549, 4294901760
    %v728 = vsub.f32 %v549, %v727
    %729 = vmatpush1.msra.mxu0 %v728
    %730 = vmatprep.subr.mxu0 0.0
    %v731 = vand.u32 %v550, 4294901760
    %v732 = vsub.f32 %v550, %v731
    %733 = vmatpush1.msra.mxu0 %v732
    %734 = vmatprep.subr.mxu0 0.0
    %v735 = vand.u32 %v551, 4294901760
    %v736 = vsub.f32 %v551, %v735
    %737 = vmatpush1.msra.mxu0 %v736
    %738 = vmatprep.subr.mxu0 0.0
    %v739 = vand.u32 %v552, 4294901760
    %v740 = vsub.f32 %v552, %v739
    %741 = vmatpush1.msra.mxu0 %v740
    %742 = vmatprep.subr.mxu0 0.0
    %743 = vmatpush1.msra.mxu0 0.0
    %744 = vmatprep.subr.mxu0 0.0
    %745 = vmatpush1.msra.mxu0 0.0
    %746 = vmatprep.subr.mxu0 0.0
    %747 = vmatpush1.msra.mxu0 0.0
    %748 = vmatprep.subr.mxu0 0.0
    %749 = vmatpush1.msra.mxu0 0.0
    %750 = vmatprep.subr.mxu0 0.0
    %751 = vmatpush1.msra.mxu0 0.0
    %752 = vmatprep.subr.mxu0 0.0
    %753 = vmatpush1.msra.mxu0 0.0
    %754 = vmatprep.subr.mxu0 0.0
    %755 = vmatpush1.msra.mxu0 0.0
    %756 = vmatprep.subr.mxu0 0.0
    %757 = vmatpush1.msra.mxu0 0.0
    %758 = vmatprep.subr.mxu0 0.0
    %759 = vmatpush1.msra.mxu0 0.0
    %760 = vmatprep.subr.mxu0 0.0
    %761 = vmatpush1.msra.mxu0 0.0
    %762 = vmatprep.subr.mxu0 0.0
    %763 = vmatpush1.msra.mxu0 0.0
    %764 = vmatprep.subr.mxu0 0.0
    %765 = vmatpush1.msra.mxu0 0.0
    %766 = vmatprep.subr.mxu0 0.0
    %767 = vmatpush1.msra.mxu0 0.0
    %768 = vmatprep.subr.mxu0 0.0
    %769 = vmatpush1.msra.mxu0 0.0
    %770 = vmatprep.subr.mxu0 0.0
    %771 = vmatpush1.msra.mxu0 0.0
    %772 = vmatprep.subr.mxu0 0.0
    %773 = vmatpush1.msra.mxu0 0.0
    %774 = vmatprep.subr.mxu0 0.0
    %775 = vmatpush1.msra.mxu0 0.0
    %776 = vmatprep.subr.mxu0 0.0
    %777 = vmatpush1.msra.mxu0 0.0
    %778 = vmatprep.subr.mxu0 0.0
    %779 = vmatpush1.msra.mxu0 0.0
    %780 = vmatprep.subr.mxu0 0.0
    %781 = vmatpush1.msra.mxu0 0.0
    %782 = vmatprep.subr.mxu0 0.0
    %783 = vmatpush1.msra.mxu0 0.0
    %784 = vmatprep.subr.mxu0 0.0
    %785 = vmatpush1.msra.mxu0 0.0
    %786 = vmatprep.subr.mxu0 0.0
    %787 = vmatpush1.msra.mxu0 0.0
    %788 = vmatprep.subr.mxu0 0.0
    %789 = vmatpush1.msra.mxu0 0.0
    %790 = vmatprep.subr.mxu0 0.0
    %791 = vmatpush1.msra.mxu0 0.0
    %792 = vmatprep.subr.mxu0 0.0
    %793 = vmatpush1.msra.mxu0 0.0
    %794 = vmatprep.subr.mxu0 0.0
    %795 = vmatpush1.msra.mxu0 0.0
    %796 = vmatprep.subr.mxu0 0.0
    %797 = vmatpush1.msra.mxu0 0.0
    %798 = vmatprep.mubr.f32.mxu0 0.0
    %v799 = vand.u32 %v554, 4294901760
    %v800 = vsub.f32 %v554, %v799
    %801 = vmatmul.mubr.f32.gmra.mrb[0].mxu0 %v800
    %v802 = vpop.f32.mrb[0].mxu0
    %v803 = vadd.f32 %v723, %v802
    %v804 = vpop.f32.mrb[0].mxu0
    %805 = vdwg.mxu0
    %806 = vmatprep.subr.mxu0 0.0
    %v807 = vand.u32 %v549, 4294901760
    %808 = vmatpush1.msra.mxu0 %v807
    %809 = vmatprep.subr.mxu0 0.0
    %v810 = vand.u32 %v550, 4294901760
    %811 = vmatpush1.msra.mxu0 %v810
    %812 = vmatprep.subr.mxu0 0.0
    %v813 = vand.u32 %v551, 4294901760
    %814 = vmatpush1.msra.mxu0 %v813
    %815 = vmatprep.subr.mxu0 0.0
    %v816 = vand.u32 %v552, 4294901760
    %817 = vmatpush1.msra.mxu0 %v816
    %818 = vmatprep.subr.mxu0 0.0
    %819 = vmatpush1.msra.mxu0 0.0
    %820 = vmatprep.subr.mxu0 0.0
    %821 = vmatpush1.msra.mxu0 0.0
    %822 = vmatprep.subr.mxu0 0.0
    %823 = vmatpush1.msra.mxu0 0.0
    %824 = vmatprep.subr.mxu0 0.0
    %825 = vmatpush1.msra.mxu0 0.0
    %826 = vmatprep.subr.mxu0 0.0
    %827 = vmatpush1.msra.mxu0 0.0
    %828 = vmatprep.subr.mxu0 0.0
    %829 = vmatpush1.msra.mxu0 0.0
    %830 = vmatprep.subr.mxu0 0.0
    %831 = vmatpush1.msra.mxu0 0.0
    %832 = vmatprep.subr.mxu0 0.0
    %833 = vmatpush1.msra.mxu0 0.0
    %834 = vmatprep.subr.mxu0 0.0
    %835 = vmatpush1.msra.mxu0 0.0
    %836 = vmatprep.subr.mxu0 0.0
    %837 = vmatpush1.msra.mxu0 0.0
    %838 = vmatprep.subr.mxu0 0.0
    %839 = vmatpush1.msra.mxu0 0.0
    %840 = vmatprep.subr.mxu0 0.0
    %841 = vmatpush1.msra.mxu0 0.0
    %842 = vmatprep.subr.mxu0 0.0
    %843 = vmatpush1.msra.mxu0 0.0
    %844 = vmatprep.subr.mxu0 0.0
    %845 = vmatpush1.msra.mxu0 0.0
    %846 = vmatprep.subr.mxu0 0.0
    %847 = vmatpush1.msra.mxu0 0.0
    %848 = vmatprep.subr.mxu0 0.0
    %849 = vmatpush1.msra.mxu0 0.0
    %850 = vmatprep.subr.mxu0 0.0
    %851 = vmatpush1.msra.mxu0 0.0
    %852 = vmatprep.subr.mxu0 0.0
    %853 = vmatpush1.msra.mxu0 0.0
    %854 = vmatprep.subr.mxu0 0.0
    %855 = vmatpush1.msra.mxu0 0.0
    %856 = vmatprep.subr.mxu0 0.0
    %857 = vmatpush1.msra.mxu0 0.0
    %858 = vmatprep.subr.mxu0 0.0
    %859 = vmatpush1.msra.mxu0 0.0
    %860 = vmatprep.subr.mxu0 0.0
    %861 = vmatpush1.msra.mxu0 0.0
    %862 = vmatprep.subr.mxu0 0.0
    %863 = vmatpush1.msra.mxu0 0.0
    %864 = vmatprep.subr.mxu0 0.0
    %865 = vmatpush1.msra.mxu0 0.0
    %866 = vmatprep.subr.mxu0 0.0
    %867 = vmatpush1.msra.mxu0 0.0
    %868 = vmatprep.subr.mxu0 0.0
    %869 = vmatpush1.msra.mxu0 0.0
    %870 = vmatprep.subr.mxu0 0.0
    %871 = vmatpush1.msra.mxu0 0.0
    %872 = vmatprep.subr.mxu0 0.0
    %873 = vmatpush1.msra.mxu0 0.0
    %874 = vmatprep.mubr.f32.mxu0 0.0
    %v875 = vand.u32 %v554, 4294901760
    %v876 = vsub.f32 %v554, %v875
    %v877 = vand.u32 %v876, 4294901760
    %878 = vmatmul.mubr.f32.gmra.mrb[0].mxu0 %v877
    %v879 = vpop.f32.mrb[0].mxu0
    %v880 = vadd.f32 %v803, %v879
    %v881 = vpop.f32.mrb[0].mxu0
    %882 = vdwg.mxu0
    %883 = vmatprep.subr.mxu0 0.0
    %v884 = vand.u32 %v549, 4294901760
    %v885 = vsub.f32 %v549, %v884
    %v886 = vand.u32 %v885, 4294901760
    %887 = vmatpush1.msra.mxu0 %v886
    %888 = vmatprep.subr.mxu0 0.0
    %v889 = vand.u32 %v550, 4294901760
    %v890 = vsub.f32 %v550, %v889
    %v891 = vand.u32 %v890, 4294901760
    %892 = vmatpush1.msra.mxu0 %v891
    %893 = vmatprep.subr.mxu0 0.0
    %v894 = vand.u32 %v551, 4294901760
    %v895 = vsub.f32 %v551, %v894
    %v896 = vand.u32 %v895, 4294901760
    %897 = vmatpush1.msra.mxu0 %v896
    %898 = vmatprep.subr.mxu0 0.0
    %v899 = vand.u32 %v552, 4294901760
    %v900 = vsub.f32 %v552, %v899
    %v901 = vand.u32 %v900, 4294901760
    %902 = vmatpush1.msra.mxu0 %v901
    %903 = vmatprep.subr.mxu0 0.0
    %904 = vmatpush1.msra.mxu0 0.0
    %905 = vmatprep.subr.mxu0 0.0
    %906 = vmatpush1.msra.mxu0 0.0
    %907 = vmatprep.subr.mxu0 0.0
    %908 = vmatpush1.msra.mxu0 0.0
    %909 = vmatprep.subr.mxu0 0.0
    %910 = vmatpush1.msra.mxu0 0.0
    %911 = vmatprep.subr.mxu0 0.0
    %912 = vmatpush1.msra.mxu0 0.0
    %913 = vmatprep.subr.mxu0 0.0
    %914 = vmatpush1.msra.mxu0 0.0
    %915 = vmatprep.subr.mxu0 0.0
    %916 = vmatpush1.msra.mxu0 0.0
    %917 = vmatprep.subr.mxu0 0.0
    %918 = vmatpush1.msra.mxu0 0.0
    %919 = vmatprep.subr.mxu0 0.0
    %920 = vmatpush1.msra.mxu0 0.0
    %921 = vmatprep.subr.mxu0 0.0
    %922 = vmatpush1.msra.mxu0 0.0
    %923 = vmatprep.subr.mxu0 0.0
    %924 = vmatpush1.msra.mxu0 0.0
    %925 = vmatprep.subr.mxu0 0.0
    %926 = vmatpush1.msra.mxu0 0.0
    %927 = vmatprep.subr.mxu0 0.0
    %928 = vmatpush1.msra.mxu0 0.0
    %929 = vmatprep.subr.mxu0 0.0
    %930 = vmatpush1.msra.mxu0 0.0
    %931 = vmatprep.subr.mxu0 0.0
    %932 = vmatpush1.msra.mxu0 0.0
    %933 = vmatprep.subr.mxu0 0.0
    %934 = vmatpush1.msra.mxu0 0.0
    %935 = vmatprep.subr.mxu0 0.0
    %936 = vmatpush1.msra.mxu0 0.0
    %937 = vmatprep.subr.mxu0 0.0
    %938 = vmatpush1.msra.mxu0 0.0
    %939 = vmatprep.subr.mxu0 0.0
    %940 = vmatpush1.msra.mxu0 0.0
    %941 = vmatprep.subr.mxu0 0.0
    %942 = vmatpush1.msra.mxu0 0.0
    %943 = vmatprep.subr.mxu0 0.0
    %944 = vmatpush1.msra.mxu0 0.0
    %945 = vmatprep.subr.mxu0 0.0
    %946 = vmatpush1.msra.mxu0 0.0
    %947 = vmatprep.subr.mxu0 0.0
    %948 = vmatpush1.msra.mxu0 0.0
    %949 = vmatprep.subr.mxu0 0.0
    %950 = vmatpush1.msra.mxu0 0.0
    %951 = vmatprep.subr.mxu0 0.0
    %952 = vmatpush1.msra.mxu0 0.0
    %953 = vmatprep.subr.mxu0 0.0
    %954 = vmatpush1.msra.mxu0 0.0
    %955 = vmatprep.subr.mxu0 0.0
    %956 = vmatpush1.msra.mxu0 0.0
    %957 = vmatprep.subr.mxu0 0.0
    %958 = vmatpush1.msra.mxu0 0.0
    %959 = vmatprep.mubr.f32.mxu0 0.0
    %v960 = vand.u32 %v554, 4294901760
    %961 = vmatmul.mubr.f32.gmra.mrb[0].mxu0 %v960
    %v962 = vpop.f32.mrb[0].mxu0
    %v963 = vadd.f32 %v880, %v962
    %v964 = vpop.f32.mrb[0].mxu0
    %965 = vdwg.mxu0
    %966 = vmatprep.subr.mxu0 0.0
    %v967 = vand.u32 %v549, 4294901760
    %968 = vmatpush1.msra.mxu0 %v967
    %969 = vmatprep.subr.mxu0 0.0
    %v970 = vand.u32 %v550, 4294901760
    %971 = vmatpush1.msra.mxu0 %v970
    %972 = vmatprep.subr.mxu0 0.0
    %v973 = vand.u32 %v551, 4294901760
    %974 = vmatpush1.msra.mxu0 %v973
    %975 = vmatprep.subr.mxu0 0.0
    %v976 = vand.u32 %v552, 4294901760
    %977 = vmatpush1.msra.mxu0 %v976
    %978 = vmatprep.subr.mxu0 0.0
    %979 = vmatpush1.msra.mxu0 0.0
    %980 = vmatprep.subr.mxu0 0.0
    %981 = vmatpush1.msra.mxu0 0.0
    %982 = vmatprep.subr.mxu0 0.0
    %983 = vmatpush1.msra.mxu0 0.0
    %984 = vmatprep.subr.mxu0 0.0
    %985 = vmatpush1.msra.mxu0 0.0
    %986 = vmatprep.subr.mxu0 0.0
    %987 = vmatpush1.msra.mxu0 0.0
    %988 = vmatprep.subr.mxu0 0.0
    %989 = vmatpush1.msra.mxu0 0.0
    %990 = vmatprep.subr.mxu0 0.0
    %991 = vmatpush1.msra.mxu0 0.0
    %992 = vmatprep.subr.mxu0 0.0
    %993 = vmatpush1.msra.mxu0 0.0
    %994 = vmatprep.subr.mxu0 0.0
    %995 = vmatpush1.msra.mxu0 0.0
    %996 = vmatprep.subr.mxu0 0.0
    %997 = vmatpush1.msra.mxu0 0.0
    %998 = vmatprep.subr.mxu0 0.0
    %999 = vmatpush1.msra.mxu0 0.0
    %1000 = vmatprep.subr.mxu0 0.0
    %1001 = vmatpush1.msra.mxu0 0.0
    %1002 = vmatprep.subr.mxu0 0.0
    %1003 = vmatpush1.msra.mxu0 0.0
    %1004 = vmatprep.subr.mxu0 0.0
    %1005 = vmatpush1.msra.mxu0 0.0
    %1006 = vmatprep.subr.mxu0 0.0
    %1007 = vmatpush1.msra.mxu0 0.0
    %1008 = vmatprep.subr.mxu0 0.0
    %1009 = vmatpush1.msra.mxu0 0.0
    %1010 = vmatprep.subr.mxu0 0.0
    %1011 = vmatpush1.msra.mxu0 0.0
    %1012 = vmatprep.subr.mxu0 0.0
    %1013 = vmatpush1.msra.mxu0 0.0
    %1014 = vmatprep.subr.mxu0 0.0
    %1015 = vmatpush1.msra.mxu0 0.0
    %1016 = vmatprep.subr.mxu0 0.0
    %1017 = vmatpush1.msra.mxu0 0.0
    %1018 = vmatprep.subr.mxu0 0.0
    %1019 = vmatpush1.msra.mxu0 0.0
    %1020 = vmatprep.subr.mxu0 0.0
    %1021 = vmatpush1.msra.mxu0 0.0
    %1022 = vmatprep.subr.mxu0 0.0
    %1023 = vmatpush1.msra.mxu0 0.0
    %1024 = vmatprep.subr.mxu0 0.0
    %1025 = vmatpush1.msra.mxu0 0.0
    %1026 = vmatprep.subr.mxu0 0.0
    %1027 = vmatpush1.msra.mxu0 0.0
    %1028 = vmatprep.subr.mxu0 0.0
    %1029 = vmatpush1.msra.mxu0 0.0
    %1030 = vmatprep.subr.mxu0 0.0
    %1031 = vmatpush1.msra.mxu0 0.0
    %1032 = vmatprep.subr.mxu0 0.0
    %1033 = vmatpush1.msra.mxu0 0.0
    %1034 = vmatprep.mubr.f32.mxu0 0.0
    %v1035 = vand.u32 %v554, 4294901760
    %1036 = vmatmul.mubr.f32.gmra.mrb[0].mxu0 %v1035
    %v1037 = vpop.f32.mrb[0].mxu0
    %v1038 = vadd.f32 %v963, %v1037
    %v1039 = vpop.f32.mrb[0].mxu0
    %1040 = vdwg.mxu0
    %v1041 = vadd.f32 %v546, %v1038
    %v1042 = vld [vmem:[#allocation8 + $0x60] sm:$0x1]
    %v1043 = vadd.f32 %v1041, %v1042
    %vm1044 = vcmask 155648
    %v1045 = vsel %vm1044, %v1043, -inf
    %1046 = vmax.xlane.f32.xlu0 %v1045
    %v1047 = vpop.xlane.xlu0 %1046
    %v1048 = vsub.f32 %v1043, %v1047
    %v1049 = vmul.f32 %v1048, 1.442695
    %v1050 = vpow.pop %v1049
    %v1051 = vsel %vm1044, %v1050, 0.0
    %1052 = vadd.xlane.f32.xlu0 %v1051
    %v1053 = vpop.xlane.xlu0 %1052
    %v1054 = vrcp.pop %v1053
    %v1055 = vmul.f32 %v1050, %v1054
    %v1056 = vld [vmem:[#allocation5] sm:$0xff]
    %v1057 = vld [vmem:[#allocation5 + $0x8] sm:$0xff]
    %v1058 = vld [vmem:[#allocation5 + $0x10] sm:$0xf]
    %vm1059 = vcmask 162816
    %v1061 = vsel %vm1059, %v1055, 0
    %vm1063 = vcmask 1043456
    %v1065 = vsel %vm1063, %v1058, 0
    %1067 = vmatprep.subr.mxu0 0.0
    %v1068 = vand.u32 %v1056, 4294901760
    %1069 = vmatpush1.msra.mxu0 %v1068
    %1070 = vmatprep.subr.mxu0 0.0
    %v1071 = vand.u32 %v1057, 4294901760
    %1072 = vmatpush1.msra.mxu0 %v1071
    %1073 = vmatprep.subr.mxu0 0.0
    %v1074 = vand.u32 %v1065, 4294901760
    %1075 = vmatpush1.msra.mxu0 %v1074
    %1076 = vmatprep.subr.mxu0 0.0
    %1077 = vmatpush1.msra.mxu0 0.0
    %1078 = vmatprep.subr.mxu0 0.0
    %1079 = vmatpush1.msra.mxu0 0.0
    %1080 = vmatprep.subr.mxu0 0.0
    %1081 = vmatpush1.msra.mxu0 0.0
    %1082 = vmatprep.subr.mxu0 0.0
    %1083 = vmatpush1.msra.mxu0 0.0
    %1084 = vmatprep.subr.mxu0 0.0
    %1085 = vmatpush1.msra.mxu0 0.0
    %1086 = vmatprep.subr.mxu0 0.0
    %1087 = vmatpush1.msra.mxu0 0.0
    %1088 = vmatprep.subr.mxu0 0.0
    %1089 = vmatpush1.msra.mxu0 0.0
    %1090 = vmatprep.subr.mxu0 0.0
    %1091 = vmatpush1.msra.mxu0 0.0
    %1092 = vmatprep.subr.mxu0 0.0
    %1093 = vmatpush1.msra.mxu0 0.0
    %1094 = vmatprep.subr.mxu0 0.0
    %1095 = vmatpush1.msra.mxu0 0.0
    %1096 = vmatprep.subr.mxu0 0.0
    %1097 = vmatpush1.msra.mxu0 0.0
    %1098 = vmatprep.subr.mxu0 0.0
    %1099 = vmatpush1.msra.mxu0 0.0
    %1100 = vmatprep.subr.mxu0 0.0
    %1101 = vmatpush1.msra.mxu0 0.0
    %1102 = vmatprep.subr.mxu0 0.0
    %1103 = vmatpush1.msra.mxu0 0.0
    %1104 = vmatprep.subr.mxu0 0.0
    %1105 = vmatpush1.msra.mxu0 0.0
    %1106 = vmatprep.subr.mxu0 0.0
    %1107 = vmatpush1.msra.mxu0 0.0
    %1108 = vmatprep.subr.mxu0 0.0
    %1109 = vmatpush1.msra.mxu0 0.0
    %1110 = vmatprep.subr.mxu0 0.0
    %1111 = vmatpush1.msra.mxu0 0.0
    %1112 = vmatprep.subr.mxu0 0.0
    %1113 = vmatpush1.msra.mxu0 0.0
    %1114 = vmatprep.subr.mxu0 0.0
    %1115 = vmatpush1.msra.mxu0 0.0
    %1116 = vmatprep.subr.mxu0 0.0
    %1117 = vmatpush1.msra.mxu0 0.0
    %1118 = vmatprep.subr.mxu0 0.0
    %1119 = vmatpush1.msra.mxu0 0.0
    %1120 = vmatprep.subr.mxu0 0.0
    %1121 = vmatpush1.msra.mxu0 0.0
    %1122 = vmatprep.subr.mxu0 0.0
    %1123 = vmatpush1.msra.mxu0 0.0
    %1124 = vmatprep.subr.mxu0 0.0
    %1125 = vmatpush1.msra.mxu0 0.0
    %1126 = vmatprep.subr.mxu0 0.0
    %1127 = vmatpush1.msra.mxu0 0.0
    %1128 = vmatprep.subr.mxu0 0.0
    %1129 = vmatpush1.msra.mxu0 0.0
    %1130 = vmatprep.subr.mxu0 0.0
    %1131 = vmatpush1.msra.mxu0 0.0
    %1132 = vmatprep.subr.mxu0 0.0
    %1133 = vmatpush1.msra.mxu0 0.0
    %1134 = vmatprep.mubr.f32.mxu0 0.0
    %v1135 = vand.u32 %v1061, 4294901760
    %v1136 = vsub.f32 %v1061, %v1135
    %v1137 = vand.u32 %v1136, 4294901760
    %v1138 = vsub.f32 %v1136, %v1137
    %v1139 = vand.u32 %v1138, 4294901760
    %1140 = vmatmul.mubr.f32.gmra.mrb[0].mxu0 %v1139
    %v1141 = vpop.f32.mrb[0].mxu0
    %v1142 = vadd.f32 0.0, %v1141
    %v1143 = vpop.f32.mrb[0].mxu0
    %1144 = vdwg.mxu0
    %1145 = vmatprep.subr.mxu0 0.0
    %v1146 = vand.u32 %v1056, 4294901760
    %v1147 = vsub.f32 %v1056, %v1146
    %v1148 = vand.u32 %v1147, 4294901760
    %v1149 = vsub.f32 %v1147, %v1148
    %v1150 = vand.u32 %v1149, 4294901760
    %1151 = vmatpush1.msra.mxu0 %v1150
    %1152 = vmatprep.subr.mxu0 0.0
    %v1153 = vand.u32 %v1057, 4294901760
    %v1154 = vsub.f32 %v1057, %v1153
    %v1155 = vand.u32 %v1154, 4294901760
    %v1156 = vsub.f32 %v1154, %v1155
    %v1157 = vand.u32 %v1156, 4294901760
    %1158 = vmatpush1.msra.mxu0 %v1157
    %1159 = vmatprep.subr.mxu0 0.0
    %v1160 = vand.u32 %v1065, 4294901760
    %v1161 = vsub.f32 %v1065, %v1160
    %v1162 = vand.u32 %v1161, 4294901760
    %v1163 = vsub.f32 %v1161, %v1162
    %v1164 = vand.u32 %v1163, 4294901760
    %1165 = vmatpush1.msra.mxu0 %v1164
    %1166 = vmatprep.subr.mxu0 0.0
    %1167 = vmatpush1.msra.mxu0 0.0
    %1168 = vmatprep.subr.mxu0 0.0
    %1169 = vmatpush1.msra.mxu0 0.0
    %1170 = vmatprep.subr.mxu0 0.0
    %1171 = vmatpush1.msra.mxu0 0.0
    %1172 = vmatprep.subr.mxu0 0.0
    %1173 = vmatpush1.msra.mxu0 0.0
    %1174 = vmatprep.subr.mxu0 0.0
    %1175 = vmatpush1.msra.mxu0 0.0
    %1176 = vmatprep.subr.mxu0 0.0
    %1177 = vmatpush1.msra.mxu0 0.0
    %1178 = vmatprep.subr.mxu0 0.0
    %1179 = vmatpush1.msra.mxu0 0.0
    %1180 = vmatprep.subr.mxu0 0.0
    %1181 = vmatpush1.msra.mxu0 0.0
    %1182 = vmatprep.subr.mxu0 0.0
    %1183 = vmatpush1.msra.mxu0 0.0
    %1184 = vmatprep.subr.mxu0 0.0
    %1185 = vmatpush1.msra.mxu0 0.0
    %1186 = vmatprep.subr.mxu0 0.0
    %1187 = vmatpush1.msra.mxu0 0.0
    %1188 = vmatprep.subr.mxu0 0.0
    %1189 = vmatpush1.msra.mxu0 0.0
    %1190 = vmatprep.subr.mxu0 0.0
    %1191 = vmatpush1.msra.mxu0 0.0
    %1192 = vmatprep.subr.mxu0 0.0
    %1193 = vmatpush1.msra.mxu0 0.0
    %1194 = vmatprep.subr.mxu0 0.0
    %1195 = vmatpush1.msra.mxu0 0.0
    %1196 = vmatprep.subr.mxu0 0.0
    %1197 = vmatpush1.msra.mxu0 0.0
    %1198 = vmatprep.subr.mxu0 0.0
    %1199 = vmatpush1.msra.mxu0 0.0
    %1200 = vmatprep.subr.mxu0 0.0
    %1201 = vmatpush1.msra.mxu0 0.0
    %1202 = vmatprep.subr.mxu0 0.0
    %1203 = vmatpush1.msra.mxu0 0.0
    %1204 = vmatprep.subr.mxu0 0.0
    %1205 = vmatpush1.msra.mxu0 0.0
    %1206 = vmatprep.subr.mxu0 0.0
    %1207 = vmatpush1.msra.mxu0 0.0
    %1208 = vmatprep.subr.mxu0 0.0
    %1209 = vmatpush1.msra.mxu0 0.0
    %1210 = vmatprep.subr.mxu0 0.0
    %1211 = vmatpush1.msra.mxu0 0.0
    %1212 = vmatprep.subr.mxu0 0.0
    %1213 = vmatpush1.msra.mxu0 0.0
    %1214 = vmatprep.subr.mxu0 0.0
    %1215 = vmatpush1.msra.mxu0 0.0
    %1216 = vmatprep.subr.mxu0 0.0
    %1217 = vmatpush1.msra.mxu0 0.0
    %1218 = vmatprep.subr.mxu0 0.0
    %1219 = vmatpush1.msra.mxu0 0.0
    %1220 = vmatprep.subr.mxu0 0.0
    %1221 = vmatpush1.msra.mxu0 0.0
    %1222 = vmatprep.subr.mxu0 0.0
    %1223 = vmatpush1.msra.mxu0 0.0
    %1224 = vmatprep.mubr.f32.mxu0 0.0
    %v1225 = vand.u32 %v1061, 4294901760
    %1226 = vmatmul.mubr.f32.gmra.mrb[0].mxu0 %v1225
    %v1227 = vpop.f32.mrb[0].mxu0
    %v1228 = vadd.f32 %v1142, %v1227
    %v1229 = vpop.f32.mrb[0].mxu0
    %1230 = vdwg.mxu0
    %1231 = vmatprep.subr.mxu0 0.0
    %v1232 = vand.u32 %v1056, 4294901760
    %v1233 = vsub.f32 %v1056, %v1232
    %1234 = vmatpush1.msra.mxu0 %v1233
    %1235 = vmatprep.subr.mxu0 0.0
    %v1236 = vand.u32 %v1057, 4294901760
    %v1237 = vsub.f32 %v1057, %v1236
    %1238 = vmatpush1.msra.mxu0 %v1237
    %1239 = vmatprep.subr.mxu0 0.0
    %v1240 = vand.u32 %v1065, 4294901760
    %v1241 = vsub.f32 %v1065, %v1240
    %1242 = vmatpush1.msra.mxu0 %v1241
    %1243 = vmatprep.subr.mxu0 0.0
    %1244 = vmatpush1.msra.mxu0 0.0
    %1245 = vmatprep.subr.mxu0 0.0
    %1246 = vmatpush1.msra.mxu0 0.0
    %1247 = vmatprep.subr.mxu0 0.0
    %1248 = vmatpush1.msra.mxu0 0.0
    %1249 = vmatprep.subr.mxu0 0.0
    %1250 = vmatpush1.msra.mxu0 0.0
    %1251 = vmatprep.subr.mxu0 0.0
    %1252 = vmatpush1.msra.mxu0 0.0
    %1253 = vmatprep.subr.mxu0 0.0
    %1254 = vmatpush1.msra.mxu0 0.0
    %1255 = vmatprep.subr.mxu0 0.0
    %1256 = vmatpush1.msra.mxu0 0.0
    %1257 = vmatprep.subr.mxu0 0.0
    %1258 = vmatpush1.msra.mxu0 0.0
    %1259 = vmatprep.subr.mxu0 0.0
    %1260 = vmatpush1.msra.mxu0 0.0
    %1261 = vmatprep.subr.mxu0 0.0
    %1262 = vmatpush1.msra.mxu0 0.0
    %1263 = vmatprep.subr.mxu0 0.0
    %1264 = vmatpush1.msra.mxu0 0.0
    %1265 = vmatprep.subr.mxu0 0.0
    %1266 = vmatpush1.msra.mxu0 0.0
    %1267 = vmatprep.subr.mxu0 0.0
    %1268 = vmatpush1.msra.mxu0 0.0
    %1269 = vmatprep.subr.mxu0 0.0
    %1270 = vmatpush1.msra.mxu0 0.0
    %1271 = vmatprep.subr.mxu0 0.0
    %1272 = vmatpush1.msra.mxu0 0.0
    %1273 = vmatprep.subr.mxu0 0.0
    %1274 = vmatpush1.msra.mxu0 0.0
    %1275 = vmatprep.subr.mxu0 0.0
    %1276 = vmatpush1.msra.mxu0 0.0
    %1277 = vmatprep.subr.mxu0 0.0
    %1278 = vmatpush1.msra.mxu0 0.0
    %1279 = vmatprep.subr.mxu0 0.0
    %1280 = vmatpush1.msra.mxu0 0.0
    %1281 = vmatprep.subr.mxu0 0.0
    %1282 = vmatpush1.msra.mxu0 0.0
    %1283 = vmatprep.subr.mxu0 0.0
    %1284 = vmatpush1.msra.mxu0 0.0
    %1285 = vmatprep.subr.mxu0 0.0
    %1286 = vmatpush1.msra.mxu0 0.0
    %1287 = vmatprep.subr.mxu0 0.0
    %1288 = vmatpush1.msra.mxu0 0.0
    %1289 = vmatprep.subr.mxu0 0.0
    %1290 = vmatpush1.msra.mxu0 0.0
    %1291 = vmatprep.subr.mxu0 0.0
    %1292 = vmatpush1.msra.mxu0 0.0
    %1293 = vmatprep.subr.mxu0 0.0
    %1294 = vmatpush1.msra.mxu0 0.0
    %1295 = vmatprep.subr.mxu0 0.0
    %1296 = vmatpush1.msra.mxu0 0.0
    %1297 = vmatprep.subr.mxu0 0.0
    %1298 = vmatpush1.msra.mxu0 0.0
    %1299 = vmatprep.subr.mxu0 0.0
    %1300 = vmatpush1.msra.mxu0 0.0
    %1301 = vmatprep.mubr.f32.mxu0 0.0
    %v1302 = vand.u32 %v1061, 4294901760
    %v1303 = vsub.f32 %v1061, %v1302
    %1304 = vmatmul.mubr.f32.gmra.mrb[0].mxu0 %v1303
    %v1305 = vpop.f32.mrb[0].mxu0
    %v1306 = vadd.f32 %v1228, %v1305
    %v1307 = vpop.f32.mrb[0].mxu0
    %1308 = vdwg.mxu0
    %1309 = vmatprep.subr.mxu0 0.0
    %v1310 = vand.u32 %v1056, 4294901760
    %1311 = vmatpush1.msra.mxu0 %v1310
    %1312 = vmatprep.subr.mxu0 0.0
    %v1313 = vand.u32 %v1057, 4294901760
    %1314 = vmatpush1.msra.mxu0 %v1313
    %1315 = vmatprep.subr.mxu0 0.0
    %v1316 = vand.u32 %v1065, 4294901760
    %1317 = vmatpush1.msra.mxu0 %v1316
    %1318 = vmatprep.subr.mxu0 0.0
    %1319 = vmatpush1.msra.mxu0 0.0
    %1320 = vmatprep.subr.mxu0 0.0
    %1321 = vmatpush1.msra.mxu0 0.0
    %1322 = vmatprep.subr.mxu0 0.0
    %1323 = vmatpush1.msra.mxu0 0.0
    %1324 = vmatprep.subr.mxu0 0.0
    %1325 = vmatpush1.msra.mxu0 0.0
    %1326 = vmatprep.subr.mxu0 0.0
    %1327 = vmatpush1.msra.mxu0 0.0
    %1328 = vmatprep.subr.mxu0 0.0
    %1329 = vmatpush1.msra.mxu0 0.0
    %1330 = vmatprep.subr.mxu0 0.0
    %1331 = vmatpush1.msra.mxu0 0.0
    %1332 = vmatprep.subr.mxu0 0.0
    %1333 = vmatpush1.msra.mxu0 0.0
    %1334 = vmatprep.subr.mxu0 0.0
    %1335 = vmatpush1.msra.mxu0 0.0
    %1336 = vmatprep.subr.mxu0 0.0
    %1337 = vmatpush1.msra.mxu0 0.0
    %1338 = vmatprep.subr.mxu0 0.0
    %1339 = vmatpush1.msra.mxu0 0.0
    %1340 = vmatprep.subr.mxu0 0.0
    %1341 = vmatpush1.msra.mxu0 0.0
    %1342 = vmatprep.subr.mxu0 0.0
    %1343 = vmatpush1.msra.mxu0 0.0
    %1344 = vmatprep.subr.mxu0 0.0
    %1345 = vmatpush1.msra.mxu0 0.0
    %1346 = vmatprep.subr.mxu0 0.0
    %1347 = vmatpush1.msra.mxu0 0.0
    %1348 = vmatprep.subr.mxu0 0.0
    %1349 = vmatpush1.msra.mxu0 0.0
    %1350 = vmatprep.subr.mxu0 0.0
    %1351 = vmatpush1.msra.mxu0 0.0
    %1352 = vmatprep.subr.mxu0 0.0
    %1353 = vmatpush1.msra.mxu0 0.0
    %1354 = vmatprep.subr.mxu0 0.0
    %1355 = vmatpush1.msra.mxu0 0.0
    %1356 = vmatprep.subr.mxu0 0.0
    %1357 = vmatpush1.msra.mxu0 0.0
    %1358 = vmatprep.subr.mxu0 0.0
    %1359 = vmatpush1.msra.mxu0 0.0
    %1360 = vmatprep.subr.mxu0 0.0
    %1361 = vmatpush1.msra.mxu0 0.0
    %1362 = vmatprep.subr.mxu0 0.0
    %1363 = vmatpush1.msra.mxu0 0.0
    %1364 = vmatprep.subr.mxu0 0.0
    %1365 = vmatpush1.msra.mxu0 0.0
    %1366 = vmatprep.subr.mxu0 0.0
    %1367 = vmatpush1.msra.mxu0 0.0
    %1368 = vmatprep.subr.mxu0 0.0
    %1369 = vmatpush1.msra.mxu0 0.0
    %1370 = vmatprep.subr.mxu0 0.0
    %1371 = vmatpush1.msra.mxu0 0.0
    %1372 = vmatprep.subr.mxu0 0.0
    %1373 = vmatpush1.msra.mxu0 0.0
    %1374 = vmatprep.subr.mxu0 0.0
    %1375 = vmatpush1.msra.mxu0 0.0
    %1376 = vmatprep.mubr.f32.mxu0 0.0
    %v1377 = vand.u32 %v1061, 4294901760
    %v1378 = vsub.f32 %v1061, %v1377
    %v1379 = vand.u32 %v1378, 4294901760
    %1380 = vmatmul.mubr.f32.gmra.mrb[0].mxu0 %v1379
    %v1381 = vpop.f32.mrb[0].mxu0
    %v1382 = vadd.f32 %v1306, %v1381
    %v1383 = vpop.f32.mrb[0].mxu0
    %1384 = vdwg.mxu0
    %1385 = vmatprep.subr.mxu0 0.0
    %v1386 = vand.u32 %v1056, 4294901760
    %v1387 = vsub.f32 %v1056, %v1386
    %v1388 = vand.u32 %v1387, 4294901760
    %1389 = vmatpush1.msra.mxu0 %v1388
    %1390 = vmatprep.subr.mxu0 0.0
    %v1391 = vand.u32 %v1057, 4294901760
    %v1392 = vsub.f32 %v1057, %v1391
    %v1393 = vand.u32 %v1392, 4294901760
    %1394 = vmatpush1.msra.mxu0 %v1393
    %1395 = vmatprep.subr.mxu0 0.0
    %v1396 = vand.u32 %v1065, 4294901760
    %v1397 = vsub.f32 %v1065, %v1396
    %v1398 = vand.u32 %v1397, 4294901760
    %1399 = vmatpush1.msra.mxu0 %v1398
    %1400 = vmatprep.subr.mxu0 0.0
    %1401 = vmatpush1.msra.mxu0 0.0
    %1402 = vmatprep.subr.mxu0 0.0
    %1403 = vmatpush1.msra.mxu0 0.0
    %1404 = vmatprep.subr.mxu0 0.0
    %1405 = vmatpush1.msra.mxu0 0.0
    %1406 = vmatprep.subr.mxu0 0.0
    %1407 = vmatpush1.msra.mxu0 0.0
    %1408 = vmatprep.subr.mxu0 0.0
    %1409 = vmatpush1.msra.mxu0 0.0
    %1410 = vmatprep.subr.mxu0 0.0
    %1411 = vmatpush1.msra.mxu0 0.0
    %1412 = vmatprep.subr.mxu0 0.0
    %1413 = vmatpush1.msra.mxu0 0.0
    %1414 = vmatprep.subr.mxu0 0.0
    %1415 = vmatpush1.msra.mxu0 0.0
    %1416 = vmatprep.subr.mxu0 0.0
    %1417 = vmatpush1.msra.mxu0 0.0
    %1418 = vmatprep.subr.mxu0 0.0
    %1419 = vmatpush1.msra.mxu0 0.0
    %1420 = vmatprep.subr.mxu0 0.0
    %1421 = vmatpush1.msra.mxu0 0.0
    %1422 = vmatprep.subr.mxu0 0.0
    %1423 = vmatpush1.msra.mxu0 0.0
    %1424 = vmatprep.subr.mxu0 0.0
    %1425 = vmatpush1.msra.mxu0 0.0
    %1426 = vmatprep.subr.mxu0 0.0
    %1427 = vmatpush1.msra.mxu0 0.0
    %1428 = vmatprep.subr.mxu0 0.0
    %1429 = vmatpush1.msra.mxu0 0.0
    %1430 = vmatprep.subr.mxu0 0.0
    %1431 = vmatpush1.msra.mxu0 0.0
    %1432 = vmatprep.subr.mxu0 0.0
    %1433 = vmatpush1.msra.mxu0 0.0
    %1434 = vmatprep.subr.mxu0 0.0
    %1435 = vmatpush1.msra.mxu0 0.0
    %1436 = vmatprep.subr.mxu0 0.0
    %1437 = vmatpush1.msra.mxu0 0.0
    %1438 = vmatprep.subr.mxu0 0.0
    %1439 = vmatpush1.msra.mxu0 0.0
    %1440 = vmatprep.subr.mxu0 0.0
    %1441 = vmatpush1.msra.mxu0 0.0
    %1442 = vmatprep.subr.mxu0 0.0
    %1443 = vmatpush1.msra.mxu0 0.0
    %1444 = vmatprep.subr.mxu0 0.0
    %1445 = vmatpush1.msra.mxu0 0.0
    %1446 = vmatprep.subr.mxu0 0.0
    %1447 = vmatpush1.msra.mxu0 0.0
    %1448 = vmatprep.subr.mxu0 0.0
    %1449 = vmatpush1.msra.mxu0 0.0
    %1450 = vmatprep.subr.mxu0 0.0
    %1451 = vmatpush1.msra.mxu0 0.0
    %1452 = vmatprep.subr.mxu0 0.0
    %1453 = vmatpush1.msra.mxu0 0.0
    %1454 = vmatprep.subr.mxu0 0.0
    %1455 = vmatpush1.msra.mxu0 0.0
    %1456 = vmatprep.subr.mxu0 0.0
    %1457 = vmatpush1.msra.mxu0 0.0
    %1458 = vmatprep.mubr.f32.mxu0 0.0
    %v1459 = vand.u32 %v1061, 4294901760
    %1460 = vmatmul.mubr.f32.gmra.mrb[0].mxu0 %v1459
    %v1461 = vpop.f32.mrb[0].mxu0
    %v1462 = vadd.f32 %v1382, %v1461
    %v1463 = vpop.f32.mrb[0].mxu0
    %1464 = vdwg.mxu0
    %1465 = vmatprep.subr.mxu0 0.0
    %v1466 = vand.u32 %v1056, 4294901760
    %1467 = vmatpush1.msra.mxu0 %v1466
    %1468 = vmatprep.subr.mxu0 0.0
    %v1469 = vand.u32 %v1057, 4294901760
    %1470 = vmatpush1.msra.mxu0 %v1469
    %1471 = vmatprep.subr.mxu0 0.0
    %v1472 = vand.u32 %v1065, 4294901760
    %1473 = vmatpush1.msra.mxu0 %v1472
    %1474 = vmatprep.subr.mxu0 0.0
    %1475 = vmatpush1.msra.mxu0 0.0
    %1476 = vmatprep.subr.mxu0 0.0
    %1477 = vmatpush1.msra.mxu0 0.0
    %1478 = vmatprep.subr.mxu0 0.0
    %1479 = vmatpush1.msra.mxu0 0.0
    %1480 = vmatprep.subr.mxu0 0.0
    %1481 = vmatpush1.msra.mxu0 0.0
    %1482 = vmatprep.subr.mxu0 0.0
    %1483 = vmatpush1.msra.mxu0 0.0
    %1484 = vmatprep.subr.mxu0 0.0
    %1485 = vmatpush1.msra.mxu0 0.0
    %1486 = vmatprep.subr.mxu0 0.0
    %1487 = vmatpush1.msra.mxu0 0.0
    %1488 = vmatprep.subr.mxu0 0.0
    %1489 = vmatpush1.msra.mxu0 0.0
    %1490 = vmatprep.subr.mxu0 0.0
    %1491 = vmatpush1.msra.mxu0 0.0
    %1492 = vmatprep.subr.mxu0 0.0
    %1493 = vmatpush1.msra.mxu0 0.0
    %1494 = vmatprep.subr.mxu0 0.0
    %1495 = vmatpush1.msra.mxu0 0.0
    %1496 = vmatprep.subr.mxu0 0.0
    %1497 = vmatpush1.msra.mxu0 0.0
    %1498 = vmatprep.subr.mxu0 0.0
    %1499 = vmatpush1.msra.mxu0 0.0
    %1500 = vmatprep.subr.mxu0 0.0
    %1501 = vmatpush1.msra.mxu0 0.0
    %1502 = vmatprep.subr.mxu0 0.0
    %1503 = vmatpush1.msra.mxu0 0.0
    %1504 = vmatprep.subr.mxu0 0.0
    %1505 = vmatpush1.msra.mxu0 0.0
    %1506 = vmatprep.subr.mxu0 0.0
    %1507 = vmatpush1.msra.mxu0 0.0
    %1508 = vmatprep.subr.mxu0 0.0
    %1509 = vmatpush1.msra.mxu0 0.0
    %1510 = vmatprep.subr.mxu0 0.0
    %1511 = vmatpush1.msra.mxu0 0.0
    %1512 = vmatprep.subr.mxu0 0.0
    %1513 = vmatpush1.msra.mxu0 0.0
    %1514 = vmatprep.subr.mxu0 0.0
    %1515 = vmatpush1.msra.mxu0 0.0
    %1516 = vmatprep.subr.mxu0 0.0
    %1517 = vmatpush1.msra.mxu0 0.0
    %1518 = vmatprep.subr.mxu0 0.0
    %1519 = vmatpush1.msra.mxu0 0.0
    %1520 = vmatprep.subr.mxu0 0.0
    %1521 = vmatpush1.msra.mxu0 0.0
    %1522 = vmatprep.subr.mxu0 0.0
    %1523 = vmatpush1.msra.mxu0 0.0
    %1524 = vmatprep.subr.mxu0 0.0
    %1525 = vmatpush1.msra.mxu0 0.0
    %1526 = vmatprep.subr.mxu0 0.0
    %1527 = vmatpush1.msra.mxu0 0.0
    %1528 = vmatprep.subr.mxu0 0.0
    %1529 = vmatpush1.msra.mxu0 0.0
    %1530 = vmatprep.subr.mxu0 0.0
    %1531 = vmatpush1.msra.mxu0 0.0
    %1532 = vmatprep.mubr.f32.mxu0 0.0
    %v1533 = vand.u32 %v1061, 4294901760
    %1534 = vmatmul.mubr.f32.gmra.mrb[0].mxu0 %v1533
    %v1535 = vpop.f32.mrb[0].mxu0
    %v1536 = vadd.f32 %v1462, %v1535
    %v1537 = vpop.f32.mrb[0].mxu0
    %1538 = vdwg.mxu0
    %1543 = vrot.lane.b32.xlu0 %v56, 64
    %v1544 = vpop.permute.xlu0 %1543
    %1545 = vrot.lane.b32.xlu0 %v57, 64
    %v1546 = vpop.permute.xlu0 %1545
    %1547 = vrot.lane.b32.xlu0 %v58, 64
    %v1548 = vpop.permute.xlu0 %1547
    %1549 = vrot.lane.b32.xlu0 %v59, 64
    %v1550 = vpop.permute.xlu0 %1549
    %1556 = vrot.lane.b32.xlu0 %v546, 108
    %v1557 = vpop.permute.xlu0 %1556
    %v1560 = vsel %vm60, %v1536, 0
    %1562 = vmatprep.subr.mxu0 0.0
    %v1563 = vand.u32 %v1544, 4294901760
    %1564 = vmatpush1.msra.mxu0 %v1563
    %1565 = vmatprep.subr.mxu0 0.0
    %v1566 = vand.u32 %v1546, 4294901760
    %1567 = vmatpush1.msra.mxu0 %v1566
    %1568 = vmatprep.subr.mxu0 0.0
    %v1569 = vand.u32 %v1548, 4294901760
    %1570 = vmatpush1.msra.mxu0 %v1569
    %1571 = vmatprep.subr.mxu0 0.0
    %v1572 = vand.u32 %v1550, 4294901760
    %1573 = vmatpush1.msra.mxu0 %v1572
    %1574 = vmatprep.subr.mxu0 0.0
    %1575 = vmatpush1.msra.mxu0 0.0
    %1576 = vmatprep.subr.mxu0 0.0
    %1577 = vmatpush1.msra.mxu0 0.0
    %1578 = vmatprep.subr.mxu0 0.0
    %1579 = vmatpush1.msra.mxu0 0.0
    %1580 = vmatprep.subr.mxu0 0.0
    %1581 = vmatpush1.msra.mxu0 0.0
    %1582 = vmatprep.subr.mxu0 0.0
    %1583 = vmatpush1.msra.mxu0 0.0
    %1584 = vmatprep.subr.mxu0 0.0
    %1585 = vmatpush1.msra.mxu0 0.0
    %1586 = vmatprep.subr.mxu0 0.0
    %1587 = vmatpush1.msra.mxu0 0.0
    %1588 = vmatprep.subr.mxu0 0.0
    %1589 = vmatpush1.msra.mxu0 0.0
    %1590 = vmatprep.subr.mxu0 0.0
    %1591 = vmatpush1.msra.mxu0 0.0
    %1592 = vmatprep.subr.mxu0 0.0
    %1593 = vmatpush1.msra.mxu0 0.0
    %1594 = vmatprep.subr.mxu0 0.0
    %1595 = vmatpush1.msra.mxu0 0.0
    %1596 = vmatprep.subr.mxu0 0.0
    %1597 = vmatpush1.msra.mxu0 0.0
    %1598 = vmatprep.subr.mxu0 0.0
    %1599 = vmatpush1.msra.mxu0 0.0
    %1600 = vmatprep.subr.mxu0 0.0
    %1601 = vmatpush1.msra.mxu0 0.0
    %1602 = vmatprep.subr.mxu0 0.0
    %1603 = vmatpush1.msra.mxu0 0.0
    %1604 = vmatprep.subr.mxu0 0.0
    %1605 = vmatpush1.msra.mxu0 0.0
    %1606 = vmatprep.subr.mxu0 0.0
    %1607 = vmatpush1.msra.mxu0 0.0
    %1608 = vmatprep.subr.mxu0 0.0
    %1609 = vmatpush1.msra.mxu0 0.0
    %1610 = vmatprep.subr.mxu0 0.0
    %1611 = vmatpush1.msra.mxu0 0.0
    %1612 = vmatprep.subr.mxu0 0.0
    %1613 = vmatpush1.msra.mxu0 0.0
    %1614 = vmatprep.subr.mxu0 0.0
    %1615 = vmatpush1.msra.mxu0 0.0
    %1616 = vmatprep.subr.mxu0 0.0
    %1617 = vmatpush1.msra.mxu0 0.0
    %1618 = vmatprep.subr.mxu0 0.0
    %1619 = vmatpush1.msra.mxu0 0.0
    %1620 = vmatprep.subr.mxu0 0.0
    %1621 = vmatpush1.msra.mxu0 0.0
    %1622 = vmatprep.subr.mxu0 0.0
    %1623 = vmatpush1.msra.mxu0 0.0
    %1624 = vmatprep.subr.mxu0 0.0
    %1625 = vmatpush1.msra.mxu0 0.0
    %1626 = vmatprep.subr.mxu0 0.0
    %1627 = vmatpush1.msra.mxu0 0.0
    %1628 = vmatprep.subr.mxu0 0.0
    %1629 = vmatpush1.msra.mxu0 0.0
    %1630 = vmatprep.mubr.f32.mxu0 0.0
    %v1631 = vand.u32 %v1560, 4294901760
    %v1632 = vsub.f32 %v1560, %v1631
    %v1633 = vand.u32 %v1632, 4294901760
    %v1634 = vsub.f32 %v1632, %v1633
    %v1635 = vand.u32 %v1634, 4294901760
    %1636 = vmatmul.mubr.f32.gmra.mrb[0].mxu0 %v1635
    %v1637 = vpop.f32.mrb[0].mxu0
    %v1638 = vadd.f32 %v1557, %v1637
    %v1639 = vpop.f32.mrb[0].mxu0
    %1640 = vdwg.mxu0
    %1641 = vmatprep.subr.mxu0 0.0
    %v1642 = vand.u32 %v1544, 4294901760
    %v1643 = vsub.f32 %v1544, %v1642
    %v1644 = vand.u32 %v1643, 4294901760
    %v1645 = vsub.f32 %v1643, %v1644
    %v1646 = vand.u32 %v1645, 4294901760
    %1647 = vmatpush1.msra.mxu0 %v1646
    %1648 = vmatprep.subr.mxu0 0.0
    %v1649 = vand.u32 %v1546, 4294901760
    %v1650 = vsub.f32 %v1546, %v1649
    %v1651 = vand.u32 %v1650, 4294901760
    %v1652 = vsub.f32 %v1650, %v1651
    %v1653 = vand.u32 %v1652, 4294901760
    %1654 = vmatpush1.msra.mxu0 %v1653
    %1655 = vmatprep.subr.mxu0 0.0
    %v1656 = vand.u32 %v1548, 4294901760
    %v1657 = vsub.f32 %v1548, %v1656
    %v1658 = vand.u32 %v1657, 4294901760
    %v1659 = vsub.f32 %v1657, %v1658
    %v1660 = vand.u32 %v1659, 4294901760
    %1661 = vmatpush1.msra.mxu0 %v1660
    %1662 = vmatprep.subr.mxu0 0.0
    %v1663 = vand.u32 %v1550, 4294901760
    %v1664 = vsub.f32 %v1550, %v1663
    %v1665 = vand.u32 %v1664, 4294901760
    %v1666 = vsub.f32 %v1664, %v1665
    %v1667 = vand.u32 %v1666, 4294901760
    %1668 = vmatpush1.msra.mxu0 %v1667
    %1669 = vmatprep.subr.mxu0 0.0
    %1670 = vmatpush1.msra.mxu0 0.0
    %1671 = vmatprep.subr.mxu0 0.0
    %1672 = vmatpush1.msra.mxu0 0.0
    %1673 = vmatprep.subr.mxu0 0.0
    %1674 = vmatpush1.msra.mxu0 0.0
    %1675 = vmatprep.subr.mxu0 0.0
    %1676 = vmatpush1.msra.mxu0 0.0
    %1677 = vmatprep.subr.mxu0 0.0
    %1678 = vmatpush1.msra.mxu0 0.0
    %1679 = vmatprep.subr.mxu0 0.0
    %1680 = vmatpush1.msra.mxu0 0.0
    %1681 = vmatprep.subr.mxu0 0.0
    %1682 = vmatpush1.msra.mxu0 0.0
    %1683 = vmatprep.subr.mxu0 0.0
    %1684 = vmatpush1.msra.mxu0 0.0
    %1685 = vmatprep.subr.mxu0 0.0
    %1686 = vmatpush1.msra.mxu0 0.0
    %1687 = vmatprep.subr.mxu0 0.0
    %1688 = vmatpush1.msra.mxu0 0.0
    %1689 = vmatprep.subr.mxu0 0.0
    %1690 = vmatpush1.msra.mxu0 0.0
    %1691 = vmatprep.subr.mxu0 0.0
    %1692 = vmatpush1.msra.mxu0 0.0
    %1693 = vmatprep.subr.mxu0 0.0
    %1694 = vmatpush1.msra.mxu0 0.0
    %1695 = vmatprep.subr.mxu0 0.0
    %1696 = vmatpush1.msra.mxu0 0.0
    %1697 = vmatprep.subr.mxu0 0.0
    %1698 = vmatpush1.msra.mxu0 0.0
    %1699 = vmatprep.subr.mxu0 0.0
    %1700 = vmatpush1.msra.mxu0 0.0
    %1701 = vmatprep.subr.mxu0 0.0
    %1702 = vmatpush1.msra.mxu0 0.0
    %1703 = vmatprep.subr.mxu0 0.0
    %1704 = vmatpush1.msra.mxu0 0.0
    %1705 = vmatprep.subr.mxu0 0.0
    %1706 = vmatpush1.msra.mxu0 0.0
    %1707 = vmatprep.subr.mxu0 0.0
    %1708 = vmatpush1.msra.mxu0 0.0
    %1709 = vmatprep.subr.mxu0 0.0
    %1710 = vmatpush1.msra.mxu0 0.0
    %1711 = vmatprep.subr.mxu0 0.0
    %1712 = vmatpush1.msra.mxu0 0.0
    %1713 = vmatprep.subr.mxu0 0.0
    %1714 = vmatpush1.msra.mxu0 0.0
    %1715 = vmatprep.subr.mxu0 0.0
    %1716 = vmatpush1.msra.mxu0 0.0
    %1717 = vmatprep.subr.mxu0 0.0
    %1718 = vmatpush1.msra.mxu0 0.0
    %1719 = vmatprep.subr.mxu0 0.0
    %1720 = vmatpush1.msra.mxu0 0.0
    %1721 = vmatprep.subr.mxu0 0.0
    %1722 = vmatpush1.msra.mxu0 0.0
    %1723 = vmatprep.subr.mxu0 0.0
    %1724 = vmatpush1.msra.mxu0 0.0
    %1725 = vmatprep.mubr.f32.mxu0 0.0
    %v1726 = vand.u32 %v1560, 4294901760
    %1727 = vmatmul.mubr.f32.gmra.mrb[0].mxu0 %v1726
    %v1728 = vpop.f32.mrb[0].mxu0
    %v1729 = vadd.f32 %v1638, %v1728
    %v1730 = vpop.f32.mrb[0].mxu0
    %1731 = vdwg.mxu0
    %1732 = vmatprep.subr.mxu0 0.0
    %v1733 = vand.u32 %v1544, 4294901760
    %v1734 = vsub.f32 %v1544, %v1733
    %1735 = vmatpush1.msra.mxu0 %v1734
    %1736 = vmatprep.subr.mxu0 0.0
    %v1737 = vand.u32 %v1546, 4294901760
    %v1738 = vsub.f32 %v1546, %v1737
    %1739 = vmatpush1.msra.mxu0 %v1738
    %1740 = vmatprep.subr.mxu0 0.0
    %v1741 = vand.u32 %v1548, 4294901760
    %v1742 = vsub.f32 %v1548, %v1741
    %1743 = vmatpush1.msra.mxu0 %v1742
    %1744 = vmatprep.subr.mxu0 0.0
    %v1745 = vand.u32 %v1550, 4294901760
    %v1746 = vsub.f32 %v1550, %v1745
    %1747 = vmatpush1.msra.mxu0 %v1746
    %1748 = vmatprep.subr.mxu0 0.0
    %1749 = vmatpush1.msra.mxu0 0.0
    %1750 = vmatprep.subr.mxu0 0.0
    %1751 = vmatpush1.msra.mxu0 0.0
    %1752 = vmatprep.subr.mxu0 0.0
    %1753 = vmatpush1.msra.mxu0 0.0
    %1754 = vmatprep.subr.mxu0 0.0
    %1755 = vmatpush1.msra.mxu0 0.0
    %1756 = vmatprep.subr.mxu0 0.0
    %1757 = vmatpush1.msra.mxu0 0.0
    %1758 = vmatprep.subr.mxu0 0.0
    %1759 = vmatpush1.msra.mxu0 0.0
    %1760 = vmatprep.subr.mxu0 0.0
    %1761 = vmatpush1.msra.mxu0 0.0
    %1762 = vmatprep.subr.mxu0 0.0
    %1763 = vmatpush1.msra.mxu0 0.0
    %1764 = vmatprep.subr.mxu0 0.0
    %1765 = vmatpush1.msra.mxu0 0.0
    %1766 = vmatprep.subr.mxu0 0.0
    %1767 = vmatpush1.msra.mxu0 0.0
    %1768 = vmatprep.subr.mxu0 0.0
    %1769 = vmatpush1.msra.mxu0 0.0
    %1770 = vmatprep.subr.mxu0 0.0
    %1771 = vmatpush1.msra.mxu0 0.0
    %1772 = vmatprep.subr.mxu0 0.0
    %1773 = vmatpush1.msra.mxu0 0.0
    %1774 = vmatprep.subr.mxu0 0.0
    %1775 = vmatpush1.msra.mxu0 0.0
    %1776 = vmatprep.subr.mxu0 0.0
    %1777 = vmatpush1.msra.mxu0 0.0
    %1778 = vmatprep.subr.mxu0 0.0
    %1779 = vmatpush1.msra.mxu0 0.0
    %1780 = vmatprep.subr.mxu0 0.0
    %1781 = vmatpush1.msra.mxu0 0.0
    %1782 = vmatprep.subr.mxu0 0.0
    %1783 = vmatpush1.msra.mxu0 0.0
    %1784 = vmatprep.subr.mxu0 0.0
    %1785 = vmatpush1.msra.mxu0 0.0
    %1786 = vmatprep.subr.mxu0 0.0
    %1787 = vmatpush1.msra.mxu0 0.0
    %1788 = vmatprep.subr.mxu0 0.0
    %1789 = vmatpush1.msra.mxu0 0.0
    %1790 = vmatprep.subr.mxu0 0.0
    %1791 = vmatpush1.msra.mxu0 0.0
    %1792 = vmatprep.subr.mxu0 0.0
    %1793 = vmatpush1.msra.mxu0 0.0
    %1794 = vmatprep.subr.mxu0 0.0
    %1795 = vmatpush1.msra.mxu0 0.0
    %1796 = vmatprep.subr.mxu0 0.0
    %1797 = vmatpush1.msra.mxu0 0.0
    %1798 = vmatprep.subr.mxu0 0.0
    %1799 = vmatpush1.msra.mxu0 0.0
    %1800 = vmatprep.subr.mxu0 0.0
    %1801 = vmatpush1.msra.mxu0 0.0
    %1802 = vmatprep.subr.mxu0 0.0
    %1803 = vmatpush1.msra.mxu0 0.0
    %1804 = vmatprep.mubr.f32.mxu0 0.0
    %v1805 = vand.u32 %v1560, 4294901760
    %v1806 = vsub.f32 %v1560, %v1805
    %1807 = vmatmul.mubr.f32.gmra.mrb[0].mxu0 %v1806
    %v1808 = vpop.f32.mrb[0].mxu0
    %v1809 = vadd.f32 %v1729, %v1808
    %v1810 = vpop.f32.mrb[0].mxu0
    %1811 = vdwg.mxu0
    %1812 = vmatprep.subr.mxu0 0.0
    %v1813 = vand.u32 %v1544, 4294901760
    %1814 = vmatpush1.msra.mxu0 %v1813
    %1815 = vmatprep.subr.mxu0 0.0
    %v1816 = vand.u32 %v1546, 4294901760
    %1817 = vmatpush1.msra.mxu0 %v1816
    %1818 = vmatprep.subr.mxu0 0.0
    %v1819 = vand.u32 %v1548, 4294901760
    %1820 = vmatpush1.msra.mxu0 %v1819
    %1821 = vmatprep.subr.mxu0 0.0
    %v1822 = vand.u32 %v1550, 4294901760
    %1823 = vmatpush1.msra.mxu0 %v1822
    %1824 = vmatprep.subr.mxu0 0.0
    %1825 = vmatpush1.msra.mxu0 0.0
    %1826 = vmatprep.subr.mxu0 0.0
    %1827 = vmatpush1.msra.mxu0 0.0
    %1828 = vmatprep.subr.mxu0 0.0
    %1829 = vmatpush1.msra.mxu0 0.0
    %1830 = vmatprep.subr.mxu0 0.0
    %1831 = vmatpush1.msra.mxu0 0.0
    %1832 = vmatprep.subr.mxu0 0.0
    %1833 = vmatpush1.msra.mxu0 0.0
    %1834 = vmatprep.subr.mxu0 0.0
    %1835 = vmatpush1.msra.mxu0 0.0
    %1836 = vmatprep.subr.mxu0 0.0
    %1837 = vmatpush1.msra.mxu0 0.0
    %1838 = vmatprep.subr.mxu0 0.0
    %1839 = vmatpush1.msra.mxu0 0.0
    %1840 = vmatprep.subr.mxu0 0.0
    %1841 = vmatpush1.msra.mxu0 0.0
    %1842 = vmatprep.subr.mxu0 0.0
    %1843 = vmatpush1.msra.mxu0 0.0
    %1844 = vmatprep.subr.mxu0 0.0
    %1845 = vmatpush1.msra.mxu0 0.0
    %1846 = vmatprep.subr.mxu0 0.0
    %1847 = vmatpush1.msra.mxu0 0.0
    %1848 = vmatprep.subr.mxu0 0.0
    %1849 = vmatpush1.msra.mxu0 0.0
    %1850 = vmatprep.subr.mxu0 0.0
    %1851 = vmatpush1.msra.mxu0 0.0
    %1852 = vmatprep.subr.mxu0 0.0
    %1853 = vmatpush1.msra.mxu0 0.0
    %1854 = vmatprep.subr.mxu0 0.0
    %1855 = vmatpush1.msra.mxu0 0.0
    %1856 = vmatprep.subr.mxu0 0.0
    %1857 = vmatpush1.msra.mxu0 0.0
    %1858 = vmatprep.subr.mxu0 0.0
    %1859 = vmatpush1.msra.mxu0 0.0
    %1860 = vmatprep.subr.mxu0 0.0
    %1861 = vmatpush1.msra.mxu0 0.0
    %1862 = vmatprep.subr.mxu0 0.0
    %1863 = vmatpush1.msra.mxu0 0.0
    %1864 = vmatprep.subr.mxu0 0.0
    %1865 = vmatpush1.msra.mxu0 0.0
    %1866 = vmatprep.subr.mxu0 0.0
    %1867 = vmatpush1.msra.mxu0 0.0
    %1868 = vmatprep.subr.mxu0 0.0
    %1869 = vmatpush1.msra.mxu0 0.0
    %1870 = vmatprep.subr.mxu0 0.0
    %1871 = vmatpush1.msra.mxu0 0.0
    %1872 = vmatprep.subr.mxu0 0.0
    %1873 = vmatpush1.msra.mxu0 0.0
    %1874 = vmatprep.subr.mxu0 0.0
    %1875 = vmatpush1.msra.mxu0 0.0
    %1876 = vmatprep.subr.mxu0 0.0
    %1877 = vmatpush1.msra.mxu0 0.0
    %1878 = vmatprep.subr.mxu0 0.0
    %1879 = vmatpush1.msra.mxu0 0.0
    %1880 = vmatprep.mubr.f32.mxu0 0.0
    %v1881 = vand.u32 %v1560, 4294901760
    %v1882 = vsub.f32 %v1560, %v1881
    %v1883 = vand.u32 %v1882, 4294901760
    %1884 = vmatmul.mubr.f32.gmra.mrb[0].mxu0 %v1883
    %v1885 = vpop.f32.mrb[0].mxu0
    %v1886 = vadd.f32 %v1809, %v1885
    %v1887 = vpop.f32.mrb[0].mxu0
    %1888 = vdwg.mxu0
    %1889 = vmatprep.subr.mxu0 0.0
    %v1890 = vand.u32 %v1544, 4294901760
    %v1891 = vsub.f32 %v1544, %v1890
    %v1892 = vand.u32 %v1891, 4294901760
    %1893 = vmatpush1.msra.mxu0 %v1892
    %1894 = vmatprep.subr.mxu0 0.0
    %v1895 = vand.u32 %v1546, 4294901760
    %v1896 = vsub.f32 %v1546, %v1895
    %v1897 = vand.u32 %v1896, 4294901760
    %1898 = vmatpush1.msra.mxu0 %v1897
    %1899 = vmatprep.subr.mxu0 0.0
    %v1900 = vand.u32 %v1548, 4294901760
    %v1901 = vsub.f32 %v1548, %v1900
    %v1902 = vand.u32 %v1901, 4294901760
    %1903 = vmatpush1.msra.mxu0 %v1902
    %1904 = vmatprep.subr.mxu0 0.0
    %v1905 = vand.u32 %v1550, 4294901760
    %v1906 = vsub.f32 %v1550, %v1905
    %v1907 = vand.u32 %v1906, 4294901760
    %1908 = vmatpush1.msra.mxu0 %v1907
    %1909 = vmatprep.subr.mxu0 0.0
    %1910 = vmatpush1.msra.mxu0 0.0
    %1911 = vmatprep.subr.mxu0 0.0
    %1912 = vmatpush1.msra.mxu0 0.0
    %1913 = vmatprep.subr.mxu0 0.0
    %1914 = vmatpush1.msra.mxu0 0.0
    %1915 = vmatprep.subr.mxu0 0.0
    %1916 = vmatpush1.msra.mxu0 0.0
    %1917 = vmatprep.subr.mxu0 0.0
    %1918 = vmatpush1.msra.mxu0 0.0
    %1919 = vmatprep.subr.mxu0 0.0
    %1920 = vmatpush1.msra.mxu0 0.0
    %1921 = vmatprep.subr.mxu0 0.0
    %1922 = vmatpush1.msra.mxu0 0.0
    %1923 = vmatprep.subr.mxu0 0.0
    %1924 = vmatpush1.msra.mxu0 0.0
    %1925 = vmatprep.subr.mxu0 0.0
    %1926 = vmatpush1.msra.mxu0 0.0
    %1927 = vmatprep.subr.mxu0 0.0
    %1928 = vmatpush1.msra.mxu0 0.0
    %1929 = vmatprep.subr.mxu0 0.0
    %1930 = vmatpush1.msra.mxu0 0.0
    %1931 = vmatprep.subr.mxu0 0.0
    %1932 = vmatpush1.msra.mxu0 0.0
    %1933 = vmatprep.subr.mxu0 0.0
    %1934 = vmatpush1.msra.mxu0 0.0
    %1935 = vmatprep.subr.mxu0 0.0
    %1936 = vmatpush1.msra.mxu0 0.0
    %1937 = vmatprep.subr.mxu0 0.0
    %1938 = vmatpush1.msra.mxu0 0.0
    %1939 = vmatprep.subr.mxu0 0.0
    %1940 = vmatpush1.msra.mxu0 0.0
    %1941 = vmatprep.subr.mxu0 0.0
    %1942 = vmatpush1.msra.mxu0 0.0
    %1943 = vmatprep.subr.mxu0 0.0
    %1944 = vmatpush1.msra.mxu0 0.0
    %1945 = vmatprep.subr.mxu0 0.0
    %1946 = vmatpush1.msra.mxu0 0.0
    %1947 = vmatprep.subr.mxu0 0.0
    %1948 = vmatpush1.msra.mxu0 0.0
    %1949 = vmatprep.subr.mxu0 0.0
    %1950 = vmatpush1.msra.mxu0 0.0
    %1951 = vmatprep.subr.mxu0 0.0
    %1952 = vmatpush1.msra.mxu0 0.0
    %1953 = vmatprep.subr.mxu0 0.0
    %1954 = vmatpush1.msra.mxu0 0.0
    %1955 = vmatprep.subr.mxu0 0.0
    %1956 = vmatpush1.msra.mxu0 0.0
    %1957 = vmatprep.subr.mxu0 0.0
    %1958 = vmatpush1.msra.mxu0 0.0
    %1959 = vmatprep.subr.mxu0 0.0
    %1960 = vmatpush1.msra.mxu0 0.0
    %1961 = vmatprep.subr.mxu0 0.0
    %1962 = vmatpush1.msra.mxu0 0.0
    %1963 = vmatprep.subr.mxu0 0.0
    %1964 = vmatpush1.msra.mxu0 0.0
    %1965 = vmatprep.mubr.f32.mxu0 0.0
    %v1966 = vand.u32 %v1560, 4294901760
    %1967 = vmatmul.mubr.f32.gmra.mrb[0].mxu0 %v1966
    %v1968 = vpop.f32.mrb[0].mxu0
    %v1969 = vadd.f32 %v1886, %v1968
    %v1970 = vpop.f32.mrb[0].mxu0
    %1971 = vdwg.mxu0
    %1972 = vmatprep.subr.mxu0 0.0
    %v1973 = vand.u32 %v1544, 4294901760
    %1974 = vmatpush1.msra.mxu0 %v1973
    %1975 = vmatprep.subr.mxu0 0.0
    %v1976 = vand.u32 %v1546, 4294901760
    %1977 = vmatpush1.msra.mxu0 %v1976
    %1978 = vmatprep.subr.mxu0 0.0
    %v1979 = vand.u32 %v1548, 4294901760
    %1980 = vmatpush1.msra.mxu0 %v1979
    %1981 = vmatprep.subr.mxu0 0.0
    %v1982 = vand.u32 %v1550, 4294901760
    %1983 = vmatpush1.msra.mxu0 %v1982
    %1984 = vmatprep.subr.mxu0 0.0
    %1985 = vmatpush1.msra.mxu0 0.0
    %1986 = vmatprep.subr.mxu0 0.0
    %1987 = vmatpush1.msra.mxu0 0.0
    %1988 = vmatprep.subr.mxu0 0.0
    %1989 = vmatpush1.msra.mxu0 0.0
    %1990 = vmatprep.subr.mxu0 0.0
    %1991 = vmatpush1.msra.mxu0 0.0
    %1992 = vmatprep.subr.mxu0 0.0
    %1993 = vmatpush1.msra.mxu0 0.0
    %1994 = vmatprep.subr.mxu0 0.0
    %1995 = vmatpush1.msra.mxu0 0.0
    %1996 = vmatprep.subr.mxu0 0.0
    %1997 = vmatpush1.msra.mxu0 0.0
    %1998 = vmatprep.subr.mxu0 0.0
    %1999 = vmatpush1.msra.mxu0 0.0
    %2000 = vmatprep.subr.mxu0 0.0
    %2001 = vmatpush1.msra.mxu0 0.0
    %2002 = vmatprep.subr.mxu0 0.0
    %2003 = vmatpush1.msra.mxu0 0.0
    %2004 = vmatprep.subr.mxu0 0.0
    %2005 = vmatpush1.msra.mxu0 0.0
    %2006 = vmatprep.subr.mxu0 0.0
    %2007 = vmatpush1.msra.mxu0 0.0
    %2008 = vmatprep.subr.mxu0 0.0
    %2009 = vmatpush1.msra.mxu0 0.0
    %2010 = vmatprep.subr.mxu0 0.0
    %2011 = vmatpush1.msra.mxu0 0.0
    %2012 = vmatprep.subr.mxu0 0.0
    %2013 = vmatpush1.msra.mxu0 0.0
    %2014 = vmatprep.subr.mxu0 0.0
    %2015 = vmatpush1.msra.mxu0 0.0
    %2016 = vmatprep.subr.mxu0 0.0
    %2017 = vmatpush1.msra.mxu0 0.0
    %2018 = vmatprep.subr.mxu0 0.0
    %2019 = vmatpush1.msra.mxu0 0.0
    %2020 = vmatprep.subr.mxu0 0.0
    %2021 = vmatpush1.msra.mxu0 0.0
    %2022 = vmatprep.subr.mxu0 0.0
    %2023 = vmatpush1.msra.mxu0 0.0
    %2024 = vmatprep.subr.mxu0 0.0
    %2025 = vmatpush1.msra.mxu0 0.0
    %2026 = vmatprep.subr.mxu0 0.0
    %2027 = vmatpush1.msra.mxu0 0.0
    %2028 = vmatprep.subr.mxu0 0.0
    %2029 = vmatpush1.msra.mxu0 0.0
    %2030 = vmatprep.subr.mxu0 0.0
    %2031 = vmatpush1.msra.mxu0 0.0
    %2032 = vmatprep.subr.mxu0 0.0
    %2033 = vmatpush1.msra.mxu0 0.0
    %2034 = vmatprep.subr.mxu0 0.0
    %2035 = vmatpush1.msra.mxu0 0.0
    %2036 = vmatprep.subr.mxu0 0.0
    %2037 = vmatpush1.msra.mxu0 0.0
    %2038 = vmatprep.subr.mxu0 0.0
    %2039 = vmatpush1.msra.mxu0 0.0
    %2040 = vmatprep.mubr.f32.mxu0 0.0
    %v2041 = vand.u32 %v1560, 4294901760
    %2042 = vmatmul.mubr.f32.gmra.mrb[0].mxu0 %v2041
    %v2043 = vpop.f32.mrb[0].mxu0
    %v2044 = vadd.f32 %v1969, %v2043
    %v2045 = vpop.f32.mrb[0].mxu0
    %2046 = vdwg.mxu0
    %v2047 = vld [vmem:[#allocation8 + $0x61] sm:$0x1]
    %v2048 = vadd.f32 %v2044, %v2047
    %v2049 = vmax.f32 %v2048, 0.0
    %v2050 = vld [vmem:[#allocation8] sm:$0xff]
    %v2051 = vld [vmem:[#allocation8 + $0x8] sm:$0xff]
    %v2052 = vld [vmem:[#allocation8 + $0x10] sm:$0xff]
    %v2053 = vld [vmem:[#allocation8 + $0x18] sm:$0xff]
    %v2054 = vld [vmem:[#allocation8 + $0x63] sm:$0x1]
    %2059 = vrot.lane.b32.xlu0 %v2050, 96
    %v2060 = vpop.permute.xlu0 %2059
    %2061 = vrot.lane.b32.xlu0 %v2051, 96
    %v2062 = vpop.permute.xlu0 %2061
    %2063 = vrot.lane.b32.xlu0 %v2052, 96
    %v2064 = vpop.permute.xlu0 %2063
    %2065 = vrot.lane.b32.xlu0 %v2053, 96
    %v2066 = vpop.permute.xlu0 %2065
    %v2072 = vsel %vm60, %v2049, 0
    %2074 = vmatprep.subr.mxu0 0.0
    %v2075 = vand.u32 %v2060, 4294901760
    %2076 = vmatpush1.msra.mxu0 %v2075
    %2077 = vmatprep.subr.mxu0 0.0
    %v2078 = vand.u32 %v2062, 4294901760
    %2079 = vmatpush1.msra.mxu0 %v2078
    %2080 = vmatprep.subr.mxu0 0.0
    %v2081 = vand.u32 %v2064, 4294901760
    %2082 = vmatpush1.msra.mxu0 %v2081
    %2083 = vmatprep.subr.mxu0 0.0
    %v2084 = vand.u32 %v2066, 4294901760
    %2085 = vmatpush1.msra.mxu0 %v2084
    %2086 = vmatprep.subr.mxu0 0.0
    %2087 = vmatpush1.msra.mxu0 0.0
    %2088 = vmatprep.subr.mxu0 0.0
    %2089 = vmatpush1.msra.mxu0 0.0
    %2090 = vmatprep.subr.mxu0 0.0
    %2091 = vmatpush1.msra.mxu0 0.0
    %2092 = vmatprep.subr.mxu0 0.0
    %2093 = vmatpush1.msra.mxu0 0.0
    %2094 = vmatprep.subr.mxu0 0.0
    %2095 = vmatpush1.msra.mxu0 0.0
    %2096 = vmatprep.subr.mxu0 0.0
    %2097 = vmatpush1.msra.mxu0 0.0
    %2098 = vmatprep.subr.mxu0 0.0
    %2099 = vmatpush1.msra.mxu0 0.0
    %2100 = vmatprep.subr.mxu0 0.0
    %2101 = vmatpush1.msra.mxu0 0.0
    %2102 = vmatprep.subr.mxu0 0.0
    %2103 = vmatpush1.msra.mxu0 0.0
    %2104 = vmatprep.subr.mxu0 0.0
    %2105 = vmatpush1.msra.mxu0 0.0
    %2106 = vmatprep.subr.mxu0 0.0
    %2107 = vmatpush1.msra.mxu0 0.0
    %2108 = vmatprep.subr.mxu0 0.0
    %2109 = vmatpush1.msra.mxu0 0.0
    %2110 = vmatprep.subr.mxu0 0.0
    %2111 = vmatpush1.msra.mxu0 0.0
    %2112 = vmatprep.subr.mxu0 0.0
    %2113 = vmatpush1.msra.mxu0 0.0
    %2114 = vmatprep.subr.mxu0 0.0
    %2115 = vmatpush1.msra.mxu0 0.0
    %2116 = vmatprep.subr.mxu0 0.0
    %2117 = vmatpush1.msra.mxu0 0.0
    %2118 = vmatprep.subr.mxu0 0.0
    %2119 = vmatpush1.msra.mxu0 0.0
    %2120 = vmatprep.subr.mxu0 0.0
    %2121 = vmatpush1.msra.mxu0 0.0
    %2122 = vmatprep.subr.mxu0 0.0
    %2123 = vmatpush1.msra.mxu0 0.0
    %2124 = vmatprep.subr.mxu0 0.0
    %2125 = vmatpush1.msra.mxu0 0.0
    %2126 = vmatprep.subr.mxu0 0.0
    %2127 = vmatpush1.msra.mxu0 0.0
    %2128 = vmatprep.subr.mxu0 0.0
    %2129 = vmatpush1.msra.mxu0 0.0
    %2130 = vmatprep.subr.mxu0 0.0
    %2131 = vmatpush1.msra.mxu0 0.0
    %2132 = vmatprep.subr.mxu0 0.0
    %2133 = vmatpush1.msra.mxu0 0.0
    %2134 = vmatprep.subr.mxu0 0.0
    %2135 = vmatpush1.msra.mxu0 0.0
    %2136 = vmatprep.subr.mxu0 0.0
    %2137 = vmatpush1.msra.mxu0 0.0
    %2138 = vmatprep.subr.mxu0 0.0
    %2139 = vmatpush1.msra.mxu0 0.0
    %2140 = vmatprep.subr.mxu0 0.0
    %2141 = vmatpush1.msra.mxu0 0.0
    %2142 = vmatprep.mubr.f32.mxu0 0.0
    %v2143 = vand.u32 %v2072, 4294901760
    %v2144 = vsub.f32 %v2072, %v2143
    %v2145 = vand.u32 %v2144, 4294901760
    %v2146 = vsub.f32 %v2144, %v2145
    %v2147 = vand.u32 %v2146, 4294901760
    %2148 = vmatmul.mubr.f32.gmra.mrb[0].mxu0 %v2147
    %v2149 = vpop.f32.mrb[0].mxu0
    %v2150 = vadd.f32 %v2054, %v2149
    %v2151 = vpop.f32.mrb[0].mxu0
    %2152 = vdwg.mxu0
    %2153 = vmatprep.subr.mxu0 0.0
    %v2154 = vand.u32 %v2060, 4294901760
    %v2155 = vsub.f32 %v2060, %v2154
    %v2156 = vand.u32 %v2155, 4294901760
    %v2157 = vsub.f32 %v2155, %v2156
    %v2158 = vand.u32 %v2157, 4294901760
    %2159 = vmatpush1.msra.mxu0 %v2158
    %2160 = vmatprep.subr.mxu0 0.0
    %v2161 = vand.u32 %v2062, 4294901760
    %v2162 = vsub.f32 %v2062, %v2161
    %v2163 = vand.u32 %v2162, 4294901760
    %v2164 = vsub.f32 %v2162, %v2163
    %v2165 = vand.u32 %v2164, 4294901760
    %2166 = vmatpush1.msra.mxu0 %v2165
    %2167 = vmatprep.subr.mxu0 0.0
    %v2168 = vand.u32 %v2064, 4294901760
    %v2169 = vsub.f32 %v2064, %v2168
    %v2170 = vand.u32 %v2169, 4294901760
    %v2171 = vsub.f32 %v2169, %v2170
    %v2172 = vand.u32 %v2171, 4294901760
    %2173 = vmatpush1.msra.mxu0 %v2172
    %2174 = vmatprep.subr.mxu0 0.0
    %v2175 = vand.u32 %v2066, 4294901760
    %v2176 = vsub.f32 %v2066, %v2175
    %v2177 = vand.u32 %v2176, 4294901760
    %v2178 = vsub.f32 %v2176, %v2177
    %v2179 = vand.u32 %v2178, 4294901760
    %2180 = vmatpush1.msra.mxu0 %v2179
    %2181 = vmatprep.subr.mxu0 0.0
    %2182 = vmatpush1.msra.mxu0 0.0
    %2183 = vmatprep.subr.mxu0 0.0
    %2184 = vmatpush1.msra.mxu0 0.0
    %2185 = vmatprep.subr.mxu0 0.0
    %2186 = vmatpush1.msra.mxu0 0.0
    %2187 = vmatprep.subr.mxu0 0.0
    %2188 = vmatpush1.msra.mxu0 0.0
    %2189 = vmatprep.subr.mxu0 0.0
    %2190 = vmatpush1.msra.mxu0 0.0
    %2191 = vmatprep.subr.mxu0 0.0
    %2192 = vmatpush1.msra.mxu0 0.0
    %2193 = vmatprep.subr.mxu0 0.0
    %2194 = vmatpush1.msra.mxu0 0.0
    %2195 = vmatprep.subr.mxu0 0.0
    %2196 = vmatpush1.msra.mxu0 0.0
    %2197 = vmatprep.subr.mxu0 0.0
    %2198 = vmatpush1.msra.mxu0 0.0
    %2199 = vmatprep.subr.mxu0 0.0
    %2200 = vmatpush1.msra.mxu0 0.0
    %2201 = vmatprep.subr.mxu0 0.0
    %2202 = vmatpush1.msra.mxu0 0.0
    %2203 = vmatprep.subr.mxu0 0.0
    %2204 = vmatpush1.msra.mxu0 0.0
    %2205 = vmatprep.subr.mxu0 0.0
    %2206 = vmatpush1.msra.mxu0 0.0
    %2207 = vmatprep.subr.mxu0 0.0
    %2208 = vmatpush1.msra.mxu0 0.0
    %2209 = vmatprep.subr.mxu0 0.0
    %2210 = vmatpush1.msra.mxu0 0.0
    %2211 = vmatprep.subr.mxu0 0.0
    %2212 = vmatpush1.msra.mxu0 0.0
    %2213 = vmatprep.subr.mxu0 0.0
    %2214 = vmatpush1.msra.mxu0 0.0
    %2215 = vmatprep.subr.mxu0 0.0
    %2216 = vmatpush1.msra.mxu0 0.0
    %2217 = vmatprep.subr.mxu0 0.0
    %2218 = vmatpush1.msra.mxu0 0.0
    %2219 = vmatprep.subr.mxu0 0.0
    %2220 = vmatpush1.msra.mxu0 0.0
    %2221 = vmatprep.subr.mxu0 0.0
    %2222 = vmatpush1.msra.mxu0 0.0
    %2223 = vmatprep.subr.mxu0 0.0
    %2224 = vmatpush1.msra.mxu0 0.0
    %2225 = vmatprep.subr.mxu0 0.0
    %2226 = vmatpush1.msra.mxu0 0.0
    %2227 = vmatprep.subr.mxu0 0.0
    %2228 = vmatpush1.msra.mxu0 0.0
    %2229 = vmatprep.subr.mxu0 0.0
    %2230 = vmatpush1.msra.mxu0 0.0
    %2231 = vmatprep.subr.mxu0 0.0
    %2232 = vmatpush1.msra.mxu0 0.0
    %2233 = vmatprep.subr.mxu0 0.0
    %2234 = vmatpush1.msra.mxu0 0.0
    %2235 = vmatprep.subr.mxu0 0.0
    %2236 = vmatpush1.msra.mxu0 0.0
    %2237 = vmatprep.mubr.f32.mxu0 0.0
    %v2238 = vand.u32 %v2072, 4294901760
    %2239 = vmatmul.mubr.f32.gmra.mrb[0].mxu0 %v2238
    %v2240 = vpop.f32.mrb[0].mxu0
    %v2241 = vadd.f32 %v2150, %v2240
    %v2242 = vpop.f32.mrb[0].mxu0
    %2243 = vdwg.mxu0
    %2244 = vmatprep.subr.mxu0 0.0
    %v2245 = vand.u32 %v2060, 4294901760
    %v2246 = vsub.f32 %v2060, %v2245
    %2247 = vmatpush1.msra.mxu0 %v2246
    %2248 = vmatprep.subr.mxu0 0.0
    %v2249 = vand.u32 %v2062, 4294901760
    %v2250 = vsub.f32 %v2062, %v2249
    %2251 = vmatpush1.msra.mxu0 %v2250
    %2252 = vmatprep.subr.mxu0 0.0
    %v2253 = vand.u32 %v2064, 4294901760
    %v2254 = vsub.f32 %v2064, %v2253
    %2255 = vmatpush1.msra.mxu0 %v2254
    %2256 = vmatprep.subr.mxu0 0.0
    %v2257 = vand.u32 %v2066, 4294901760
    %v2258 = vsub.f32 %v2066, %v2257
    %2259 = vmatpush1.msra.mxu0 %v2258
    %2260 = vmatprep.subr.mxu0 0.0
    %2261 = vmatpush1.msra.mxu0 0.0
    %2262 = vmatprep.subr.mxu0 0.0
    %2263 = vmatpush1.msra.mxu0 0.0
    %2264 = vmatprep.subr.mxu0 0.0
    %2265 = vmatpush1.msra.mxu0 0.0
    %2266 = vmatprep.subr.mxu0 0.0
    %2267 = vmatpush1.msra.mxu0 0.0
    %2268 = vmatprep.subr.mxu0 0.0
    %2269 = vmatpush1.msra.mxu0 0.0
    %2270 = vmatprep.subr.mxu0 0.0
    %2271 = vmatpush1.msra.mxu0 0.0
    %2272 = vmatprep.subr.mxu0 0.0
    %2273 = vmatpush1.msra.mxu0 0.0
    %2274 = vmatprep.subr.mxu0 0.0
    %2275 = vmatpush1.msra.mxu0 0.0
    %2276 = vmatprep.subr.mxu0 0.0
    %2277 = vmatpush1.msra.mxu0 0.0
    %2278 = vmatprep.subr.mxu0 0.0
    %2279 = vmatpush1.msra.mxu0 0.0
    %2280 = vmatprep.subr.mxu0 0.0
    %2281 = vmatpush1.msra.mxu0 0.0
    %2282 = vmatprep.subr.mxu0 0.0
    %2283 = vmatpush1.msra.mxu0 0.0
    %2284 = vmatprep.subr.mxu0 0.0
    %2285 = vmatpush1.msra.mxu0 0.0
    %2286 = vmatprep.subr.mxu0 0.0
    %2287 = vmatpush1.msra.mxu0 0.0
    %2288 = vmatprep.subr.mxu0 0.0
    %2289 = vmatpush1.msra.mxu0 0.0
    %2290 = vmatprep.subr.mxu0 0.0
    %2291 = vmatpush1.msra.mxu0 0.0
    %2292 = vmatprep.subr.mxu0 0.0
    %2293 = vmatpush1.msra.mxu0 0.0
    %2294 = vmatprep.subr.mxu0 0.0
    %2295 = vmatpush1.msra.mxu0 0.0
    %2296 = vmatprep.subr.mxu0 0.0
    %2297 = vmatpush1.msra.mxu0 0.0
    %2298 = vmatprep.subr.mxu0 0.0
    %2299 = vmatpush1.msra.mxu0 0.0
    %2300 = vmatprep.subr.mxu0 0.0
    %2301 = vmatpush1.msra.mxu0 0.0
    %2302 = vmatprep.subr.mxu0 0.0
    %2303 = vmatpush1.msra.mxu0 0.0
    %2304 = vmatprep.subr.mxu0 0.0
    %2305 = vmatpush1.msra.mxu0 0.0
    %2306 = vmatprep.subr.mxu0 0.0
    %2307 = vmatpush1.msra.mxu0 0.0
    %2308 = vmatprep.subr.mxu0 0.0
    %2309 = vmatpush1.msra.mxu0 0.0
    %2310 = vmatprep.subr.mxu0 0.0
    %2311 = vmatpush1.msra.mxu0 0.0
    %2312 = vmatprep.subr.mxu0 0.0
    %2313 = vmatpush1.msra.mxu0 0.0
    %2314 = vmatprep.subr.mxu0 0.0
    %2315 = vmatpush1.msra.mxu0 0.0
    %2316 = vmatprep.mubr.f32.mxu0 0.0
    %v2317 = vand.u32 %v2072, 4294901760
    %v2318 = vsub.f32 %v2072, %v2317
    %2319 = vmatmul.mubr.f32.gmra.mrb[0].mxu0 %v2318
    %v2320 = vpop.f32.mrb[0].mxu0
    %v2321 = vadd.f32 %v2241, %v2320
    %v2322 = vpop.f32.mrb[0].mxu0
    %2323 = vdwg.mxu0
    %2324 = vmatprep.subr.mxu0 0.0
    %v2325 = vand.u32 %v2060, 4294901760
    %2326 = vmatpush1.msra.mxu0 %v2325
    %2327 = vmatprep.subr.mxu0 0.0
    %v2328 = vand.u32 %v2062, 4294901760
    %2329 = vmatpush1.msra.mxu0 %v2328
    %2330 = vmatprep.subr.mxu0 0.0
    %v2331 = vand.u32 %v2064, 4294901760
    %2332 = vmatpush1.msra.mxu0 %v2331
    %2333 = vmatprep.subr.mxu0 0.0
    %v2334 = vand.u32 %v2066, 4294901760
    %2335 = vmatpush1.msra.mxu0 %v2334
    %2336 = vmatprep.subr.mxu0 0.0
    %2337 = vmatpush1.msra.mxu0 0.0
    %2338 = vmatprep.subr.mxu0 0.0
    %2339 = vmatpush1.msra.mxu0 0.0
    %2340 = vmatprep.subr.mxu0 0.0
    %2341 = vmatpush1.msra.mxu0 0.0
    %2342 = vmatprep.subr.mxu0 0.0
    %2343 = vmatpush1.msra.mxu0 0.0
    %2344 = vmatprep.subr.mxu0 0.0
    %2345 = vmatpush1.msra.mxu0 0.0
    %2346 = vmatprep.subr.mxu0 0.0
    %2347 = vmatpush1.msra.mxu0 0.0
    %2348 = vmatprep.subr.mxu0 0.0
    %2349 = vmatpush1.msra.mxu0 0.0
    %2350 = vmatprep.subr.mxu0 0.0
    %2351 = vmatpush1.msra.mxu0 0.0
    %2352 = vmatprep.subr.mxu0 0.0
    %2353 = vmatpush1.msra.mxu0 0.0
    %2354 = vmatprep.subr.mxu0 0.0
    %2355 = vmatpush1.msra.mxu0 0.0
    %2356 = vmatprep.subr.mxu0 0.0
    %2357 = vmatpush1.msra.mxu0 0.0
    %2358 = vmatprep.subr.mxu0 0.0
    %2359 = vmatpush1.msra.mxu0 0.0
    %2360 = vmatprep.subr.mxu0 0.0
    %2361 = vmatpush1.msra.mxu0 0.0
    %2362 = vmatprep.subr.mxu0 0.0
    %2363 = vmatpush1.msra.mxu0 0.0
    %2364 = vmatprep.subr.mxu0 0.0
    %2365 = vmatpush1.msra.mxu0 0.0
    %2366 = vmatprep.subr.mxu0 0.0
    %2367 = vmatpush1.msra.mxu0 0.0
    %2368 = vmatprep.subr.mxu0 0.0
    %2369 = vmatpush1.msra.mxu0 0.0
    %2370 = vmatprep.subr.mxu0 0.0
    %2371 = vmatpush1.msra.mxu0 0.0
    %2372 = vmatprep.subr.mxu0 0.0
    %2373 = vmatpush1.msra.mxu0 0.0
    %2374 = vmatprep.subr.mxu0 0.0
    %2375 = vmatpush1.msra.mxu0 0.0
    %2376 = vmatprep.subr.mxu0 0.0
    %2377 = vmatpush1.msra.mxu0 0.0
    %2378 = vmatprep.subr.mxu0 0.0
    %2379 = vmatpush1.msra.mxu0 0.0
    %2380 = vmatprep.subr.mxu0 0.0
    %2381 = vmatpush1.msra.mxu0 0.0
    %2382 = vmatprep.subr.mxu0 0.0
    %2383 = vmatpush1.msra.mxu0 0.0
    %2384 = vmatprep.subr.mxu0 0.0
    %2385 = vmatpush1.msra.mxu0 0.0
    %2386 = vmatprep.subr.mxu0 0.0
    %2387 = vmatpush1.msra.mxu0 0.0
    %2388 = vmatprep.subr.mxu0 0.0
    %2389 = vmatpush1.msra.mxu0 0.0
    %2390 = vmatprep.subr.mxu0 0.0
    %2391 = vmatpush1.msra.mxu0 0.0
    %2392 = vmatprep.mubr.f32.mxu0 0.0
    %v2393 = vand.u32 %v2072, 4294901760
    %v2394 = vsub.f32 %v2072, %v2393
    %v2395 = vand.u32 %v2394, 4294901760
    %2396 = vmatmul.mubr.f32.gmra.mrb[0].mxu0 %v2395
    %v2397 = vpop.f32.mrb[0].mxu0
    %v2398 = vadd.f32 %v2321, %v2397
    %v2399 = vpop.f32.mrb[0].mxu0
    %2400 = vdwg.mxu0
    %2401 = vmatprep.subr.mxu0 0.0
    %v2402 = vand.u32 %v2060, 4294901760
    %v2403 = vsub.f32 %v2060, %v2402
    %v2404 = vand.u32 %v2403, 4294901760
    %2405 = vmatpush1.msra.mxu0 %v2404
    %2406 = vmatprep.subr.mxu0 0.0
    %v2407 = vand.u32 %v2062, 4294901760
    %v2408 = vsub.f32 %v2062, %v2407
    %v2409 = vand.u32 %v2408, 4294901760
    %2410 = vmatpush1.msra.mxu0 %v2409
    %2411 = vmatprep.subr.mxu0 0.0
    %v2412 = vand.u32 %v2064, 4294901760
    %v2413 = vsub.f32 %v2064, %v2412
    %v2414 = vand.u32 %v2413, 4294901760
    %2415 = vmatpush1.msra.mxu0 %v2414
    %2416 = vmatprep.subr.mxu0 0.0
    %v2417 = vand.u32 %v2066, 4294901760
    %v2418 = vsub.f32 %v2066, %v2417
    %v2419 = vand.u32 %v2418, 4294901760
    %2420 = vmatpush1.msra.mxu0 %v2419
    %2421 = vmatprep.subr.mxu0 0.0
    %2422 = vmatpush1.msra.mxu0 0.0
    %2423 = vmatprep.subr.mxu0 0.0
    %2424 = vmatpush1.msra.mxu0 0.0
    %2425 = vmatprep.subr.mxu0 0.0
    %2426 = vmatpush1.msra.mxu0 0.0
    %2427 = vmatprep.subr.mxu0 0.0
    %2428 = vmatpush1.msra.mxu0 0.0
    %2429 = vmatprep.subr.mxu0 0.0
    %2430 = vmatpush1.msra.mxu0 0.0
    %2431 = vmatprep.subr.mxu0 0.0
    %2432 = vmatpush1.msra.mxu0 0.0
    %2433 = vmatprep.subr.mxu0 0.0
    %2434 = vmatpush1.msra.mxu0 0.0
    %2435 = vmatprep.subr.mxu0 0.0
    %2436 = vmatpush1.msra.mxu0 0.0
    %2437 = vmatprep.subr.mxu0 0.0
    %2438 = vmatpush1.msra.mxu0 0.0
    %2439 = vmatprep.subr.mxu0 0.0
    %2440 = vmatpush1.msra.mxu0 0.0
    %2441 = vmatprep.subr.mxu0 0.0
    %2442 = vmatpush1.msra.mxu0 0.0
    %2443 = vmatprep.subr.mxu0 0.0
    %2444 = vmatpush1.msra.mxu0 0.0
    %2445 = vmatprep.subr.mxu0 0.0
    %2446 = vmatpush1.msra.mxu0 0.0
    %2447 = vmatprep.subr.mxu0 0.0
    %2448 = vmatpush1.msra.mxu0 0.0
    %2449 = vmatprep.subr.mxu0 0.0
    %2450 = vmatpush1.msra.mxu0 0.0
    %2451 = vmatprep.subr.mxu0 0.0
    %2452 = vmatpush1.msra.mxu0 0.0
    %2453 = vmatprep.subr.mxu0 0.0
    %2454 = vmatpush1.msra.mxu0 0.0
    %2455 = vmatprep.subr.mxu0 0.0
    %2456 = vmatpush1.msra.mxu0 0.0
    %2457 = vmatprep.subr.mxu0 0.0
    %2458 = vmatpush1.msra.mxu0 0.0
    %2459 = vmatprep.subr.mxu0 0.0
    %2460 = vmatpush1.msra.mxu0 0.0
    %2461 = vmatprep.subr.mxu0 0.0
    %2462 = vmatpush1.msra.mxu0 0.0
    %2463 = vmatprep.subr.mxu0 0.0
    %2464 = vmatpush1.msra.mxu0 0.0
    %2465 = vmatprep.subr.mxu0 0.0
    %2466 = vmatpush1.msra.mxu0 0.0
    %2467 = vmatprep.subr.mxu0 0.0
    %2468 = vmatpush1.msra.mxu0 0.0
    %2469 = vmatprep.subr.mxu0 0.0
    %2470 = vmatpush1.msra.mxu0 0.0
    %2471 = vmatprep.subr.mxu0 0.0
    %2472 = vmatpush1.msra.mxu0 0.0
    %2473 = vmatprep.subr.mxu0 0.0
    %2474 = vmatpush1.msra.mxu0 0.0
    %2475 = vmatprep.subr.mxu0 0.0
    %2476 = vmatpush1.msra.mxu0 0.0
    %2477 = vmatprep.mubr.f32.mxu0 0.0
    %v2478 = vand.u32 %v2072, 4294901760
    %2479 = vmatmul.mubr.f32.gmra.mrb[0].mxu0 %v2478
    %v2480 = vpop.f32.mrb[0].mxu0
    %v2481 = vadd.f32 %v2398, %v2480
    %v2482 = vpop.f32.mrb[0].mxu0
    %2483 = vdwg.mxu0
    %2484 = vmatprep.subr.mxu0 0.0
    %v2485 = vand.u32 %v2060, 4294901760
    %2486 = vmatpush1.msra.mxu0 %v2485
    %2487 = vmatprep.subr.mxu0 0.0
    %v2488 = vand.u32 %v2062, 4294901760
    %2489 = vmatpush1.msra.mxu0 %v2488
    %2490 = vmatprep.subr.mxu0 0.0
    %v2491 = vand.u32 %v2064, 4294901760
    %2492 = vmatpush1.msra.mxu0 %v2491
    %2493 = vmatprep.subr.mxu0 0.0
    %v2494 = vand.u32 %v2066, 4294901760
    %2495 = vmatpush1.msra.mxu0 %v2494
    %2496 = vmatprep.subr.mxu0 0.0
    %2497 = vmatpush1.msra.mxu0 0.0
    %2498 = vmatprep.subr.mxu0 0.0
    %2499 = vmatpush1.msra.mxu0 0.0
    %2500 = vmatprep.subr.mxu0 0.0
    %2501 = vmatpush1.msra.mxu0 0.0
    %2502 = vmatprep.subr.mxu0 0.0
    %2503 = vmatpush1.msra.mxu0 0.0
    %2504 = vmatprep.subr.mxu0 0.0
    %2505 = vmatpush1.msra.mxu0 0.0
    %2506 = vmatprep.subr.mxu0 0.0
    %2507 = vmatpush1.msra.mxu0 0.0
    %2508 = vmatprep.subr.mxu0 0.0
    %2509 = vmatpush1.msra.mxu0 0.0
    %2510 = vmatprep.subr.mxu0 0.0
    %2511 = vmatpush1.msra.mxu0 0.0
    %2512 = vmatprep.subr.mxu0 0.0
    %2513 = vmatpush1.msra.mxu0 0.0
    %2514 = vmatprep.subr.mxu0 0.0
    %2515 = vmatpush1.msra.mxu0 0.0
    %2516 = vmatprep.subr.mxu0 0.0
    %2517 = vmatpush1.msra.mxu0 0.0
    %2518 = vmatprep.subr.mxu0 0.0
    %2519 = vmatpush1.msra.mxu0 0.0
    %2520 = vmatprep.subr.mxu0 0.0
    %2521 = vmatpush1.msra.mxu0 0.0
    %2522 = vmatprep.subr.mxu0 0.0
    %2523 = vmatpush1.msra.mxu0 0.0
    %2524 = vmatprep.subr.mxu0 0.0
    %2525 = vmatpush1.msra.mxu0 0.0
    %2526 = vmatprep.subr.mxu0 0.0
    %2527 = vmatpush1.msra.mxu0 0.0
    %2528 = vmatprep.subr.mxu0 0.0
    %2529 = vmatpush1.msra.mxu0 0.0
    %2530 = vmatprep.subr.mxu0 0.0
    %2531 = vmatpush1.msra.mxu0 0.0
    %2532 = vmatprep.subr.mxu0 0.0
    %2533 = vmatpush1.msra.mxu0 0.0
    %2534 = vmatprep.subr.mxu0 0.0
    %2535 = vmatpush1.msra.mxu0 0.0
    %2536 = vmatprep.subr.mxu0 0.0
    %2537 = vmatpush1.msra.mxu0 0.0
    %2538 = vmatprep.subr.mxu0 0.0
    %2539 = vmatpush1.msra.mxu0 0.0
    %2540 = vmatprep.subr.mxu0 0.0
    %2541 = vmatpush1.msra.mxu0 0.0
    %2542 = vmatprep.subr.mxu0 0.0
    %2543 = vmatpush1.msra.mxu0 0.0
    %2544 = vmatprep.subr.mxu0 0.0
    %2545 = vmatpush1.msra.mxu0 0.0
    %2546 = vmatprep.subr.mxu0 0.0
    %2547 = vmatpush1.msra.mxu0 0.0
    %2548 = vmatprep.subr.mxu0 0.0
    %2549 = vmatpush1.msra.mxu0 0.0
    %2550 = vmatprep.subr.mxu0 0.0
    %2551 = vmatpush1.msra.mxu0 0.0
    %2552 = vmatprep.mubr.f32.mxu0 0.0
    %v2553 = vand.u32 %v2072, 4294901760
    %2554 = vmatmul.mubr.f32.gmra.mrb[0].mxu0 %v2553
    %v2555 = vpop.f32.mrb[0].mxu0
    %v2556 = vadd.f32 %v2481, %v2555
    %v2557 = vpop.f32.mrb[0].mxu0
    %2558 = vdwg.mxu0
    %v2559 = vld [vmem:[#allocation8 + $0x64] sm:$0x1]
    %2561 = vrot.lane.b32.xlu0 %v2559, 20
    %v2562 = vpop.permute.xlu0 %2561
    %v2564 = vadd.f32 %v1038, %v2562
    %2566 = vrot.lane.b32.xlu0 %v2564, 108
    %v2567 = vpop.permute.xlu0 %2566
    %v2569 = vadd.f32 %v2556, %v2567
    %v2570 = vxor.u32 %v2569, 2147483648
    %v2571 = vmul.f32 %v2570, 1.442695
    %v2572 = vpow.pop %v2571
    %v2573 = vadd.f32 %v2572, 1.0
    %v2574 = vrcp.pop %v2573
    %v2575 = vmul.f32 1.0, %v2574
    %2576 = vrot.lane.b32.xlu0 %v2564, 44
    %v2577 = vpop.permute.xlu0 %2576
    %v2579 = vmul.f32 %v2575, %v2577
    %2581 = vrot.lane.b32.xlu0 %v2579, 64
    %v2582 = vpop.permute.xlu0 %2581
    %v2584 = vadd.f32 %v2556, %v2582
    %v2585 = vtanh.pop %v2584
    %v2586 = vsub.f32 1.0, %v2575
    %2588 = vrot.lane.b32.xlu0 %v2585, 96
    %v2589 = vpop.permute.xlu0 %2588
    %v2591 = vmul.f32 %v2586, %v2589
    %v2592 = vlaneseq
    %v2593 = vshrl.u32 %v2592, 7
    %v2594 = vsub.s32 0, %v2593
    %v2595 = vrot.slane %v55, %v2594
    %2596 = vrot.lane.b32.xlu0 %v2595, 32
    %v2597 = vpop.permute.xlu0 %2596
    %v2599 = vmul.f32 %v2575, %v2597
    %v2600 = vadd.f32 %v2591, %v2599
    %2602 = vrot.lane.b32.xlu0 %v2600, 96
    %v2603 = vpop.permute.xlu0 %2602
    %vm2605 = vcmask 253952
    %2606 = vst.msk [vmem:[#allocation2] sm:$0x1] %vm2605, %v2603
    %v2607 = vld [vmem:[#allocation8 + $0x40] sm:$0xff]
    %v2608 = vld [vmem:[#allocation8 + $0x48] sm:$0xff]
    %v2609 = vld [vmem:[#allocation8 + $0x50] sm:$0xff]
    %v2610 = vld [vmem:[#allocation8 + $0x58] sm:$0xff]
    %v2611 = vld [vmem:[#allocation8 + $0x62] sm:$0x1]
    %2616 = vrot.lane.b32.xlu0 %v2607, 32
    %v2617 = vpop.permute.xlu0 %2616
    %2618 = vrot.lane.b32.xlu0 %v2608, 32
    %v2619 = vpop.permute.xlu0 %2618
    %2620 = vrot.lane.b32.xlu0 %v2609, 32
    %v2621 = vpop.permute.xlu0 %2620
    %2622 = vrot.lane.b32.xlu0 %v2610, 32
    %v2623 = vpop.permute.xlu0 %2622
    %v2628 = vsel %vm60, %v2603, 0
    %2630 = vmatprep.subr.mxu0 0.0
    %v2631 = vand.u32 %v2617, 4294901760
    %2632 = vmatpush1.msra.mxu0 %v2631
    %2633 = vmatprep.subr.mxu0 0.0
    %v2634 = vand.u32 %v2619, 4294901760
    %2635 = vmatpush1.msra.mxu0 %v2634
    %2636 = vmatprep.subr.mxu0 0.0
    %v2637 = vand.u32 %v2621, 4294901760
    %2638 = vmatpush1.msra.mxu0 %v2637
    %2639 = vmatprep.subr.mxu0 0.0
    %v2640 = vand.u32 %v2623, 4294901760
    %2641 = vmatpush1.msra.mxu0 %v2640
    %2642 = vmatprep.subr.mxu0 0.0
    %2643 = vmatpush1.msra.mxu0 0.0
    %2644 = vmatprep.subr.mxu0 0.0
    %2645 = vmatpush1.msra.mxu0 0.0
    %2646 = vmatprep.subr.mxu0 0.0
    %2647 = vmatpush1.msra.mxu0 0.0
    %2648 = vmatprep.subr.mxu0 0.0
    %2649 = vmatpush1.msra.mxu0 0.0
    %2650 = vmatprep.subr.mxu0 0.0
    %2651 = vmatpush1.msra.mxu0 0.0
    %2652 = vmatprep.subr.mxu0 0.0
    %2653 = vmatpush1.msra.mxu0 0.0
    %2654 = vmatprep.subr.mxu0 0.0
    %2655 = vmatpush1.msra.mxu0 0.0
    %2656 = vmatprep.subr.mxu0 0.0
    %2657 = vmatpush1.msra.mxu0 0.0
    %2658 = vmatprep.subr.mxu0 0.0
    %2659 = vmatpush1.msra.mxu0 0.0
    %2660 = vmatprep.subr.mxu0 0.0
    %2661 = vmatpush1.msra.mxu0 0.0
    %2662 = vmatprep.subr.mxu0 0.0
    %2663 = vmatpush1.msra.mxu0 0.0
    %2664 = vmatprep.subr.mxu0 0.0
    %2665 = vmatpush1.msra.mxu0 0.0
    %2666 = vmatprep.subr.mxu0 0.0
    %2667 = vmatpush1.msra.mxu0 0.0
    %2668 = vmatprep.subr.mxu0 0.0
    %2669 = vmatpush1.msra.mxu0 0.0
    %2670 = vmatprep.subr.mxu0 0.0
    %2671 = vmatpush1.msra.mxu0 0.0
    %2672 = vmatprep.subr.mxu0 0.0
    %2673 = vmatpush1.msra.mxu0 0.0
    %2674 = vmatprep.subr.mxu0 0.0
    %2675 = vmatpush1.msra.mxu0 0.0
    %2676 = vmatprep.subr.mxu0 0.0
    %2677 = vmatpush1.msra.mxu0 0.0
    %2678 = vmatprep.subr.mxu0 0.0
    %2679 = vmatpush1.msra.mxu0 0.0
    %2680 = vmatprep.subr.mxu0 0.0
    %2681 = vmatpush1.msra.mxu0 0.0
    %2682 = vmatprep.subr.mxu0 0.0
    %2683 = vmatpush1.msra.mxu0 0.0
    %2684 = vmatprep.subr.mxu0 0.0
    %2685 = vmatpush1.msra.mxu0 0.0
    %2686 = vmatprep.subr.mxu0 0.0
    %2687 = vmatpush1.msra.mxu0 0.0
    %2688 = vmatprep.subr.mxu0 0.0
    %2689 = vmatpush1.msra.mxu0 0.0
    %2690 = vmatprep.subr.mxu0 0.0
    %2691 = vmatpush1.msra.mxu0 0.0
    %2692 = vmatprep.subr.mxu0 0.0
    %2693 = vmatpush1.msra.mxu0 0.0
    %2694 = vmatprep.subr.mxu0 0.0
    %2695 = vmatpush1.msra.mxu0 0.0
    %2696 = vmatprep.subr.mxu0 0.0
    %2697 = vmatpush1.msra.mxu0 0.0
    %2698 = vmatprep.mubr.f32.mxu0 0.0
    %v2699 = vand.u32 %v2628, 4294901760
    %v2700 = vsub.f32 %v2628, %v2699
    %v2701 = vand.u32 %v2700, 4294901760
    %v2702 = vsub.f32 %v2700, %v2701
    %v2703 = vand.u32 %v2702, 4294901760
    %2704 = vmatmul.mubr.f32.gmra.mrb[0].mxu0 %v2703
    %v2705 = vpop.f32.mrb[0].mxu0
    %v2706 = vadd.f32 %v2611, %v2705
    %v2707 = vpop.f32.mrb[0].mxu0
    %2708 = vdwg.mxu0
    %2709 = vmatprep.subr.mxu0 0.0
    %v2710 = vand.u32 %v2617, 4294901760
    %v2711 = vsub.f32 %v2617, %v2710
    %v2712 = vand.u32 %v2711, 4294901760
    %v2713 = vsub.f32 %v2711, %v2712
    %v2714 = vand.u32 %v2713, 4294901760
    %2715 = vmatpush1.msra.mxu0 %v2714
    %2716 = vmatprep.subr.mxu0 0.0
    %v2717 = vand.u32 %v2619, 4294901760
    %v2718 = vsub.f32 %v2619, %v2717
    %v2719 = vand.u32 %v2718, 4294901760
    %v2720 = vsub.f32 %v2718, %v2719
    %v2721 = vand.u32 %v2720, 4294901760
    %2722 = vmatpush1.msra.mxu0 %v2721
    %2723 = vmatprep.subr.mxu0 0.0
    %v2724 = vand.u32 %v2621, 4294901760
    %v2725 = vsub.f32 %v2621, %v2724
    %v2726 = vand.u32 %v2725, 4294901760
    %v2727 = vsub.f32 %v2725, %v2726
    %v2728 = vand.u32 %v2727, 4294901760
    %2729 = vmatpush1.msra.mxu0 %v2728
    %2730 = vmatprep.subr.mxu0 0.0
    %v2731 = vand.u32 %v2623, 4294901760
    %v2732 = vsub.f32 %v2623, %v2731
    %v2733 = vand.u32 %v2732, 4294901760
    %v2734 = vsub.f32 %v2732, %v2733
    %v2735 = vand.u32 %v2734, 4294901760
    %2736 = vmatpush1.msra.mxu0 %v2735
    %2737 = vmatprep.subr.mxu0 0.0
    %2738 = vmatpush1.msra.mxu0 0.0
    %2739 = vmatprep.subr.mxu0 0.0
    %2740 = vmatpush1.msra.mxu0 0.0
    %2741 = vmatprep.subr.mxu0 0.0
    %2742 = vmatpush1.msra.mxu0 0.0
    %2743 = vmatprep.subr.mxu0 0.0
    %2744 = vmatpush1.msra.mxu0 0.0
    %2745 = vmatprep.subr.mxu0 0.0
    %2746 = vmatpush1.msra.mxu0 0.0
    %2747 = vmatprep.subr.mxu0 0.0
    %2748 = vmatpush1.msra.mxu0 0.0
    %2749 = vmatprep.subr.mxu0 0.0
    %2750 = vmatpush1.msra.mxu0 0.0
    %2751 = vmatprep.subr.mxu0 0.0
    %2752 = vmatpush1.msra.mxu0 0.0
    %2753 = vmatprep.subr.mxu0 0.0
    %2754 = vmatpush1.msra.mxu0 0.0
    %2755 = vmatprep.subr.mxu0 0.0
    %2756 = vmatpush1.msra.mxu0 0.0
    %2757 = vmatprep.subr.mxu0 0.0
    %2758 = vmatpush1.msra.mxu0 0.0
    %2759 = vmatprep.subr.mxu0 0.0
    %2760 = vmatpush1.msra.mxu0 0.0
    %2761 = vmatprep.subr.mxu0 0.0
    %2762 = vmatpush1.msra.mxu0 0.0
    %2763 = vmatprep.subr.mxu0 0.0
    %2764 = vmatpush1.msra.mxu0 0.0
    %2765 = vmatprep.subr.mxu0 0.0
    %2766 = vmatpush1.msra.mxu0 0.0
    %2767 = vmatprep.subr.mxu0 0.0
    %2768 = vmatpush1.msra.mxu0 0.0
    %2769 = vmatprep.subr.mxu0 0.0
    %2770 = vmatpush1.msra.mxu0 0.0
    %2771 = vmatprep.subr.mxu0 0.0
    %2772 = vmatpush1.msra.mxu0 0.0
    %2773 = vmatprep.subr.mxu0 0.0
    %2774 = vmatpush1.msra.mxu0 0.0
    %2775 = vmatprep.subr.mxu0 0.0
    %2776 = vmatpush1.msra.mxu0 0.0
    %2777 = vmatprep.subr.mxu0 0.0
    %2778 = vmatpush1.msra.mxu0 0.0
    %2779 = vmatprep.subr.mxu0 0.0
    %2780 = vmatpush1.msra.mxu0 0.0
    %2781 = vmatprep.subr.mxu0 0.0
    %2782 = vmatpush1.msra.mxu0 0.0
    %2783 = vmatprep.subr.mxu0 0.0
    %2784 = vmatpush1.msra.mxu0 0.0
    %2785 = vmatprep.subr.mxu0 0.0
    %2786 = vmatpush1.msra.mxu0 0.0
    %2787 = vmatprep.subr.mxu0 0.0
    %2788 = vmatpush1.msra.mxu0 0.0
    %2789 = vmatprep.subr.mxu0 0.0
    %2790 = vmatpush1.msra.mxu0 0.0
    %2791 = vmatprep.subr.mxu0 0.0
    %2792 = vmatpush1.msra.mxu0 0.0
    %2793 = vmatprep.mubr.f32.mxu0 0.0
    %v2794 = vand.u32 %v2628, 4294901760
    %2795 = vmatmul.mubr.f32.gmra.mrb[0].mxu0 %v2794
    %v2796 = vpop.f32.mrb[0].mxu0
    %v2797 = vadd.f32 %v2706, %v2796
    %v2798 = vpop.f32.mrb[0].mxu0
    %2799 = vdwg.mxu0
    %2800 = vmatprep.subr.mxu0 0.0
    %v2801 = vand.u32 %v2617, 4294901760
    %v2802 = vsub.f32 %v2617, %v2801
    %2803 = vmatpush1.msra.mxu0 %v2802
    %2804 = vmatprep.subr.mxu0 0.0
    %v2805 = vand.u32 %v2619, 4294901760
    %v2806 = vsub.f32 %v2619, %v2805
    %2807 = vmatpush1.msra.mxu0 %v2806
    %2808 = vmatprep.subr.mxu0 0.0
    %v2809 = vand.u32 %v2621, 4294901760
    %v2810 = vsub.f32 %v2621, %v2809
    %2811 = vmatpush1.msra.mxu0 %v2810
    %2812 = vmatprep.subr.mxu0 0.0
    %v2813 = vand.u32 %v2623, 4294901760
    %v2814 = vsub.f32 %v2623, %v2813
    %2815 = vmatpush1.msra.mxu0 %v2814
    %2816 = vmatprep.subr.mxu0 0.0
    %2817 = vmatpush1.msra.mxu0 0.0
    %2818 = vmatprep.subr.mxu0 0.0
    %2819 = vmatpush1.msra.mxu0 0.0
    %2820 = vmatprep.subr.mxu0 0.0
    %2821 = vmatpush1.msra.mxu0 0.0
    %2822 = vmatprep.subr.mxu0 0.0
    %2823 = vmatpush1.msra.mxu0 0.0
    %2824 = vmatprep.subr.mxu0 0.0
    %2825 = vmatpush1.msra.mxu0 0.0
    %2826 = vmatprep.subr.mxu0 0.0
    %2827 = vmatpush1.msra.mxu0 0.0
    %2828 = vmatprep.subr.mxu0 0.0
    %2829 = vmatpush1.msra.mxu0 0.0
    %2830 = vmatprep.subr.mxu0 0.0
    %2831 = vmatpush1.msra.mxu0 0.0
    %2832 = vmatprep.subr.mxu0 0.0
    %2833 = vmatpush1.msra.mxu0 0.0
    %2834 = vmatprep.subr.mxu0 0.0
    %2835 = vmatpush1.msra.mxu0 0.0
    %2836 = vmatprep.subr.mxu0 0.0
    %2837 = vmatpush1.msra.mxu0 0.0
    %2838 = vmatprep.subr.mxu0 0.0
    %2839 = vmatpush1.msra.mxu0 0.0
    %2840 = vmatprep.subr.mxu0 0.0
    %2841 = vmatpush1.msra.mxu0 0.0
    %2842 = vmatprep.subr.mxu0 0.0
    %2843 = vmatpush1.msra.mxu0 0.0
    %2844 = vmatprep.subr.mxu0 0.0
    %2845 = vmatpush1.msra.mxu0 0.0
    %2846 = vmatprep.subr.mxu0 0.0
    %2847 = vmatpush1.msra.mxu0 0.0
    %2848 = vmatprep.subr.mxu0 0.0
    %2849 = vmatpush1.msra.mxu0 0.0
    %2850 = vmatprep.subr.mxu0 0.0
    %2851 = vmatpush1.msra.mxu0 0.0
    %2852 = vmatprep.subr.mxu0 0.0
    %2853 = vmatpush1.msra.mxu0 0.0
    %2854 = vmatprep.subr.mxu0 0.0
    %2855 = vmatpush1.msra.mxu0 0.0
    %2856 = vmatprep.subr.mxu0 0.0
    %2857 = vmatpush1.msra.mxu0 0.0
    %2858 = vmatprep.subr.mxu0 0.0
    %2859 = vmatpush1.msra.mxu0 0.0
    %2860 = vmatprep.subr.mxu0 0.0
    %2861 = vmatpush1.msra.mxu0 0.0
    %2862 = vmatprep.subr.mxu0 0.0
    %2863 = vmatpush1.msra.mxu0 0.0
    %2864 = vmatprep.subr.mxu0 0.0
    %2865 = vmatpush1.msra.mxu0 0.0
    %2866 = vmatprep.subr.mxu0 0.0
    %2867 = vmatpush1.msra.mxu0 0.0
    %2868 = vmatprep.subr.mxu0 0.0
    %2869 = vmatpush1.msra.mxu0 0.0
    %2870 = vmatprep.subr.mxu0 0.0
    %2871 = vmatpush1.msra.mxu0 0.0
    %2872 = vmatprep.mubr.f32.mxu0 0.0
    %v2873 = vand.u32 %v2628, 4294901760
    %v2874 = vsub.f32 %v2628, %v2873
    %2875 = vmatmul.mubr.f32.gmra.mrb[0].mxu0 %v2874
    %v2876 = vpop.f32.mrb[0].mxu0
    %v2877 = vadd.f32 %v2797, %v2876
    %v2878 = vpop.f32.mrb[0].mxu0
    %2879 = vdwg.mxu0
    %2880 = vmatprep.subr.mxu0 0.0
    %v2881 = vand.u32 %v2617, 4294901760
    %2882 = vmatpush1.msra.mxu0 %v2881
    %2883 = vmatprep.subr.mxu0 0.0
    %v2884 = vand.u32 %v2619, 4294901760
    %2885 = vmatpush1.msra.mxu0 %v2884
    %2886 = vmatprep.subr.mxu0 0.0
    %v2887 = vand.u32 %v2621, 4294901760
    %2888 = vmatpush1.msra.mxu0 %v2887
    %2889 = vmatprep.subr.mxu0 0.0
    %v2890 = vand.u32 %v2623, 4294901760
    %2891 = vmatpush1.msra.mxu0 %v2890
    %2892 = vmatprep.subr.mxu0 0.0
    %2893 = vmatpush1.msra.mxu0 0.0
    %2894 = vmatprep.subr.mxu0 0.0
    %2895 = vmatpush1.msra.mxu0 0.0
    %2896 = vmatprep.subr.mxu0 0.0
    %2897 = vmatpush1.msra.mxu0 0.0
    %2898 = vmatprep.subr.mxu0 0.0
    %2899 = vmatpush1.msra.mxu0 0.0
    %2900 = vmatprep.subr.mxu0 0.0
    %2901 = vmatpush1.msra.mxu0 0.0
    %2902 = vmatprep.subr.mxu0 0.0
    %2903 = vmatpush1.msra.mxu0 0.0
    %2904 = vmatprep.subr.mxu0 0.0
    %2905 = vmatpush1.msra.mxu0 0.0
    %2906 = vmatprep.subr.mxu0 0.0
    %2907 = vmatpush1.msra.mxu0 0.0
    %2908 = vmatprep.subr.mxu0 0.0
    %2909 = vmatpush1.msra.mxu0 0.0
    %2910 = vmatprep.subr.mxu0 0.0
    %2911 = vmatpush1.msra.mxu0 0.0
    %2912 = vmatprep.subr.mxu0 0.0
    %2913 = vmatpush1.msra.mxu0 0.0
    %2914 = vmatprep.subr.mxu0 0.0
    %2915 = vmatpush1.msra.mxu0 0.0
    %2916 = vmatprep.subr.mxu0 0.0
    %2917 = vmatpush1.msra.mxu0 0.0
    %2918 = vmatprep.subr.mxu0 0.0
    %2919 = vmatpush1.msra.mxu0 0.0
    %2920 = vmatprep.subr.mxu0 0.0
    %2921 = vmatpush1.msra.mxu0 0.0
    %2922 = vmatprep.subr.mxu0 0.0
    %2923 = vmatpush1.msra.mxu0 0.0
    %2924 = vmatprep.subr.mxu0 0.0
    %2925 = vmatpush1.msra.mxu0 0.0
    %2926 = vmatprep.subr.mxu0 0.0
    %2927 = vmatpush1.msra.mxu0 0.0
    %2928 = vmatprep.subr.mxu0 0.0
    %2929 = vmatpush1.msra.mxu0 0.0
    %2930 = vmatprep.subr.mxu0 0.0
    %2931 = vmatpush1.msra.mxu0 0.0
    %2932 = vmatprep.subr.mxu0 0.0
    %2933 = vmatpush1.msra.mxu0 0.0
    %2934 = vmatprep.subr.mxu0 0.0
    %2935 = vmatpush1.msra.mxu0 0.0
    %2936 = vmatprep.subr.mxu0 0.0
    %2937 = vmatpush1.msra.mxu0 0.0
    %2938 = vmatprep.subr.mxu0 0.0
    %2939 = vmatpush1.msra.mxu0 0.0
    %2940 = vmatprep.subr.mxu0 0.0
    %2941 = vmatpush1.msra.mxu0 0.0
    %2942 = vmatprep.subr.mxu0 0.0
    %2943 = vmatpush1.msra.mxu0 0.0
    %2944 = vmatprep.subr.mxu0 0.0
    %2945 = vmatpush1.msra.mxu0 0.0
    %2946 = vmatprep.subr.mxu0 0.0
    %2947 = vmatpush1.msra.mxu0 0.0
    %2948 = vmatprep.mubr.f32.mxu0 0.0
    %v2949 = vand.u32 %v2628, 4294901760
    %v2950 = vsub.f32 %v2628, %v2949
    %v2951 = vand.u32 %v2950, 4294901760
    %2952 = vmatmul.mubr.f32.gmra.mrb[0].mxu0 %v2951
    %v2953 = vpop.f32.mrb[0].mxu0
    %v2954 = vadd.f32 %v2877, %v2953
    %v2955 = vpop.f32.mrb[0].mxu0
    %2956 = vdwg.mxu0
    %2957 = vmatprep.subr.mxu0 0.0
    %v2958 = vand.u32 %v2617, 4294901760
    %v2959 = vsub.f32 %v2617, %v2958
    %v2960 = vand.u32 %v2959, 4294901760
    %2961 = vmatpush1.msra.mxu0 %v2960
    %2962 = vmatprep.subr.mxu0 0.0
    %v2963 = vand.u32 %v2619, 4294901760
    %v2964 = vsub.f32 %v2619, %v2963
    %v2965 = vand.u32 %v2964, 4294901760
    %2966 = vmatpush1.msra.mxu0 %v2965
    %2967 = vmatprep.subr.mxu0 0.0
    %v2968 = vand.u32 %v2621, 4294901760
    %v2969 = vsub.f32 %v2621, %v2968
    %v2970 = vand.u32 %v2969, 4294901760
    %2971 = vmatpush1.msra.mxu0 %v2970
    %2972 = vmatprep.subr.mxu0 0.0
    %v2973 = vand.u32 %v2623, 4294901760
    %v2974 = vsub.f32 %v2623, %v2973
    %v2975 = vand.u32 %v2974, 4294901760
    %2976 = vmatpush1.msra.mxu0 %v2975
    %2977 = vmatprep.subr.mxu0 0.0
    %2978 = vmatpush1.msra.mxu0 0.0
    %2979 = vmatprep.subr.mxu0 0.0
    %2980 = vmatpush1.msra.mxu0 0.0
    %2981 = vmatprep.subr.mxu0 0.0
    %2982 = vmatpush1.msra.mxu0 0.0
    %2983 = vmatprep.subr.mxu0 0.0
    %2984 = vmatpush1.msra.mxu0 0.0
    %2985 = vmatprep.subr.mxu0 0.0
    %2986 = vmatpush1.msra.mxu0 0.0
    %2987 = vmatprep.subr.mxu0 0.0
    %2988 = vmatpush1.msra.mxu0 0.0
    %2989 = vmatprep.subr.mxu0 0.0
    %2990 = vmatpush1.msra.mxu0 0.0
    %2991 = vmatprep.subr.mxu0 0.0
    %2992 = vmatpush1.msra.mxu0 0.0
    %2993 = vmatprep.subr.mxu0 0.0
    %2994 = vmatpush1.msra.mxu0 0.0
    %2995 = vmatprep.subr.mxu0 0.0
    %2996 = vmatpush1.msra.mxu0 0.0
    %2997 = vmatprep.subr.mxu0 0.0
    %2998 = vmatpush1.msra.mxu0 0.0
    %2999 = vmatprep.subr.mxu0 0.0
    %3000 = vmatpush1.msra.mxu0 0.0
    %3001 = vmatprep.subr.mxu0 0.0
    %3002 = vmatpush1.msra.mxu0 0.0
    %3003 = vmatprep.subr.mxu0 0.0
    %3004 = vmatpush1.msra.mxu0 0.0
    %3005 = vmatprep.subr.mxu0 0.0
    %3006 = vmatpush1.msra.mxu0 0.0
    %3007 = vmatprep.subr.mxu0 0.0
    %3008 = vmatpush1.msra.mxu0 0.0
    %3009 = vmatprep.subr.mxu0 0.0
    %3010 = vmatpush1.msra.mxu0 0.0
    %3011 = vmatprep.subr.mxu0 0.0
    %3012 = vmatpush1.msra.mxu0 0.0
    %3013 = vmatprep.subr.mxu0 0.0
    %3014 = vmatpush1.msra.mxu0 0.0
    %3015 = vmatprep.subr.mxu0 0.0
    %3016 = vmatpush1.msra.mxu0 0.0
    %3017 = vmatprep.subr.mxu0 0.0
    %3018 = vmatpush1.msra.mxu0 0.0
    %3019 = vmatprep.subr.mxu0 0.0
    %3020 = vmatpush1.msra.mxu0 0.0
    %3021 = vmatprep.subr.mxu0 0.0
    %3022 = vmatpush1.msra.mxu0 0.0
    %3023 = vmatprep.subr.mxu0 0.0
    %3024 = vmatpush1.msra.mxu0 0.0
    %3025 = vmatprep.subr.mxu0 0.0
    %3026 = vmatpush1.msra.mxu0 0.0
    %3027 = vmatprep.subr.mxu0 0.0
    %3028 = vmatpush1.msra.mxu0 0.0
    %3029 = vmatprep.subr.mxu0 0.0
    %3030 = vmatpush1.msra.mxu0 0.0
    %3031 = vmatprep.subr.mxu0 0.0
    %3032 = vmatpush1.msra.mxu0 0.0
    %3033 = vmatprep.mubr.f32.mxu0 0.0
    %v3034 = vand.u32 %v2628, 4294901760
    %3035 = vmatmul.mubr.f32.gmra.mrb[0].mxu0 %v3034
    %v3036 = vpop.f32.mrb[0].mxu0
    %v3037 = vadd.f32 %v2954, %v3036
    %v3038 = vpop.f32.mrb[0].mxu0
    %3039 = vdwg.mxu0
    %3040 = vmatprep.subr.mxu0 0.0
    %v3041 = vand.u32 %v2617, 4294901760
    %3042 = vmatpush1.msra.mxu0 %v3041
    %3043 = vmatprep.subr.mxu0 0.0
    %v3044 = vand.u32 %v2619, 4294901760
    %3045 = vmatpush1.msra.mxu0 %v3044
    %3046 = vmatprep.subr.mxu0 0.0
    %v3047 = vand.u32 %v2621, 4294901760
    %3048 = vmatpush1.msra.mxu0 %v3047
    %3049 = vmatprep.subr.mxu0 0.0
    %v3050 = vand.u32 %v2623, 4294901760
    %3051 = vmatpush1.msra.mxu0 %v3050
    %3052 = vmatprep.subr.mxu0 0.0
    %3053 = vmatpush1.msra.mxu0 0.0
    %3054 = vmatprep.subr.mxu0 0.0
    %3055 = vmatpush1.msra.mxu0 0.0
    %3056 = vmatprep.subr.mxu0 0.0
    %3057 = vmatpush1.msra.mxu0 0.0
    %3058 = vmatprep.subr.mxu0 0.0
    %3059 = vmatpush1.msra.mxu0 0.0
    %3060 = vmatprep.subr.mxu0 0.0
    %3061 = vmatpush1.msra.mxu0 0.0
    %3062 = vmatprep.subr.mxu0 0.0
    %3063 = vmatpush1.msra.mxu0 0.0
    %3064 = vmatprep.subr.mxu0 0.0
    %3065 = vmatpush1.msra.mxu0 0.0
    %3066 = vmatprep.subr.mxu0 0.0
    %3067 = vmatpush1.msra.mxu0 0.0
    %3068 = vmatprep.subr.mxu0 0.0
    %3069 = vmatpush1.msra.mxu0 0.0
    %3070 = vmatprep.subr.mxu0 0.0
    %3071 = vmatpush1.msra.mxu0 0.0
    %3072 = vmatprep.subr.mxu0 0.0
    %3073 = vmatpush1.msra.mxu0 0.0
    %3074 = vmatprep.subr.mxu0 0.0
    %3075 = vmatpush1.msra.mxu0 0.0
    %3076 = vmatprep.subr.mxu0 0.0
    %3077 = vmatpush1.msra.mxu0 0.0
    %3078 = vmatprep.subr.mxu0 0.0
    %3079 = vmatpush1.msra.mxu0 0.0
    %3080 = vmatprep.subr.mxu0 0.0
    %3081 = vmatpush1.msra.mxu0 0.0
    %3082 = vmatprep.subr.mxu0 0.0
    %3083 = vmatpush1.msra.mxu0 0.0
    %3084 = vmatprep.subr.mxu0 0.0
    %3085 = vmatpush1.msra.mxu0 0.0
    %3086 = vmatprep.subr.mxu0 0.0
    %3087 = vmatpush1.msra.mxu0 0.0
    %3088 = vmatprep.subr.mxu0 0.0
    %3089 = vmatpush1.msra.mxu0 0.0
    %3090 = vmatprep.subr.mxu0 0.0
    %3091 = vmatpush1.msra.mxu0 0.0
    %3092 = vmatprep.subr.mxu0 0.0
    %3093 = vmatpush1.msra.mxu0 0.0
    %3094 = vmatprep.subr.mxu0 0.0
    %3095 = vmatpush1.msra.mxu0 0.0
    %3096 = vmatprep.subr.mxu0 0.0
    %3097 = vmatpush1.msra.mxu0 0.0
    %3098 = vmatprep.subr.mxu0 0.0
    %3099 = vmatpush1.msra.mxu0 0.0
    %3100 = vmatprep.subr.mxu0 0.0
    %3101 = vmatpush1.msra.mxu0 0.0
    %3102 = vmatprep.subr.mxu0 0.0
    %3103 = vmatpush1.msra.mxu0 0.0
    %3104 = vmatprep.subr.mxu0 0.0
    %3105 = vmatpush1.msra.mxu0 0.0
    %3106 = vmatprep.subr.mxu0 0.0
    %3107 = vmatpush1.msra.mxu0 0.0
    %3108 = vmatprep.mubr.f32.mxu0 0.0
    %v3109 = vand.u32 %v2628, 4294901760
    %3110 = vmatmul.mubr.f32.gmra.mrb[0].mxu0 %v3109
    %v3111 = vpop.f32.mrb[0].mxu0
    %v3112 = vadd.f32 %v3037, %v3111
    %v3113 = vpop.f32.mrb[0].mxu0
    %3114 = vdwg.mxu0
    %v3115 = vsel %vm2605, %v3112, -inf
    %3116 = vmax.xlane.f32.xlu0 %v3115
    %v3117 = vpop.xlane.xlu0 %3116
    %v3118 = vsub.f32 %v3112, %v3117
    %v3119 = vmul.f32 %v3118, 1.442695
    %v3120 = vpow.pop %v3119
    %v3121 = vsel %vm2605, %v3120, 0.0
    %3122 = vadd.xlane.f32.xlu0 %v3121
    %v3123 = vpop.xlane.xlu0 %3122
    %v3124 = vlog2.pop %v3123
    %v3125 = vmul.f32 %v3124, 0.6931472
    %v3126 = vsub.f32 %v3118, %v3125
    %3127 = vst.msk [vmem:[#allocation10] sm:$0x1] %vm2605, %v3126
    %vm3128 = vcmask 516352
    %3129 = vst.msk [vmem:[#allocation10] sm:$0x1] %vm3128, %v2600
    // Predicated region
    $region26: #{tpu_custom_call.1} parent=1 // pred_check
      _
    $region27: #{tpu_custom_call.1} parent=1 // pred_check_branch
      %3131 = sbr.rel (0) target = $region29
    $region28: #{tpu_custom_call.1} parent=1 // pred_region
      %s3133 = ssub.s32 16, 16
      %3134 = vsyncadd [#allocation7], %s3133
      %s3136 = sshll.u32 [#allocation10], 4
      %s3137 = int_to_ptr.vmem [resolvable:$true] %s3136
      %3139 = dma.vmem_to_hbm [thread:$0]  %s3137, 16, %s4, [#allocation7]
    $region29: #{tpu_custom_call.1} parent=1 // pred_fallthru
      _
    // Predicated region
    $region30: #{tpu_custom_call.1} parent=1 // pred_check
      _
    $region31: #{tpu_custom_call.1} parent=1 // pred_check_branch
      %3141 = sbr.rel (0) target = $region33
    $region32: #{tpu_custom_call.1} parent=1 // pred_region
      %3142 = dma.done [#allocation7], 16
    $region33: #{tpu_custom_call.1} parent=1 // pred_fallthru
      _
    %3143 = vsyncpa [#allocation6], 1
    %3144 = vsyncpa [#allocation9], 1
    %3145 = vsyncpa [#allocation7], 1

</llo_original>
